<compile_context>
chip_gen: v7x
topology: tpu7x:2x2x1
jax: 0.10.0
libtpu: 0.0.40
codegen_flags: <defaults>
</compile_context>

<pallas_src>
import functools

import jax
import jax.numpy as jnp
from jax import lax
from jax.experimental import pallas as pl
from jax.experimental.pallas import tpu as pltpu


def _round_up(x, m):
    return ((x + m - 1) // m) * m


# ----------------------------------------------------------------------------
# Pallas kernel 1: fused matmul + bias + (optional activation) + channel stats
# ----------------------------------------------------------------------------
def _mm_fused_kernel(a_ref, b_ref, bias_ref, o_ref, stats_ref, *, act, m_total, tm):
    # Single-K-step matmul (full K fits in one VMEM tile), bf16 in / f32 acc.
    acc = jnp.dot(a_ref[...], b_ref[...], preferred_element_type=jnp.float32)
    y = acc + bias_ref[...]
    if act == "tanh":
        y = jnp.tanh(y)
    elif act == "relu":
        y = jnp.maximum(y, 0.0)
    elif act == "leaky_relu":
        y = jnp.where(y >= 0, y, 0.2 * y)
    o_ref[...] = y

    # Per-block per-channel sum / sum-of-squares (rows past m_total are padding
    # and are masked out).  Row 0 = sum, row 1 = sum of squares.
    rows = pl.program_id(0) * tm + lax.broadcasted_iota(jnp.int32, (tm, 1), 0)
    valid = (rows < m_total).astype(jnp.float32)
    yv = y * valid
    s = jnp.sum(yv, axis=0, keepdims=True)
    ss = jnp.sum(yv * yv, axis=0, keepdims=True)
    ridx = lax.broadcasted_iota(jnp.int32, (8, 1), 0)
    stats_ref[...] = jnp.where(ridx == 0, s, 0.0) + jnp.where(ridx == 1, ss, 0.0)


def matmul_bias_act(a, b_pad, bias_pad, *, act=None):
    """a: (M, K) activations; b_pad: (Kp, Np) bf16 weights; bias_pad: (1, Np).

    Returns (out (Mp, Np) f32, stats (Mp//tm*8, Np) f32)."""
    M, K = a.shape
    Kp, Np = b_pad.shape
    assert K <= Kp and Np % 128 == 0

    # Shape-aware tiles: tm multiple of 16 (bf16 sublane packing), full-K step.
    Mp = _round_up(M, 16)
    tm = min(128, Mp)
    Mp = _round_up(Mp, tm)
    if Np <= 512:
        tn = Np
    elif Np % 512 == 0:
        tn = 512
    else:
        tn = 128
    mb, nb = Mp // tm, Np // tn

    a_p = jnp.pad(a.astype(jnp.bfloat16), ((0, Mp - M), (0, Kp - K)))

    out, stats = pl.pallas_call(
        functools.partial(_mm_fused_kernel, act=act, m_total=M, tm=tm),
        out_shape=(jax.ShapeDtypeStruct((Mp, Np), jnp.float32),
                   jax.ShapeDtypeStruct((mb * 8, Np), jnp.float32)),
        grid_spec=pltpu.PrefetchScalarGridSpec(
            num_scalar_prefetch=0,
            grid=(mb, nb),
            in_specs=[pl.BlockSpec((tm, Kp), lambda i, j: (i, 0)),
                      pl.BlockSpec((Kp, tn), lambda i, j: (0, j)),
                      pl.BlockSpec((1, tn), lambda i, j: (0, j))],
            out_specs=(pl.BlockSpec((tm, tn), lambda i, j: (i, j)),
                       pl.BlockSpec((8, tn), lambda i, j: (i, j)))),
        compiler_params=pltpu.CompilerParams(
            dimension_semantics=("parallel", "parallel")),
    )(a_p, b_pad, bias_pad)
    return out, stats


# ----------------------------------------------------------------------------
# Pallas kernel 2: fused BatchNorm affine + activation (+ 2x2 max-pool)
#   x: (P, M, Cp) with P = 4 pool-window positions (encoder) or 1 (decoder).
#   The pool reduces over the leading axis, so stores stay lane-dense (Cp=128).
# ----------------------------------------------------------------------------
def _bn_act_pool_kernel(x_ref, scale_ref, shift_ref, o_ref, *, act):
    y = x_ref[...] * scale_ref[...] + shift_ref[...]
    if act == "leaky_relu":
        y = jnp.where(y >= 0, y, 0.2 * y)
    elif act == "relu":
        y = jnp.maximum(y, 0.0)
    elif act == "tanh":
        y = jnp.tanh(y)
    o_ref[...] = jnp.max(y, axis=0)


def bn_act_pool(y3, scale, shift, *, act):
    P, M, Cp = y3.shape
    return pl.pallas_call(
        functools.partial(_bn_act_pool_kernel, act=act),
        out_shape=jax.ShapeDtypeStruct((M, Cp), jnp.float32),
    )(y3, scale, shift)


# ----------------------------------------------------------------------------
# im2col helpers (NHWC, stride 1)
# ----------------------------------------------------------------------------
def _im2col_nhwc(x, k, pad):
    N, H, W, C = x.shape
    xp = jnp.pad(x, ((0, 0), (pad, pad), (pad, pad), (0, 0)))
    Ho = H + 2 * pad - k + 1
    Wo = W + 2 * pad - k + 1
    cols = jnp.concatenate(
        [xp[:, i:i + Ho, j:j + Wo, :] for i in range(k) for j in range(k)],
        axis=-1)                                   # (N, Ho, Wo, k*k*C)
    return cols


def _im2col_pool_order(x, k=3, pad=1):
    # Rows ordered (dy, dx, n, h2, w2) so the 2x2 max-pool of the conv output
    # is a reduction over the leading axis of a (4, N*H/2*W/2, C) view.
    N, H, W, C = x.shape
    cols = _im2col_nhwc(x, k, pad)                 # (N, H, W, K), Ho=H, Wo=W
    K = cols.shape[-1]
    cols = cols.reshape(N, H // 2, 2, W // 2, 2, K)
    cols = cols.transpose(2, 4, 0, 1, 3, 5)        # (dy, dx, n, h2, w2, K)
    return cols.reshape(4 * N * (H // 2) * (W // 2), K)


# ----------------------------------------------------------------------------
# Weight preprocessing (hoisted out of the forward pass)
# ----------------------------------------------------------------------------
def _conv_weight_to_mm(w):            # (O, C, k, k) -> (k*k*C, O), matches im2col
    O, C, kh, kw = w.shape
    return w.transpose(2, 3, 1, 0).reshape(kh * kw * C, O)


def _convT4s2p1_to_conv3(w_t):
    """ConvTranspose2d(k=4, s=2, p=1) weight (Cin, Cout, 4, 4) -> equivalent
    3x3 conv weight (4*Cout, Cin, 3, 3) whose 4 output groups are the output
    phases (r, c) of the sub-pixel decomposition."""
    Cin, Cout, _, _ = w_t.shape
    tap = {(0, 0): 3, (0, 1): 1, (1, 1): 2, (1, 2): 0}   # (phase, window-pos) -> k-tap
    blocks = []
    for r in range(2):
        for c in range(2):
            sub = jnp.zeros((Cout, Cin, 3, 3), w_t.dtype)
            for a in range(3):
                if (r, a) not in tap:
                    continue
                for b in range(3):
                    if (c, b) not in tap:
                        continue
                    sub = sub.at[:, :, a, b].set(w_t[:, :, tap[(r, a)], tap[(c, b)]].T)
            blocks.append(sub)
    return jnp.concatenate(blocks, axis=0)        # (4*Cout, Cin, 3, 3)


def init_params(key, img_shape, latent_dim, n_classes, layers):
    keys = jax.random.split(key, 16)
    p = {}
    p["emb"] = 0.1 * jax.random.normal(keys[0], (n_classes, latent_dim), jnp.float32)
    out_f = layers[0] * img_shape * img_shape
    p["combine_w"] = 0.05 * jax.random.normal(keys[1], (out_f, 2 * latent_dim), jnp.float32)
    p["combine_b"] = jnp.zeros((out_f,), jnp.float32)
    enc_io = [(layers[0], layers[1]), (layers[1], layers[2]), (layers[2], layers[3])]
    for i, (ci, co) in enumerate(enc_io):
        p[f"enc{i}_w"] = 0.05 * jax.random.normal(keys[2 + i], (co, ci, 3, 3), jnp.float32)
        p[f"enc{i}_b"] = jnp.zeros((co,), jnp.float32)
        p[f"enc{i}_gamma"] = jnp.ones((co,), jnp.float32)
        p[f"enc{i}_beta"] = jnp.zeros((co,), jnp.float32)
    dec_io = [(layers[3], layers[2]), (layers[2], layers[1]), (layers[1], layers[0])]
    for i, (ci, co) in enumerate(dec_io):
        p[f"dec{i}_w"] = 0.05 * jax.random.normal(keys[5 + i], (ci, co, 4, 4), jnp.float32)
        p[f"dec{i}_b"] = jnp.zeros((co,), jnp.float32)
        p[f"dec{i}_gamma"] = jnp.ones((co,), jnp.float32)
        p[f"dec{i}_beta"] = jnp.zeros((co,), jnp.float32)
    p["dec3_w"] = 0.05 * jax.random.normal(keys[8], (layers[0], 1, 3, 3), jnp.float32)
    p["dec3_b"] = jnp.zeros((1,), jnp.float32)
    return p


def prepare_params(p):
    """One-time: reshape/flip, pad to MXU-friendly shapes, cast weights to bf16."""
    def pack_B(B2d):
        K, N = B2d.shape
        Kp, Np = _round_up(K, 128), _round_up(N, 128)
        return jnp.pad(B2d, ((0, Kp - K), (0, Np - N))).astype(jnp.bfloat16)

    def pack_b(b):
        N = b.shape[0]
        Np = _round_up(N, 128)
        return jnp.pad(b, (0, Np - N)).reshape(1, Np).astype(jnp.float32)

    q = {"emb": p["emb"]}
    q["combine_B"] = pack_B(p["combine_w"].T)           # (2L, out_f)
    q["combine_bias"] = pack_b(p["combine_b"])
    for i in range(3):
        q[f"enc{i}_B"] = pack_B(_conv_weight_to_mm(p[f"enc{i}_w"]))
        q[f"enc{i}_bias"] = pack_b(p[f"enc{i}_b"])
        q[f"enc{i}_gamma"] = p[f"enc{i}_gamma"]
        q[f"enc{i}_beta"] = p[f"enc{i}_beta"]
    for i in range(3):
        w_sub = _convT4s2p1_to_conv3(p[f"dec{i}_w"])    # (4*Co, Ci, 3, 3)
        q[f"dec{i}_B"] = pack_B(_conv_weight_to_mm(w_sub))
        q[f"dec{i}_bias"] = pack_b(jnp.tile(p[f"dec{i}_b"], 4))
        q[f"dec{i}_gamma"] = p[f"dec{i}_gamma"]
        q[f"dec{i}_beta"] = p[f"dec{i}_beta"]
    # Last ConvT (k=3, s=1, p=1) == 3x3 conv (pad=1) with flipped, swapped kernel.
    w_last = jnp.flip(p["dec3_w"], axis=(2, 3)).transpose(1, 0, 2, 3)   # (1, C0, 3, 3)
    q["dec3_B"] = pack_B(_conv_weight_to_mm(w_last))
    q["dec3_bias"] = pack_b(p["dec3_b"])
    return q


# ----------------------------------------------------------------------------
# Forward pass (internal layout NHWC; inputs/outputs NCHW like PyTorch)
# ----------------------------------------------------------------------------
def generator_forward(q, z, labels, *, img_shape, layers):
    B = z.shape[0]
    C0 = layers[0]
    eps = 1e-5

    emb = q["emb"][labels]
    combined = jnp.concatenate([z, emb], axis=1)                  # (B, 2*latent)

    # combine: Linear -> view (B, C0, H, W) -> NHWC
    y, _ = matmul_bias_act(combined, q["combine_B"], q["combine_bias"])
    out_f = C0 * img_shape * img_shape
    x = y[:B, :out_f].reshape(B, C0, img_shape, img_shape).transpose(0, 2, 3, 1)

    # encoder: 3 x [Conv3x3(p=1) -> BN -> LeakyReLU(0.2) -> MaxPool2x2]
    enc_co = [layers[1], layers[2], layers[3]]
    for i in range(3):
        N, H, W, _ = x.shape
        Co = enc_co[i]
        cols = _im2col_pool_order(x, 3, 1)                        # (4*N*H/2*W/2, 9*Ci)
        M = cols.shape[0]                                         # = N*H*W conv pixels
        y, stats = matmul_bias_act(cols, q[f"enc{i}_B"], q[f"enc{i}_bias"])
        Np = y.shape[1]
        st = stats.reshape(-1, 8, Np)
        s = st[:, 0, :Co].sum(axis=0)
        ss = st[:, 1, :Co].sum(axis=0)
        mean = s / M
        var = jnp.maximum(ss / M - mean * mean, 0.0)              # biased (PyTorch train)
        scale = q[f"enc{i}_gamma"] * lax.rsqrt(var + eps)
        shift = q[f"enc{i}_beta"] - mean * scale
        scale_p = jnp.pad(scale, (0, Np - Co)).reshape(1, 1, Np)
        shift_p = jnp.pad(shift, (0, Np - Co)).reshape(1, 1, Np)
        pooled = bn_act_pool(y[:M].reshape(4, M // 4, Np), scale_p, shift_p,
                             act="leaky_relu")                    # (N*H/2*W/2, Np)
        x = pooled[:, :Co].reshape(N, H // 2, W // 2, Co)

    # decoder: 3 x [ConvT(k4,s2,p1) -> BN -> ReLU] via sub-pixel conv + shuffle
    dec_co = [layers[2], layers[1], layers[0]]
    for i in range(3):
        N, H, W, _ = x.shape
        Co = dec_co[i]
        M = N * H * W
        cols = _im2col_nhwc(x, 3, 1).reshape(M, -1)
        y, stats = matmul_bias_act(cols, q[f"dec{i}_B"], q[f"dec{i}_bias"])
        Np = y.shape[1]
        G = 4 * Co                                                # 4 phases per channel
        st = stats.reshape(-1, 8, Np)
        s = st[:, 0, :G].sum(axis=0).reshape(4, Co).sum(axis=0)
        ss = st[:, 1, :G].sum(axis=0).reshape(4, Co).sum(axis=0)
        cnt = 4.0 * M
        mean = s / cnt
        var = jnp.maximum(ss / cnt - mean * mean, 0.0)
        scale = q[f"dec{i}_gamma"] * lax.rsqrt(var + eps)
        shift = q[f"dec{i}_beta"] - mean * scale
        scale4 = jnp.pad(jnp.tile(scale, 4), (0, Np - G)).reshape(1, 1, Np)
        shift4 = jnp.pad(jnp.tile(shift, 4), (0, Np - G)).reshape(1, 1, Np)
        h = bn_act_pool(y[:M].reshape(1, M, Np), scale4, shift4, act="relu")
        # pixel shuffle: columns ordered (r, c, o) -> (N, 2H, 2W, Co)
        h = h[:, :G].reshape(N, H, W, 2, 2, Co).transpose(0, 1, 3, 2, 4, 5)
        x = h.reshape(N, 2 * H, 2 * W, Co)

    # last block: ConvT(k3,s1,p1) -> Tanh (tanh fused into the matmul epilogue)
    N, H, W, Ci = x.shape
    cols = _im2col_nhwc(x, 3, 1).reshape(N * H * W, 9 * Ci)
    y, _ = matmul_bias_act(cols, q["dec3_B"], q["dec3_bias"], act="tanh")
    img = y[:N * H * W, :1].reshape(N, H, W, 1).transpose(0, 3, 1, 2)
    return img


if __name__ == "__main__":
    img_shape = 16
    latent_dim = 8
    n_classes = 10
    layers = [8, 16, 32, 64]      # scaled-down layers_size, same topology
    B = 2

    key = jax.random.PRNGKey(0)
    kp, kz, kl = jax.random.split(key, 3)
    raw = init_params(kp, img_shape, latent_dim, n_classes, layers)
    params = prepare_params(raw)
    z = jax.random.normal(kz, (B, latent_dim), jnp.float32)
    labels = jax.random.randint(kl, (B,), 0, n_classes)

    fwd = jax.jit(functools.partial(generator_forward,
                                    img_shape=img_shape, layers=layers))
    img = fwd(params, z, labels)
    jax.block_until_ready(img)
    assert img.shape == (B, 1, img_shape, img_shape), img.shape
    assert bool(jnp.all(jnp.isfinite(img)))
    print("KERNEL_OK")
</pallas_src>

<mosaic_0001>
module attributes {stable_mosaic.version = 11 : i64} {
  func.func @_mm_fused_kernel(%arg0: i32, %arg1: i32, %arg2: memref<16x128xbf16, #tpu.memory_space<vmem>>, %arg3: memref<128x512xbf16, #tpu.memory_space<vmem>>, %arg4: memref<1x512xf32, #tpu.memory_space<vmem>>, %arg5: memref<16x512xf32, #tpu.memory_space<vmem>>, %arg6: memref<8x512xf32, #tpu.memory_space<vmem>>) attributes {dimension_semantics = [#tpu.dimension_semantics<parallel>, #tpu.dimension_semantics<parallel>], iteration_bounds = array<i64: 1, 4>, scalar_prefetch = 0 : i64, scratch_operands = 0 : i64, tpu.core_type = #tpu.core_type<tc>, window_params = [{transform_indices = @transform_0, window_bounds = array<i64: 16, 128>}, {transform_indices = @transform_1, window_bounds = array<i64: 128, 512>}, {transform_indices = @transform_2, window_bounds = array<i64: 1, 512>}, {transform_indices = @transform_3, window_bounds = array<i64: 16, 512>}, {transform_indices = @transform_4, window_bounds = array<i64: 8, 512>}]} {
    %c0 = arith.constant 0 : index
    %c0_0 = arith.constant 0 : index
    %0 = vector.load %arg2[%c0, %c0_0] : memref<16x128xbf16, #tpu.memory_space<vmem>>, vector<16x128xbf16>
    %c0_1 = arith.constant 0 : index
    %c0_2 = arith.constant 0 : index
    %1 = vector.load %arg3[%c0_1, %c0_2] : memref<128x512xbf16, #tpu.memory_space<vmem>>, vector<128x512xbf16>
    %cst = arith.constant dense<0.000000e+00> : vector<16x512xf32>
    %2 = tpu.matmul %0, %1, %cst {dimension_numbers = #tpu.dot_dimension_numbers<[1], [0], [0], [1], [0, 0, 1, 1], [], []>} : vector<16x128xbf16>, vector<128x512xbf16>, vector<16x512xf32> -> vector<16x512xf32>
    %c0_3 = arith.constant 0 : index
    %c0_4 = arith.constant 0 : index
    %3 = vector.load %arg4[%c0_3, %c0_4] : memref<1x512xf32, #tpu.memory_space<vmem>>, vector<1x512xf32>
    %4 = vector.broadcast %3 : vector<1x512xf32> to vector<16x512xf32>
    %5 = arith.addf %2, %4 : vector<16x512xf32>
    %c0_5 = arith.constant 0 : index
    %c0_6 = arith.constant 0 : index
    %6 = vector.load %arg5[%c0_5, %c0_6] : memref<16x512xf32, #tpu.memory_space<vmem>>, vector<16x512xf32>
    tpu.vector_store %arg5[%c0_5, %c0_6], %5 {strides = array<i32>} : memref<16x512xf32, #tpu.memory_space<vmem>>, vector<16x512xf32>,
    %c16_i32 = arith.constant 16 : i32
    %7 = arith.muli %arg0, %c16_i32 : i32
    %8 = tpu.iota {dimensions = array<i32: 0>} : vector<16x1xi32>
    %9 = vector.broadcast %7 : i32 to vector<16x1xi32>
    %10 = arith.addi %9, %8 : vector<16x1xi32>
    %c2_i32 = arith.constant 2 : i32
    %11 = vector.broadcast %c2_i32 : i32 to vector<16x1xi32>
    %12 = arith.cmpi slt, %10, %11 : vector<16x1xi32>
    %13 = arith.extui %12 : vector<16x1xi1> to vector<16x1xi32>
    %14 = arith.sitofp %13 : vector<16x1xi32> to vector<16x1xf32>
    %15 = vector.broadcast %14 : vector<16x1xf32> to vector<16x512xf32>
    %16 = arith.mulf %5, %15 : vector<16x512xf32>
    %cst_7 = arith.constant dense<0.000000e+00> : vector<512xf32>
    %17 = vector.multi_reduction <add>, %16, %cst_7 [0] : vector<16x512xf32> to vector<512xf32>
    %18 = vector.shape_cast %17 : vector<512xf32> to vector<1x512xf32>
    %19 = arith.mulf %16, %16 : vector<16x512xf32>
    %cst_8 = arith.constant dense<0.000000e+00> : vector<512xf32>
    %20 = vector.multi_reduction <add>, %19, %cst_8 [0] : vector<16x512xf32> to vector<512xf32>
    %21 = vector.shape_cast %20 : vector<512xf32> to vector<1x512xf32>
    %22 = tpu.iota {dimensions = array<i32: 0>} : vector<8x1xi32>
    %c0_i32 = arith.constant 0 : i32
    %23 = vector.broadcast %c0_i32 : i32 to vector<8x1xi32>
    %24 = arith.cmpi eq, %22, %23 : vector<8x1xi32>
    %cst_9 = arith.constant 0.000000e+00 : f32
    %25 = vector.shape_cast %24 : vector<8x1xi1> to vector<8x1xi1>
    %26 = vector.broadcast %25 : vector<8x1xi1> to vector<8x512xi1>
    %27 = vector.shape_cast %18 : vector<1x512xf32> to vector<1x512xf32>
    %28 = vector.broadcast %27 : vector<1x512xf32> to vector<8x512xf32>
    %29 = vector.broadcast %cst_9 : f32 to vector<8x512xf32>
    %30 = arith.select %26, %28, %29 : vector<8x512xi1>, vector<8x512xf32>
    %c1_i32 = arith.constant 1 : i32
    %31 = vector.broadcast %c1_i32 : i32 to vector<8x1xi32>
    %32 = arith.cmpi eq, %22, %31 : vector<8x1xi32>
    %cst_10 = arith.constant 0.000000e+00 : f32
    %33 = vector.shape_cast %32 : vector<8x1xi1> to vector<8x1xi1>
    %34 = vector.broadcast %33 : vector<8x1xi1> to vector<8x512xi1>
    %35 = vector.shape_cast %21 : vector<1x512xf32> to vector<1x512xf32>
    %36 = vector.broadcast %35 : vector<1x512xf32> to vector<8x512xf32>
    %37 = vector.broadcast %cst_10 : f32 to vector<8x512xf32>
    %38 = arith.select %34, %36, %37 : vector<8x512xi1>, vector<8x512xf32>
    %39 = arith.addf %30, %38 : vector<8x512xf32>
    %c0_11 = arith.constant 0 : index
    %c0_12 = arith.constant 0 : index
    %40 = vector.load %arg6[%c0_11, %c0_12] : memref<8x512xf32, #tpu.memory_space<vmem>>, vector<8x512xf32>
    tpu.vector_store %arg6[%c0_11, %c0_12], %39 {strides = array<i32>} : memref<8x512xf32, #tpu.memory_space<vmem>>, vector<8x512xf32>,
    return
  }
  func.func @transform_0(%arg0: i32, %arg1: i32) -> (i32, i32) {
    %c0_i32 = arith.constant 0 : i32
    %c0_i32_0 = arith.constant 0 : i32
    return %arg0, %c0_i32 : i32, i32
  }
  func.func @transform_1(%arg0: i32, %arg1: i32) -> (i32, i32) {
    %c0_i32 = arith.constant 0 : i32
    %c0_i32_0 = arith.constant 0 : i32
    return %c0_i32, %arg1 : i32, i32
  }
  func.func @transform_2(%arg0: i32, %arg1: i32) -> (i32, i32) {
    %c0_i32 = arith.constant 0 : i32
    %c0_i32_0 = arith.constant 0 : i32
    return %c0_i32, %arg1 : i32, i32
  }
  func.func @transform_3(%arg0: i32, %arg1: i32) -> (i32, i32) {
    %c0_i32 = arith.constant 0 : i32
    return %arg0, %arg1 : i32, i32
  }
  func.func @transform_4(%arg0: i32, %arg1: i32) -> (i32, i32) {
    %c0_i32 = arith.constant 0 : i32
    return %arg0, %arg1 : i32, i32
  }
}

module attributes {stable_mosaic.version = 11 : i64} {
  func.func @_mm_fused_kernel(%arg0: i32, %arg1: i32, %arg2: memref<128x128xbf16, #tpu.memory_space<vmem>>, %arg3: memref<128x128xbf16, #tpu.memory_space<vmem>>, %arg4: memref<1x128xf32, #tpu.memory_space<vmem>>, %arg5: memref<128x128xf32, #tpu.memory_space<vmem>>, %arg6: memref<8x128xf32, #tpu.memory_space<vmem>>) attributes {dimension_semantics = [#tpu.dimension_semantics<parallel>, #tpu.dimension_semantics<parallel>], iteration_bounds = array<i64: 4, 1>, scalar_prefetch = 0 : i64, scratch_operands = 0 : i64, tpu.core_type = #tpu.core_type<tc>, window_params = [{transform_indices = @transform_0, window_bounds = array<i64: 128, 128>}, {transform_indices = @transform_1, window_bounds = array<i64: 128, 128>}, {transform_indices = @transform_2, window_bounds = array<i64: 1, 128>}, {transform_indices = @transform_3, window_bounds = array<i64: 128, 128>}, {transform_indices = @transform_4, window_bounds = array<i64: 8, 128>}]} {
    %c0 = arith.constant 0 : index
    %c0_0 = arith.constant 0 : index
    %0 = vector.load %arg2[%c0, %c0_0] : memref<128x128xbf16, #tpu.memory_space<vmem>>, vector<128x128xbf16>
    %c0_1 = arith.constant 0 : index
    %c0_2 = arith.constant 0 : index
    %1 = vector.load %arg3[%c0_1, %c0_2] : memref<128x128xbf16, #tpu.memory_space<vmem>>, vector<128x128xbf16>
    %cst = arith.constant dense<0.000000e+00> : vector<128x128xf32>
    %2 = tpu.matmul %0, %1, %cst {dimension_numbers = #tpu.dot_dimension_numbers<[1], [0], [0], [1], [0, 0, 1, 1], [], []>} : vector<128x128xbf16>, vector<128x128xbf16>, vector<128x128xf32> -> vector<128x128xf32>
    %c0_3 = arith.constant 0 : index
    %c0_4 = arith.constant 0 : index
    %3 = vector.load %arg4[%c0_3, %c0_4] : memref<1x128xf32, #tpu.memory_space<vmem>>, vector<1x128xf32>
    %4 = vector.broadcast %3 : vector<1x128xf32> to vector<128x128xf32>
    %5 = arith.addf %2, %4 : vector<128x128xf32>
    %c0_5 = arith.constant 0 : index
    %c0_6 = arith.constant 0 : index
    %6 = vector.load %arg5[%c0_5, %c0_6] : memref<128x128xf32, #tpu.memory_space<vmem>>, vector<128x128xf32>
    tpu.vector_store %arg5[%c0_5, %c0_6], %5 {strides = array<i32>} : memref<128x128xf32, #tpu.memory_space<vmem>>, vector<128x128xf32>,
    %c128_i32 = arith.constant 128 : i32
    %7 = arith.muli %arg0, %c128_i32 : i32
    %8 = tpu.iota {dimensions = array<i32: 0>} : vector<128x1xi32>
    %9 = vector.broadcast %7 : i32 to vector<128x1xi32>
    %10 = arith.addi %9, %8 : vector<128x1xi32>
    %c512_i32 = arith.constant 512 : i32
    %11 = vector.broadcast %c512_i32 : i32 to vector<128x1xi32>
    %12 = arith.cmpi slt, %10, %11 : vector<128x1xi32>
    %13 = arith.extui %12 : vector<128x1xi1> to vector<128x1xi32>
    %14 = arith.sitofp %13 : vector<128x1xi32> to vector<128x1xf32>
    %15 = vector.broadcast %14 : vector<128x1xf32> to vector<128x128xf32>
    %16 = arith.mulf %5, %15 : vector<128x128xf32>
    %cst_7 = arith.constant dense<0.000000e+00> : vector<128xf32>
    %17 = vector.multi_reduction <add>, %16, %cst_7 [0] : vector<128x128xf32> to vector<128xf32>
    %18 = vector.shape_cast %17 : vector<128xf32> to vector<1x128xf32>
    %19 = arith.mulf %16, %16 : vector<128x128xf32>
    %cst_8 = arith.constant dense<0.000000e+00> : vector<128xf32>
    %20 = vector.multi_reduction <add>, %19, %cst_8 [0] : vector<128x128xf32> to vector<128xf32>
    %21 = vector.shape_cast %20 : vector<128xf32> to vector<1x128xf32>
    %22 = tpu.iota {dimensions = array<i32: 0>} : vector<8x1xi32>
    %c0_i32 = arith.constant 0 : i32
    %23 = vector.broadcast %c0_i32 : i32 to vector<8x1xi32>
    %24 = arith.cmpi eq, %22, %23 : vector<8x1xi32>
    %cst_9 = arith.constant 0.000000e+00 : f32
    %25 = vector.shape_cast %24 : vector<8x1xi1> to vector<8x1xi1>
    %26 = vector.broadcast %25 : vector<8x1xi1> to vector<8x128xi1>
    %27 = vector.shape_cast %18 : vector<1x128xf32> to vector<1x128xf32>
    %28 = vector.broadcast %27 : vector<1x128xf32> to vector<8x128xf32>
    %29 = vector.broadcast %cst_9 : f32 to vector<8x128xf32>
    %30 = arith.select %26, %28, %29 : vector<8x128xi1>, vector<8x128xf32>
    %c1_i32 = arith.constant 1 : i32
    %31 = vector.broadcast %c1_i32 : i32 to vector<8x1xi32>
    %32 = arith.cmpi eq, %22, %31 : vector<8x1xi32>
    %cst_10 = arith.constant 0.000000e+00 : f32
    %33 = vector.shape_cast %32 : vector<8x1xi1> to vector<8x1xi1>
    %34 = vector.broadcast %33 : vector<8x1xi1> to vector<8x128xi1>
    %35 = vector.shape_cast %21 : vector<1x128xf32> to vector<1x128xf32>
    %36 = vector.broadcast %35 : vector<1x128xf32> to vector<8x128xf32>
    %37 = vector.broadcast %cst_10 : f32 to vector<8x128xf32>
    %38 = arith.select %34, %36, %37 : vector<8x128xi1>, vector<8x128xf32>
    %39 = arith.addf %30, %38 : vector<8x128xf32>
    %c0_11 = arith.constant 0 : index
    %c0_12 = arith.constant 0 : index
    %40 = vector.load %arg6[%c0_11, %c0_12] : memref<8x128xf32, #tpu.memory_space<vmem>>, vector<8x128xf32>
    tpu.vector_store %arg6[%c0_11, %c0_12], %39 {strides = array<i32>} : memref<8x128xf32, #tpu.memory_space<vmem>>, vector<8x128xf32>,
    return
  }
  func.func @transform_0(%arg0: i32, %arg1: i32) -> (i32, i32) {
    %c0_i32 = arith.constant 0 : i32
    %c0_i32_0 = arith.constant 0 : i32
    return %arg0, %c0_i32 : i32, i32
  }
  func.func @transform_1(%arg0: i32, %arg1: i32) -> (i32, i32) {
    %c0_i32 = arith.constant 0 : i32
    %c0_i32_0 = arith.constant 0 : i32
    return %c0_i32, %arg1 : i32, i32
  }
  func.func @transform_2(%arg0: i32, %arg1: i32) -> (i32, i32) {
    %c0_i32 = arith.constant 0 : i32
    %c0_i32_0 = arith.constant 0 : i32
    return %c0_i32, %arg1 : i32, i32
  }
  func.func @transform_3(%arg0: i32, %arg1: i32) -> (i32, i32) {
    %c0_i32 = arith.constant 0 : i32
    return %arg0, %arg1 : i32, i32
  }
  func.func @transform_4(%arg0: i32, %arg1: i32) -> (i32, i32) {
    %c0_i32 = arith.constant 0 : i32
    return %arg0, %arg1 : i32, i32
  }
}

module attributes {stable_mosaic.version = 11 : i64} {
  func.func @_bn_act_pool_kernel(%arg0: memref<4x128x128xf32, #tpu.memory_space<vmem>>, %arg1: memref<1x1x128xf32, #tpu.memory_space<vmem>>, %arg2: memref<1x1x128xf32, #tpu.memory_space<vmem>>, %arg3: memref<128x128xf32, #tpu.memory_space<vmem>>) attributes {dimension_semantics = [], scalar_prefetch = 0 : i64, scratch_operands = 0 : i64, tpu.core_type = #tpu.core_type<tc>} {
    %c0 = arith.constant 0 : index
    %c0_0 = arith.constant 0 : index
    %c0_1 = arith.constant 0 : index
    %0 = vector.load %arg0[%c0, %c0_0, %c0_1] : memref<4x128x128xf32, #tpu.memory_space<vmem>>, vector<4x128x128xf32>
    %c0_2 = arith.constant 0 : index
    %c0_3 = arith.constant 0 : index
    %c0_4 = arith.constant 0 : index
    %1 = vector.load %arg1[%c0_2, %c0_3, %c0_4] : memref<1x1x128xf32, #tpu.memory_space<vmem>>, vector<1x1x128xf32>
    %2 = vector.broadcast %1 : vector<1x1x128xf32> to vector<4x128x128xf32>
    %3 = arith.mulf %0, %2 : vector<4x128x128xf32>
    %c0_5 = arith.constant 0 : index
    %c0_6 = arith.constant 0 : index
    %c0_7 = arith.constant 0 : index
    %4 = vector.load %arg2[%c0_5, %c0_6, %c0_7] : memref<1x1x128xf32, #tpu.memory_space<vmem>>, vector<1x1x128xf32>
    %5 = vector.broadcast %4 : vector<1x1x128xf32> to vector<4x128x128xf32>
    %6 = arith.addf %3, %5 : vector<4x128x128xf32>
    %cst = arith.constant 0.000000e+00 : f32
    %7 = vector.broadcast %cst : f32 to vector<4x128x128xf32>
    %8 = arith.cmpf oge, %6, %7 : vector<4x128x128xf32>
    %cst_8 = arith.constant 2.000000e-01 : f32
    %9 = vector.broadcast %cst_8 : f32 to vector<4x128x128xf32>
    %10 = arith.mulf %9, %6 : vector<4x128x128xf32>
    %11 = arith.select %8, %6, %10 : vector<4x128x128xi1>, vector<4x128x128xf32>
    %cst_9 = arith.constant dense<0xFF800000> : vector<128x128xf32>
    %12 = vector.multi_reduction <maximumf>, %11, %cst_9 [0] : vector<4x128x128xf32> to vector<128x128xf32>
    %c0_10 = arith.constant 0 : index
    %c0_11 = arith.constant 0 : index
    %13 = vector.load %arg3[%c0_10, %c0_11] : memref<128x128xf32, #tpu.memory_space<vmem>>, vector<128x128xf32>
    tpu.vector_store %arg3[%c0_10, %c0_11], %12 {strides = array<i32>} : memref<128x128xf32, #tpu.memory_space<vmem>>, vector<128x128xf32>,
    return
  }
}

module attributes {stable_mosaic.version = 11 : i64} {
  func.func @_bn_act_pool_kernel(%arg0: memref<4x32x128xf32, #tpu.memory_space<vmem>>, %arg1: memref<1x1x128xf32, #tpu.memory_space<vmem>>, %arg2: memref<1x1x128xf32, #tpu.memory_space<vmem>>, %arg3: memref<32x128xf32, #tpu.memory_space<vmem>>) attributes {dimension_semantics = [], scalar_prefetch = 0 : i64, scratch_operands = 0 : i64, tpu.core_type = #tpu.core_type<tc>} {
    %c0 = arith.constant 0 : index
    %c0_0 = arith.constant 0 : index
    %c0_1 = arith.constant 0 : index
    %0 = vector.load %arg0[%c0, %c0_0, %c0_1] : memref<4x32x128xf32, #tpu.memory_space<vmem>>, vector<4x32x128xf32>
    %c0_2 = arith.constant 0 : index
    %c0_3 = arith.constant 0 : index
    %c0_4 = arith.constant 0 : index
    %1 = vector.load %arg1[%c0_2, %c0_3, %c0_4] : memref<1x1x128xf32, #tpu.memory_space<vmem>>, vector<1x1x128xf32>
    %2 = vector.broadcast %1 : vector<1x1x128xf32> to vector<4x32x128xf32>
    %3 = arith.mulf %0, %2 : vector<4x32x128xf32>
    %c0_5 = arith.constant 0 : index
    %c0_6 = arith.constant 0 : index
    %c0_7 = arith.constant 0 : index
    %4 = vector.load %arg2[%c0_5, %c0_6, %c0_7] : memref<1x1x128xf32, #tpu.memory_space<vmem>>, vector<1x1x128xf32>
    %5 = vector.broadcast %4 : vector<1x1x128xf32> to vector<4x32x128xf32>
    %6 = arith.addf %3, %5 : vector<4x32x128xf32>
    %cst = arith.constant 0.000000e+00 : f32
    %7 = vector.broadcast %cst : f32 to vector<4x32x128xf32>
    %8 = arith.cmpf oge, %6, %7 : vector<4x32x128xf32>
    %cst_8 = arith.constant 2.000000e-01 : f32
    %9 = vector.broadcast %cst_8 : f32 to vector<4x32x128xf32>
    %10 = arith.mulf %9, %6 : vector<4x32x128xf32>
    %11 = arith.select %8, %6, %10 : vector<4x32x128xi1>, vector<4x32x128xf32>
    %cst_9 = arith.constant dense<0xFF800000> : vector<32x128xf32>
    %12 = vector.multi_reduction <maximumf>, %11, %cst_9 [0] : vector<4x32x128xf32> to vector<32x128xf32>
    %c0_10 = arith.constant 0 : index
    %c0_11 = arith.constant 0 : index
    %13 = vector.load %arg3[%c0_10, %c0_11] : memref<32x128xf32, #tpu.memory_space<vmem>>, vector<32x128xf32>
    tpu.vector_store %arg3[%c0_10, %c0_11], %12 {strides = array<i32>} : memref<32x128xf32, #tpu.memory_space<vmem>>, vector<32x128xf32>,
    return
  }
}

module attributes {stable_mosaic.version = 11 : i64} {
  func.func @_mm_fused_kernel(%arg0: i32, %arg1: i32, %arg2: memref<128x256xbf16, #tpu.memory_space<vmem>>, %arg3: memref<256x128xbf16, #tpu.memory_space<vmem>>, %arg4: memref<1x128xf32, #tpu.memory_space<vmem>>, %arg5: memref<128x128xf32, #tpu.memory_space<vmem>>, %arg6: memref<8x128xf32, #tpu.memory_space<vmem>>) attributes {dimension_semantics = [#tpu.dimension_semantics<parallel>, #tpu.dimension_semantics<parallel>], iteration_bounds = array<i64: 1, 1>, scalar_prefetch = 0 : i64, scratch_operands = 0 : i64, tpu.core_type = #tpu.core_type<tc>, window_params = [{transform_indices = @transform_0, window_bounds = array<i64: 128, 256>}, {transform_indices = @transform_1, window_bounds = array<i64: 256, 128>}, {transform_indices = @transform_2, window_bounds = array<i64: 1, 128>}, {transform_indices = @transform_3, window_bounds = array<i64: 128, 128>}, {transform_indices = @transform_4, window_bounds = array<i64: 8, 128>}]} {
    %c0 = arith.constant 0 : index
    %c0_0 = arith.constant 0 : index
    %0 = vector.load %arg2[%c0, %c0_0] : memref<128x256xbf16, #tpu.memory_space<vmem>>, vector<128x256xbf16>
    %c0_1 = arith.constant 0 : index
    %c0_2 = arith.constant 0 : index
    %1 = vector.load %arg3[%c0_1, %c0_2] : memref<256x128xbf16, #tpu.memory_space<vmem>>, vector<256x128xbf16>
    %cst = arith.constant dense<0.000000e+00> : vector<128x128xf32>
    %2 = tpu.matmul %0, %1, %cst {dimension_numbers = #tpu.dot_dimension_numbers<[1], [0], [0], [1], [0, 0, 1, 1], [], []>} : vector<128x256xbf16>, vector<256x128xbf16>, vector<128x128xf32> -> vector<128x128xf32>
    %c0_3 = arith.constant 0 : index
    %c0_4 = arith.constant 0 : index
    %3 = vector.load %arg4[%c0_3, %c0_4] : memref<1x128xf32, #tpu.memory_space<vmem>>, vector<1x128xf32>
    %4 = vector.broadcast %3 : vector<1x128xf32> to vector<128x128xf32>
    %5 = arith.addf %2, %4 : vector<128x128xf32>
    %c0_5 = arith.constant 0 : index
    %c0_6 = arith.constant 0 : index
    %6 = vector.load %arg5[%c0_5, %c0_6] : memref<128x128xf32, #tpu.memory_space<vmem>>, vector<128x128xf32>
    tpu.vector_store %arg5[%c0_5, %c0_6], %5 {strides = array<i32>} : memref<128x128xf32, #tpu.memory_space<vmem>>, vector<128x128xf32>,
    %c128_i32 = arith.constant 128 : i32
    %7 = arith.muli %arg0, %c128_i32 : i32
    %8 = tpu.iota {dimensions = array<i32: 0>} : vector<128x1xi32>
    %9 = vector.broadcast %7 : i32 to vector<128x1xi32>
    %10 = arith.addi %9, %8 : vector<128x1xi32>
    %c128_i32_7 = arith.constant 128 : i32
    %11 = vector.broadcast %c128_i32_7 : i32 to vector<128x1xi32>
    %12 = arith.cmpi slt, %10, %11 : vector<128x1xi32>
    %13 = arith.extui %12 : vector<128x1xi1> to vector<128x1xi32>
    %14 = arith.sitofp %13 : vector<128x1xi32> to vector<128x1xf32>
    %15 = vector.broadcast %14 : vector<128x1xf32> to vector<128x128xf32>
    %16 = arith.mulf %5, %15 : vector<128x128xf32>
    %cst_8 = arith.constant dense<0.000000e+00> : vector<128xf32>
    %17 = vector.multi_reduction <add>, %16, %cst_8 [0] : vector<128x128xf32> to vector<128xf32>
    %18 = vector.shape_cast %17 : vector<128xf32> to vector<1x128xf32>
    %19 = arith.mulf %16, %16 : vector<128x128xf32>
    %cst_9 = arith.constant dense<0.000000e+00> : vector<128xf32>
    %20 = vector.multi_reduction <add>, %19, %cst_9 [0] : vector<128x128xf32> to vector<128xf32>
    %21 = vector.shape_cast %20 : vector<128xf32> to vector<1x128xf32>
    %22 = tpu.iota {dimensions = array<i32: 0>} : vector<8x1xi32>
    %c0_i32 = arith.constant 0 : i32
    %23 = vector.broadcast %c0_i32 : i32 to vector<8x1xi32>
    %24 = arith.cmpi eq, %22, %23 : vector<8x1xi32>
    %cst_10 = arith.constant 0.000000e+00 : f32
    %25 = vector.shape_cast %24 : vector<8x1xi1> to vector<8x1xi1>
    %26 = vector.broadcast %25 : vector<8x1xi1> to vector<8x128xi1>
    %27 = vector.shape_cast %18 : vector<1x128xf32> to vector<1x128xf32>
    %28 = vector.broadcast %27 : vector<1x128xf32> to vector<8x128xf32>
    %29 = vector.broadcast %cst_10 : f32 to vector<8x128xf32>
    %30 = arith.select %26, %28, %29 : vector<8x128xi1>, vector<8x128xf32>
    %c1_i32 = arith.constant 1 : i32
    %31 = vector.broadcast %c1_i32 : i32 to vector<8x1xi32>
    %32 = arith.cmpi eq, %22, %31 : vector<8x1xi32>
    %cst_11 = arith.constant 0.000000e+00 : f32
    %33 = vector.shape_cast %32 : vector<8x1xi1> to vector<8x1xi1>
    %34 = vector.broadcast %33 : vector<8x1xi1> to vector<8x128xi1>
    %35 = vector.shape_cast %21 : vector<1x128xf32> to vector<1x128xf32>
    %36 = vector.broadcast %35 : vector<1x128xf32> to vector<8x128xf32>
    %37 = vector.broadcast %cst_11 : f32 to vector<8x128xf32>
    %38 = arith.select %34, %36, %37 : vector<8x128xi1>, vector<8x128xf32>
    %39 = arith.addf %30, %38 : vector<8x128xf32>
    %c0_12 = arith.constant 0 : index
    %c0_13 = arith.constant 0 : index
    %40 = vector.load %arg6[%c0_12, %c0_13] : memref<8x128xf32, #tpu.memory_space<vmem>>, vector<8x128xf32>
    tpu.vector_store %arg6[%c0_12, %c0_13], %39 {strides = array<i32>} : memref<8x128xf32, #tpu.memory_space<vmem>>, vector<8x128xf32>,
    return
  }
  func.func @transform_0(%arg0: i32, %arg1: i32) -> (i32, i32) {
    %c0_i32 = arith.constant 0 : i32
    %c0_i32_0 = arith.constant 0 : i32
    return %arg0, %c0_i32 : i32, i32
  }
  func.func @transform_1(%arg0: i32, %arg1: i32) -> (i32, i32) {
    %c0_i32 = arith.constant 0 : i32
    %c0_i32_0 = arith.constant 0 : i32
    return %c0_i32, %arg1 : i32, i32
  }
  func.func @transform_2(%arg0: i32, %arg1: i32) -> (i32, i32) {
    %c0_i32 = arith.constant 0 : i32
    %c0_i32_0 = arith.constant 0 : i32
    return %c0_i32, %arg1 : i32, i32
  }
  func.func @transform_3(%arg0: i32, %arg1: i32) -> (i32, i32) {
    %c0_i32 = arith.constant 0 : i32
    return %arg0, %arg1 : i32, i32
  }
  func.func @transform_4(%arg0: i32, %arg1: i32) -> (i32, i32) {
    %c0_i32 = arith.constant 0 : i32
    return %arg0, %arg1 : i32, i32
  }
}

module attributes {stable_mosaic.version = 11 : i64} {
  func.func @_mm_fused_kernel(%arg0: i32, %arg1: i32, %arg2: memref<32x384xbf16, #tpu.memory_space<vmem>>, %arg3: memref<384x128xbf16, #tpu.memory_space<vmem>>, %arg4: memref<1x128xf32, #tpu.memory_space<vmem>>, %arg5: memref<32x128xf32, #tpu.memory_space<vmem>>, %arg6: memref<8x128xf32, #tpu.memory_space<vmem>>) attributes {dimension_semantics = [#tpu.dimension_semantics<parallel>, #tpu.dimension_semantics<parallel>], iteration_bounds = array<i64: 1, 1>, scalar_prefetch = 0 : i64, scratch_operands = 0 : i64, tpu.core_type = #tpu.core_type<tc>, window_params = [{transform_indices = @transform_0, window_bounds = array<i64: 32, 384>}, {transform_indices = @transform_1, window_bounds = array<i64: 384, 128>}, {transform_indices = @transform_2, window_bounds = array<i64: 1, 128>}, {transform_indices = @transform_3, window_bounds = array<i64: 32, 128>}, {transform_indices = @transform_4, window_bounds = array<i64: 8, 128>}]} {
    %c0 = arith.constant 0 : index
    %c0_0 = arith.constant 0 : index
    %0 = vector.load %arg2[%c0, %c0_0] : memref<32x384xbf16, #tpu.memory_space<vmem>>, vector<32x384xbf16>
    %c0_1 = arith.constant 0 : index
    %c0_2 = arith.constant 0 : index
    %1 = vector.load %arg3[%c0_1, %c0_2] : memref<384x128xbf16, #tpu.memory_space<vmem>>, vector<384x128xbf16>
    %cst = arith.constant dense<0.000000e+00> : vector<32x128xf32>
    %2 = tpu.matmul %0, %1, %cst {dimension_numbers = #tpu.dot_dimension_numbers<[1], [0], [0], [1], [0, 0, 1, 1], [], []>} : vector<32x384xbf16>, vector<384x128xbf16>, vector<32x128xf32> -> vector<32x128xf32>
    %c0_3 = arith.constant 0 : index
    %c0_4 = arith.constant 0 : index
    %3 = vector.load %arg4[%c0_3, %c0_4] : memref<1x128xf32, #tpu.memory_space<vmem>>, vector<1x128xf32>
    %4 = vector.broadcast %3 : vector<1x128xf32> to vector<32x128xf32>
    %5 = arith.addf %2, %4 : vector<32x128xf32>
    %c0_5 = arith.constant 0 : index
    %c0_6 = arith.constant 0 : index
    %6 = vector.load %arg5[%c0_5, %c0_6] : memref<32x128xf32, #tpu.memory_space<vmem>>, vector<32x128xf32>
    tpu.vector_store %arg5[%c0_5, %c0_6], %5 {strides = array<i32>} : memref<32x128xf32, #tpu.memory_space<vmem>>, vector<32x128xf32>,
    %c32_i32 = arith.constant 32 : i32
    %7 = arith.muli %arg0, %c32_i32 : i32
    %8 = tpu.iota {dimensions = array<i32: 0>} : vector<32x1xi32>
    %9 = vector.broadcast %7 : i32 to vector<32x1xi32>
    %10 = arith.addi %9, %8 : vector<32x1xi32>
    %c32_i32_7 = arith.constant 32 : i32
    %11 = vector.broadcast %c32_i32_7 : i32 to vector<32x1xi32>
    %12 = arith.cmpi slt, %10, %11 : vector<32x1xi32>
    %13 = arith.extui %12 : vector<32x1xi1> to vector<32x1xi32>
    %14 = arith.sitofp %13 : vector<32x1xi32> to vector<32x1xf32>
    %15 = vector.broadcast %14 : vector<32x1xf32> to vector<32x128xf32>
    %16 = arith.mulf %5, %15 : vector<32x128xf32>
    %cst_8 = arith.constant dense<0.000000e+00> : vector<128xf32>
    %17 = vector.multi_reduction <add>, %16, %cst_8 [0] : vector<32x128xf32> to vector<128xf32>
    %18 = vector.shape_cast %17 : vector<128xf32> to vector<1x128xf32>
    %19 = arith.mulf %16, %16 : vector<32x128xf32>
    %cst_9 = arith.constant dense<0.000000e+00> : vector<128xf32>
    %20 = vector.multi_reduction <add>, %19, %cst_9 [0] : vector<32x128xf32> to vector<128xf32>
    %21 = vector.shape_cast %20 : vector<128xf32> to vector<1x128xf32>
    %22 = tpu.iota {dimensions = array<i32: 0>} : vector<8x1xi32>
    %c0_i32 = arith.constant 0 : i32
    %23 = vector.broadcast %c0_i32 : i32 to vector<8x1xi32>
    %24 = arith.cmpi eq, %22, %23 : vector<8x1xi32>
    %cst_10 = arith.constant 0.000000e+00 : f32
    %25 = vector.shape_cast %24 : vector<8x1xi1> to vector<8x1xi1>
    %26 = vector.broadcast %25 : vector<8x1xi1> to vector<8x128xi1>
    %27 = vector.shape_cast %18 : vector<1x128xf32> to vector<1x128xf32>
    %28 = vector.broadcast %27 : vector<1x128xf32> to vector<8x128xf32>
    %29 = vector.broadcast %cst_10 : f32 to vector<8x128xf32>
    %30 = arith.select %26, %28, %29 : vector<8x128xi1>, vector<8x128xf32>
    %c1_i32 = arith.constant 1 : i32
    %31 = vector.broadcast %c1_i32 : i32 to vector<8x1xi32>
    %32 = arith.cmpi eq, %22, %31 : vector<8x1xi32>
    %cst_11 = arith.constant 0.000000e+00 : f32
    %33 = vector.shape_cast %32 : vector<8x1xi1> to vector<8x1xi1>
    %34 = vector.broadcast %33 : vector<8x1xi1> to vector<8x128xi1>
    %35 = vector.shape_cast %21 : vector<1x128xf32> to vector<1x128xf32>
    %36 = vector.broadcast %35 : vector<1x128xf32> to vector<8x128xf32>
    %37 = vector.broadcast %cst_11 : f32 to vector<8x128xf32>
    %38 = arith.select %34, %36, %37 : vector<8x128xi1>, vector<8x128xf32>
    %39 = arith.addf %30, %38 : vector<8x128xf32>
    %c0_12 = arith.constant 0 : index
    %c0_13 = arith.constant 0 : index
    %40 = vector.load %arg6[%c0_12, %c0_13] : memref<8x128xf32, #tpu.memory_space<vmem>>, vector<8x128xf32>
    tpu.vector_store %arg6[%c0_12, %c0_13], %39 {strides = array<i32>} : memref<8x128xf32, #tpu.memory_space<vmem>>, vector<8x128xf32>,
    return
  }
  func.func @transform_0(%arg0: i32, %arg1: i32) -> (i32, i32) {
    %c0_i32 = arith.constant 0 : i32
    %c0_i32_0 = arith.constant 0 : i32
    return %arg0, %c0_i32 : i32, i32
  }
  func.func @transform_1(%arg0: i32, %arg1: i32) -> (i32, i32) {
    %c0_i32 = arith.constant 0 : i32
    %c0_i32_0 = arith.constant 0 : i32
    return %c0_i32, %arg1 : i32, i32
  }
  func.func @transform_2(%arg0: i32, %arg1: i32) -> (i32, i32) {
    %c0_i32 = arith.constant 0 : i32
    %c0_i32_0 = arith.constant 0 : i32
    return %c0_i32, %arg1 : i32, i32
  }
  func.func @transform_3(%arg0: i32, %arg1: i32) -> (i32, i32) {
    %c0_i32 = arith.constant 0 : i32
    return %arg0, %arg1 : i32, i32
  }
  func.func @transform_4(%arg0: i32, %arg1: i32) -> (i32, i32) {
    %c0_i32 = arith.constant 0 : i32
    return %arg0, %arg1 : i32, i32
  }
}

module attributes {stable_mosaic.version = 11 : i64} {
  func.func @_bn_act_pool_kernel(%arg0: memref<4x8x128xf32, #tpu.memory_space<vmem>>, %arg1: memref<1x1x128xf32, #tpu.memory_space<vmem>>, %arg2: memref<1x1x128xf32, #tpu.memory_space<vmem>>, %arg3: memref<8x128xf32, #tpu.memory_space<vmem>>) attributes {dimension_semantics = [], scalar_prefetch = 0 : i64, scratch_operands = 0 : i64, tpu.core_type = #tpu.core_type<tc>} {
    %c0 = arith.constant 0 : index
    %c0_0 = arith.constant 0 : index
    %c0_1 = arith.constant 0 : index
    %0 = vector.load %arg0[%c0, %c0_0, %c0_1] : memref<4x8x128xf32, #tpu.memory_space<vmem>>, vector<4x8x128xf32>
    %c0_2 = arith.constant 0 : index
    %c0_3 = arith.constant 0 : index
    %c0_4 = arith.constant 0 : index
    %1 = vector.load %arg1[%c0_2, %c0_3, %c0_4] : memref<1x1x128xf32, #tpu.memory_space<vmem>>, vector<1x1x128xf32>
    %2 = vector.broadcast %1 : vector<1x1x128xf32> to vector<4x8x128xf32>
    %3 = arith.mulf %0, %2 : vector<4x8x128xf32>
    %c0_5 = arith.constant 0 : index
    %c0_6 = arith.constant 0 : index
    %c0_7 = arith.constant 0 : index
    %4 = vector.load %arg2[%c0_5, %c0_6, %c0_7] : memref<1x1x128xf32, #tpu.memory_space<vmem>>, vector<1x1x128xf32>
    %5 = vector.broadcast %4 : vector<1x1x128xf32> to vector<4x8x128xf32>
    %6 = arith.addf %3, %5 : vector<4x8x128xf32>
    %cst = arith.constant 0.000000e+00 : f32
    %7 = vector.broadcast %cst : f32 to vector<4x8x128xf32>
    %8 = arith.cmpf oge, %6, %7 : vector<4x8x128xf32>
    %cst_8 = arith.constant 2.000000e-01 : f32
    %9 = vector.broadcast %cst_8 : f32 to vector<4x8x128xf32>
    %10 = arith.mulf %9, %6 : vector<4x8x128xf32>
    %11 = arith.select %8, %6, %10 : vector<4x8x128xi1>, vector<4x8x128xf32>
    %cst_9 = arith.constant dense<0xFF800000> : vector<8x128xf32>
    %12 = vector.multi_reduction <maximumf>, %11, %cst_9 [0] : vector<4x8x128xf32> to vector<8x128xf32>
    %c0_10 = arith.constant 0 : index
    %c0_11 = arith.constant 0 : index
    %13 = vector.load %arg3[%c0_10, %c0_11] : memref<8x128xf32, #tpu.memory_space<vmem>>, vector<8x128xf32>
    tpu.vector_store %arg3[%c0_10, %c0_11], %12 {strides = array<i32>} : memref<8x128xf32, #tpu.memory_space<vmem>>, vector<8x128xf32>,
    return
  }
}

module attributes {stable_mosaic.version = 11 : i64} {
  func.func @_mm_fused_kernel(%arg0: i32, %arg1: i32, %arg2: memref<16x640xbf16, #tpu.memory_space<vmem>>, %arg3: memref<640x128xbf16, #tpu.memory_space<vmem>>, %arg4: memref<1x128xf32, #tpu.memory_space<vmem>>, %arg5: memref<16x128xf32, #tpu.memory_space<vmem>>, %arg6: memref<8x128xf32, #tpu.memory_space<vmem>>) attributes {dimension_semantics = [#tpu.dimension_semantics<parallel>, #tpu.dimension_semantics<parallel>], iteration_bounds = array<i64: 1, 1>, scalar_prefetch = 0 : i64, scratch_operands = 0 : i64, tpu.core_type = #tpu.core_type<tc>, window_params = [{transform_indices = @transform_0, window_bounds = array<i64: 16, 640>}, {transform_indices = @transform_1, window_bounds = array<i64: 640, 128>}, {transform_indices = @transform_2, window_bounds = array<i64: 1, 128>}, {transform_indices = @transform_3, window_bounds = array<i64: 16, 128>}, {transform_indices = @transform_4, window_bounds = array<i64: 8, 128>}]} {
    %c0 = arith.constant 0 : index
    %c0_0 = arith.constant 0 : index
    %0 = vector.load %arg2[%c0, %c0_0] : memref<16x640xbf16, #tpu.memory_space<vmem>>, vector<16x640xbf16>
    %c0_1 = arith.constant 0 : index
    %c0_2 = arith.constant 0 : index
    %1 = vector.load %arg3[%c0_1, %c0_2] : memref<640x128xbf16, #tpu.memory_space<vmem>>, vector<640x128xbf16>
    %cst = arith.constant dense<0.000000e+00> : vector<16x128xf32>
    %2 = tpu.matmul %0, %1, %cst {dimension_numbers = #tpu.dot_dimension_numbers<[1], [0], [0], [1], [0, 0, 1, 1], [], []>} : vector<16x640xbf16>, vector<640x128xbf16>, vector<16x128xf32> -> vector<16x128xf32>
    %c0_3 = arith.constant 0 : index
    %c0_4 = arith.constant 0 : index
    %3 = vector.load %arg4[%c0_3, %c0_4] : memref<1x128xf32, #tpu.memory_space<vmem>>, vector<1x128xf32>
    %4 = vector.broadcast %3 : vector<1x128xf32> to vector<16x128xf32>
    %5 = arith.addf %2, %4 : vector<16x128xf32>
    %c0_5 = arith.constant 0 : index
    %c0_6 = arith.constant 0 : index
    %6 = vector.load %arg5[%c0_5, %c0_6] : memref<16x128xf32, #tpu.memory_space<vmem>>, vector<16x128xf32>
    tpu.vector_store %arg5[%c0_5, %c0_6], %5 {strides = array<i32>} : memref<16x128xf32, #tpu.memory_space<vmem>>, vector<16x128xf32>,
    %c16_i32 = arith.constant 16 : i32
    %7 = arith.muli %arg0, %c16_i32 : i32
    %8 = tpu.iota {dimensions = array<i32: 0>} : vector<16x1xi32>
    %9 = vector.broadcast %7 : i32 to vector<16x1xi32>
    %10 = arith.addi %9, %8 : vector<16x1xi32>
    %c8_i32 = arith.constant 8 : i32
    %11 = vector.broadcast %c8_i32 : i32 to vector<16x1xi32>
    %12 = arith.cmpi slt, %10, %11 : vector<16x1xi32>
    %13 = arith.extui %12 : vector<16x1xi1> to vector<16x1xi32>
    %14 = arith.sitofp %13 : vector<16x1xi32> to vector<16x1xf32>
    %15 = vector.broadcast %14 : vector<16x1xf32> to vector<16x128xf32>
    %16 = arith.mulf %5, %15 : vector<16x128xf32>
    %cst_7 = arith.constant dense<0.000000e+00> : vector<128xf32>
    %17 = vector.multi_reduction <add>, %16, %cst_7 [0] : vector<16x128xf32> to vector<128xf32>
    %18 = vector.shape_cast %17 : vector<128xf32> to vector<1x128xf32>
    %19 = arith.mulf %16, %16 : vector<16x128xf32>
    %cst_8 = arith.constant dense<0.000000e+00> : vector<128xf32>
    %20 = vector.multi_reduction <add>, %19, %cst_8 [0] : vector<16x128xf32> to vector<128xf32>
    %21 = vector.shape_cast %20 : vector<128xf32> to vector<1x128xf32>
    %22 = tpu.iota {dimensions = array<i32: 0>} : vector<8x1xi32>
    %c0_i32 = arith.constant 0 : i32
    %23 = vector.broadcast %c0_i32 : i32 to vector<8x1xi32>
    %24 = arith.cmpi eq, %22, %23 : vector<8x1xi32>
    %cst_9 = arith.constant 0.000000e+00 : f32
    %25 = vector.shape_cast %24 : vector<8x1xi1> to vector<8x1xi1>
    %26 = vector.broadcast %25 : vector<8x1xi1> to vector<8x128xi1>
    %27 = vector.shape_cast %18 : vector<1x128xf32> to vector<1x128xf32>
    %28 = vector.broadcast %27 : vector<1x128xf32> to vector<8x128xf32>
    %29 = vector.broadcast %cst_9 : f32 to vector<8x128xf32>
    %30 = arith.select %26, %28, %29 : vector<8x128xi1>, vector<8x128xf32>
    %c1_i32 = arith.constant 1 : i32
    %31 = vector.broadcast %c1_i32 : i32 to vector<8x1xi32>
    %32 = arith.cmpi eq, %22, %31 : vector<8x1xi32>
    %cst_10 = arith.constant 0.000000e+00 : f32
    %33 = vector.shape_cast %32 : vector<8x1xi1> to vector<8x1xi1>
    %34 = vector.broadcast %33 : vector<8x1xi1> to vector<8x128xi1>
    %35 = vector.shape_cast %21 : vector<1x128xf32> to vector<1x128xf32>
    %36 = vector.broadcast %35 : vector<1x128xf32> to vector<8x128xf32>
    %37 = vector.broadcast %cst_10 : f32 to vector<8x128xf32>
    %38 = arith.select %34, %36, %37 : vector<8x128xi1>, vector<8x128xf32>
    %39 = arith.addf %30, %38 : vector<8x128xf32>
    %c0_11 = arith.constant 0 : index
    %c0_12 = arith.constant 0 : index
    %40 = vector.load %arg6[%c0_11, %c0_12] : memref<8x128xf32, #tpu.memory_space<vmem>>, vector<8x128xf32>
    tpu.vector_store %arg6[%c0_11, %c0_12], %39 {strides = array<i32>} : memref<8x128xf32, #tpu.memory_space<vmem>>, vector<8x128xf32>,
    return
  }
  func.func @transform_0(%arg0: i32, %arg1: i32) -> (i32, i32) {
    %c0_i32 = arith.constant 0 : i32
    %c0_i32_0 = arith.constant 0 : i32
    return %arg0, %c0_i32 : i32, i32
  }
  func.func @transform_1(%arg0: i32, %arg1: i32) -> (i32, i32) {
    %c0_i32 = arith.constant 0 : i32
    %c0_i32_0 = arith.constant 0 : i32
    return %c0_i32, %arg1 : i32, i32
  }
  func.func @transform_2(%arg0: i32, %arg1: i32) -> (i32, i32) {
    %c0_i32 = arith.constant 0 : i32
    %c0_i32_0 = arith.constant 0 : i32
    return %c0_i32, %arg1 : i32, i32
  }
  func.func @transform_3(%arg0: i32, %arg1: i32) -> (i32, i32) {
    %c0_i32 = arith.constant 0 : i32
    return %arg0, %arg1 : i32, i32
  }
  func.func @transform_4(%arg0: i32, %arg1: i32) -> (i32, i32) {
    %c0_i32 = arith.constant 0 : i32
    return %arg0, %arg1 : i32, i32
  }
}

module attributes {stable_mosaic.version = 11 : i64} {
  func.func @_bn_act_pool_kernel(%arg0: memref<1x8x128xf32, #tpu.memory_space<vmem>>, %arg1: memref<1x1x128xf32, #tpu.memory_space<vmem>>, %arg2: memref<1x1x128xf32, #tpu.memory_space<vmem>>, %arg3: memref<8x128xf32, #tpu.memory_space<vmem>>) attributes {dimension_semantics = [], scalar_prefetch = 0 : i64, scratch_operands = 0 : i64, tpu.core_type = #tpu.core_type<tc>} {
    %c0 = arith.constant 0 : index
    %c0_0 = arith.constant 0 : index
    %c0_1 = arith.constant 0 : index
    %0 = vector.load %arg0[%c0, %c0_0, %c0_1] : memref<1x8x128xf32, #tpu.memory_space<vmem>>, vector<1x8x128xf32>
    %c0_2 = arith.constant 0 : index
    %c0_3 = arith.constant 0 : index
    %c0_4 = arith.constant 0 : index
    %1 = vector.load %arg1[%c0_2, %c0_3, %c0_4] : memref<1x1x128xf32, #tpu.memory_space<vmem>>, vector<1x1x128xf32>
    %2 = vector.broadcast %1 : vector<1x1x128xf32> to vector<1x8x128xf32>
    %3 = arith.mulf %0, %2 : vector<1x8x128xf32>
    %c0_5 = arith.constant 0 : index
    %c0_6 = arith.constant 0 : index
    %c0_7 = arith.constant 0 : index
    %4 = vector.load %arg2[%c0_5, %c0_6, %c0_7] : memref<1x1x128xf32, #tpu.memory_space<vmem>>, vector<1x1x128xf32>
    %5 = vector.broadcast %4 : vector<1x1x128xf32> to vector<1x8x128xf32>
    %6 = arith.addf %3, %5 : vector<1x8x128xf32>
    %cst = arith.constant 0.000000e+00 : f32
    %7 = vector.broadcast %cst : f32 to vector<1x8x128xf32>
    %8 = arith.maximumf %6, %7 : vector<1x8x128xf32>
    %cst_8 = arith.constant dense<0xFF800000> : vector<8x128xf32>
    %9 = vector.multi_reduction <maximumf>, %8, %cst_8 [0] : vector<1x8x128xf32> to vector<8x128xf32>
    %c0_9 = arith.constant 0 : index
    %c0_10 = arith.constant 0 : index
    %10 = vector.load %arg3[%c0_9, %c0_10] : memref<8x128xf32, #tpu.memory_space<vmem>>, vector<8x128xf32>
    tpu.vector_store %arg3[%c0_9, %c0_10], %9 {strides = array<i32>} : memref<8x128xf32, #tpu.memory_space<vmem>>, vector<8x128xf32>,
    return
  }
}

module attributes {stable_mosaic.version = 11 : i64} {
  func.func @_bn_act_pool_kernel(%arg0: memref<1x32x128xf32, #tpu.memory_space<vmem>>, %arg1: memref<1x1x128xf32, #tpu.memory_space<vmem>>, %arg2: memref<1x1x128xf32, #tpu.memory_space<vmem>>, %arg3: memref<32x128xf32, #tpu.memory_space<vmem>>) attributes {dimension_semantics = [], scalar_prefetch = 0 : i64, scratch_operands = 0 : i64, tpu.core_type = #tpu.core_type<tc>} {
    %c0 = arith.constant 0 : index
    %c0_0 = arith.constant 0 : index
    %c0_1 = arith.constant 0 : index
    %0 = vector.load %arg0[%c0, %c0_0, %c0_1] : memref<1x32x128xf32, #tpu.memory_space<vmem>>, vector<1x32x128xf32>
    %c0_2 = arith.constant 0 : index
    %c0_3 = arith.constant 0 : index
    %c0_4 = arith.constant 0 : index
    %1 = vector.load %arg1[%c0_2, %c0_3, %c0_4] : memref<1x1x128xf32, #tpu.memory_space<vmem>>, vector<1x1x128xf32>
    %2 = vector.broadcast %1 : vector<1x1x128xf32> to vector<1x32x128xf32>
    %3 = arith.mulf %0, %2 : vector<1x32x128xf32>
    %c0_5 = arith.constant 0 : index
    %c0_6 = arith.constant 0 : index
    %c0_7 = arith.constant 0 : index
    %4 = vector.load %arg2[%c0_5, %c0_6, %c0_7] : memref<1x1x128xf32, #tpu.memory_space<vmem>>, vector<1x1x128xf32>
    %5 = vector.broadcast %4 : vector<1x1x128xf32> to vector<1x32x128xf32>
    %6 = arith.addf %3, %5 : vector<1x32x128xf32>
    %cst = arith.constant 0.000000e+00 : f32
    %7 = vector.broadcast %cst : f32 to vector<1x32x128xf32>
    %8 = arith.maximumf %6, %7 : vector<1x32x128xf32>
    %cst_8 = arith.constant dense<0xFF800000> : vector<32x128xf32>
    %9 = vector.multi_reduction <maximumf>, %8, %cst_8 [0] : vector<1x32x128xf32> to vector<32x128xf32>
    %c0_9 = arith.constant 0 : index
    %c0_10 = arith.constant 0 : index
    %10 = vector.load %arg3[%c0_9, %c0_10] : memref<32x128xf32, #tpu.memory_space<vmem>>, vector<32x128xf32>
    tpu.vector_store %arg3[%c0_9, %c0_10], %9 {strides = array<i32>} : memref<32x128xf32, #tpu.memory_space<vmem>>, vector<32x128xf32>,
    return
  }
}

module attributes {stable_mosaic.version = 11 : i64} {
  func.func @_bn_act_pool_kernel(%arg0: memref<1x128x128xf32, #tpu.memory_space<vmem>>, %arg1: memref<1x1x128xf32, #tpu.memory_space<vmem>>, %arg2: memref<1x1x128xf32, #tpu.memory_space<vmem>>, %arg3: memref<128x128xf32, #tpu.memory_space<vmem>>) attributes {dimension_semantics = [], scalar_prefetch = 0 : i64, scratch_operands = 0 : i64, tpu.core_type = #tpu.core_type<tc>} {
    %c0 = arith.constant 0 : index
    %c0_0 = arith.constant 0 : index
    %c0_1 = arith.constant 0 : index
    %0 = vector.load %arg0[%c0, %c0_0, %c0_1] : memref<1x128x128xf32, #tpu.memory_space<vmem>>, vector<1x128x128xf32>
    %c0_2 = arith.constant 0 : index
    %c0_3 = arith.constant 0 : index
    %c0_4 = arith.constant 0 : index
    %1 = vector.load %arg1[%c0_2, %c0_3, %c0_4] : memref<1x1x128xf32, #tpu.memory_space<vmem>>, vector<1x1x128xf32>
    %2 = vector.broadcast %1 : vector<1x1x128xf32> to vector<1x128x128xf32>
    %3 = arith.mulf %0, %2 : vector<1x128x128xf32>
    %c0_5 = arith.constant 0 : index
    %c0_6 = arith.constant 0 : index
    %c0_7 = arith.constant 0 : index
    %4 = vector.load %arg2[%c0_5, %c0_6, %c0_7] : memref<1x1x128xf32, #tpu.memory_space<vmem>>, vector<1x1x128xf32>
    %5 = vector.broadcast %4 : vector<1x1x128xf32> to vector<1x128x128xf32>
    %6 = arith.addf %3, %5 : vector<1x128x128xf32>
    %cst = arith.constant 0.000000e+00 : f32
    %7 = vector.broadcast %cst : f32 to vector<1x128x128xf32>
    %8 = arith.maximumf %6, %7 : vector<1x128x128xf32>
    %cst_8 = arith.constant dense<0xFF800000> : vector<128x128xf32>
    %9 = vector.multi_reduction <maximumf>, %8, %cst_8 [0] : vector<1x128x128xf32> to vector<128x128xf32>
    %c0_9 = arith.constant 0 : index
    %c0_10 = arith.constant 0 : index
    %10 = vector.load %arg3[%c0_9, %c0_10] : memref<128x128xf32, #tpu.memory_space<vmem>>, vector<128x128xf32>
    tpu.vector_store %arg3[%c0_9, %c0_10], %9 {strides = array<i32>} : memref<128x128xf32, #tpu.memory_space<vmem>>, vector<128x128xf32>,
    return
  }
}

module attributes {stable_mosaic.version = 11 : i64} {
  func.func @_mm_fused_kernel(%arg0: i32, %arg1: i32, %arg2: memref<128x128xbf16, #tpu.memory_space<vmem>>, %arg3: memref<128x128xbf16, #tpu.memory_space<vmem>>, %arg4: memref<1x128xf32, #tpu.memory_space<vmem>>, %arg5: memref<128x128xf32, #tpu.memory_space<vmem>>, %arg6: memref<8x128xf32, #tpu.memory_space<vmem>>) attributes {dimension_semantics = [#tpu.dimension_semantics<parallel>, #tpu.dimension_semantics<parallel>], iteration_bounds = array<i64: 4, 1>, scalar_prefetch = 0 : i64, scratch_operands = 0 : i64, tpu.core_type = #tpu.core_type<tc>, window_params = [{transform_indices = @transform_0, window_bounds = array<i64: 128, 128>}, {transform_indices = @transform_1, window_bounds = array<i64: 128, 128>}, {transform_indices = @transform_2, window_bounds = array<i64: 1, 128>}, {transform_indices = @transform_3, window_bounds = array<i64: 128, 128>}, {transform_indices = @transform_4, window_bounds = array<i64: 8, 128>}]} {
    %c0 = arith.constant 0 : index
    %c0_0 = arith.constant 0 : index
    %0 = vector.load %arg2[%c0, %c0_0] : memref<128x128xbf16, #tpu.memory_space<vmem>>, vector<128x128xbf16>
    %c0_1 = arith.constant 0 : index
    %c0_2 = arith.constant 0 : index
    %1 = vector.load %arg3[%c0_1, %c0_2] : memref<128x128xbf16, #tpu.memory_space<vmem>>, vector<128x128xbf16>
    %cst = arith.constant dense<0.000000e+00> : vector<128x128xf32>
    %2 = tpu.matmul %0, %1, %cst {dimension_numbers = #tpu.dot_dimension_numbers<[1], [0], [0], [1], [0, 0, 1, 1], [], []>} : vector<128x128xbf16>, vector<128x128xbf16>, vector<128x128xf32> -> vector<128x128xf32>
    %c0_3 = arith.constant 0 : index
    %c0_4 = arith.constant 0 : index
    %3 = vector.load %arg4[%c0_3, %c0_4] : memref<1x128xf32, #tpu.memory_space<vmem>>, vector<1x128xf32>
    %4 = vector.broadcast %3 : vector<1x128xf32> to vector<128x128xf32>
    %5 = arith.addf %2, %4 : vector<128x128xf32>
    %6 = math.tanh %5 : vector<128x128xf32>
    %c0_5 = arith.constant 0 : index
    %c0_6 = arith.constant 0 : index
    %7 = vector.load %arg5[%c0_5, %c0_6] : memref<128x128xf32, #tpu.memory_space<vmem>>, vector<128x128xf32>
    tpu.vector_store %arg5[%c0_5, %c0_6], %6 {strides = array<i32>} : memref<128x128xf32, #tpu.memory_space<vmem>>, vector<128x128xf32>,
    %c128_i32 = arith.constant 128 : i32
    %8 = arith.muli %arg0, %c128_i32 : i32
    %9 = tpu.iota {dimensions = array<i32: 0>} : vector<128x1xi32>
    %10 = vector.broadcast %8 : i32 to vector<128x1xi32>
    %11 = arith.addi %10, %9 : vector<128x1xi32>
    %c512_i32 = arith.constant 512 : i32
    %12 = vector.broadcast %c512_i32 : i32 to vector<128x1xi32>
    %13 = arith.cmpi slt, %11, %12 : vector<128x1xi32>
    %14 = arith.extui %13 : vector<128x1xi1> to vector<128x1xi32>
    %15 = arith.sitofp %14 : vector<128x1xi32> to vector<128x1xf32>
    %16 = vector.broadcast %15 : vector<128x1xf32> to vector<128x128xf32>
    %17 = arith.mulf %6, %16 : vector<128x128xf32>
    %cst_7 = arith.constant dense<0.000000e+00> : vector<128xf32>
    %18 = vector.multi_reduction <add>, %17, %cst_7 [0] : vector<128x128xf32> to vector<128xf32>
    %19 = vector.shape_cast %18 : vector<128xf32> to vector<1x128xf32>
    %20 = arith.mulf %17, %17 : vector<128x128xf32>
    %cst_8 = arith.constant dense<0.000000e+00> : vector<128xf32>
    %21 = vector.multi_reduction <add>, %20, %cst_8 [0] : vector<128x128xf32> to vector<128xf32>
    %22 = vector.shape_cast %21 : vector<128xf32> to vector<1x128xf32>
    %23 = tpu.iota {dimensions = array<i32: 0>} : vector<8x1xi32>
    %c0_i32 = arith.constant 0 : i32
    %24 = vector.broadcast %c0_i32 : i32 to vector<8x1xi32>
    %25 = arith.cmpi eq, %23, %24 : vector<8x1xi32>
    %cst_9 = arith.constant 0.000000e+00 : f32
    %26 = vector.shape_cast %25 : vector<8x1xi1> to vector<8x1xi1>
    %27 = vector.broadcast %26 : vector<8x1xi1> to vector<8x128xi1>
    %28 = vector.shape_cast %19 : vector<1x128xf32> to vector<1x128xf32>
    %29 = vector.broadcast %28 : vector<1x128xf32> to vector<8x128xf32>
    %30 = vector.broadcast %cst_9 : f32 to vector<8x128xf32>
    %31 = arith.select %27, %29, %30 : vector<8x128xi1>, vector<8x128xf32>
    %c1_i32 = arith.constant 1 : i32
    %32 = vector.broadcast %c1_i32 : i32 to vector<8x1xi32>
    %33 = arith.cmpi eq, %23, %32 : vector<8x1xi32>
    %cst_10 = arith.constant 0.000000e+00 : f32
    %34 = vector.shape_cast %33 : vector<8x1xi1> to vector<8x1xi1>
    %35 = vector.broadcast %34 : vector<8x1xi1> to vector<8x128xi1>
    %36 = vector.shape_cast %22 : vector<1x128xf32> to vector<1x128xf32>
    %37 = vector.broadcast %36 : vector<1x128xf32> to vector<8x128xf32>
    %38 = vector.broadcast %cst_10 : f32 to vector<8x128xf32>
    %39 = arith.select %35, %37, %38 : vector<8x128xi1>, vector<8x128xf32>
    %40 = arith.addf %31, %39 : vector<8x128xf32>
    %c0_11 = arith.constant 0 : index
    %c0_12 = arith.constant 0 : index
    %41 = vector.load %arg6[%c0_11, %c0_12] : memref<8x128xf32, #tpu.memory_space<vmem>>, vector<8x128xf32>
    tpu.vector_store %arg6[%c0_11, %c0_12], %40 {strides = array<i32>} : memref<8x128xf32, #tpu.memory_space<vmem>>, vector<8x128xf32>,
    return
  }
  func.func @transform_0(%arg0: i32, %arg1: i32) -> (i32, i32) {
    %c0_i32 = arith.constant 0 : i32
    %c0_i32_0 = arith.constant 0 : i32
    return %arg0, %c0_i32 : i32, i32
  }
  func.func @transform_1(%arg0: i32, %arg1: i32) -> (i32, i32) {
    %c0_i32 = arith.constant 0 : i32
    %c0_i32_0 = arith.constant 0 : i32
    return %c0_i32, %arg1 : i32, i32
  }
  func.func @transform_2(%arg0: i32, %arg1: i32) -> (i32, i32) {
    %c0_i32 = arith.constant 0 : i32
    %c0_i32_0 = arith.constant 0 : i32
    return %c0_i32, %arg1 : i32, i32
  }
  func.func @transform_3(%arg0: i32, %arg1: i32) -> (i32, i32) {
    %c0_i32 = arith.constant 0 : i32
    return %arg0, %arg1 : i32, i32
  }
  func.func @transform_4(%arg0: i32, %arg1: i32) -> (i32, i32) {
    %c0_i32 = arith.constant 0 : i32
    return %arg0, %arg1 : i32, i32
  }
}

</mosaic_0001>

<llo_original>
// kernel: generator_forward.14
$region0: #{generator_forward.14}
  #allocation0 [shape = 'u32[]', space=smem, size = 0x4, offset = 0x4, fixed_abs, tag = 'smem constant byte address 0x4 - core index']
  #allocation1 [shape = 'u32[144,128]{1,0:T(1,128)}', space=vmem, size = 0x12000, scoped, tag = 'internal scratch']
  %s0 = inlined_call_operand.vmem [shape: bf16[16,128], index: 0, kind: input, shape index: {}]
  %s1 = inlined_call_operand.hbm [shape: bf16[128,2048], index: 1, kind: input, shape index: {}]
  %s2 = inlined_call_operand.vmem [shape: f32[1,2048], index: 2, kind: input, shape index: {}]
  %s3 = inlined_call_operand.vmem [shape: f32[16,2048], index: 3, kind: output, shape index: {0}]
  %s4 = inlined_call_operand.hbm [shape: f32[8,2048], index: 4, kind: output, shape index: {1}]
  %5 = xla_tuple %s3, %s4
  %s6 = sld [smem:[#allocation0]]
  $region76: #{generator_forward.14} parent=0
    _
  %s8 = ssub.s32 1, %s6
  %s9 = scalar_select 0, %s8, %s6
  $region1: #{generator_forward.14} parent=0
    #allocation2 [shape = 'u8[262144]{0}', space=vmem, size = 0x40000, scoped, tag = 'input window, operand 1']
    #allocation3 [shape = 's32[2]{0}', space=sflag, size = 0x8, scoped, tag = 'scoped memory for generator_forward.14']
    #allocation4 [shape = 's32[2]{0}', space=sflag, size = 0x8, scoped, tag = 'scoped memory for generator_forward.14']
    #allocation5 [shape = 'u8[65536]{0}', space=vmem, size = 0x10000, scoped, tag = 'output window, operand 0']
    #allocation6 [shape = 'u8[32768]{0}', space=vmem, size = 0x8000, scoped, tag = 'output window, operand 1']
    %10 = vsyncpa [#allocation3], 0
    %s11 = scalar_lea.sflag [#allocation3], 1
    %12 = vsyncpa %s11, 0
    %13 = vsyncpa [#allocation4], 0
    %s14 = scalar_lea.sflag [#allocation4], 1
    %15 = vsyncpa %s14, 0
    loop: start=0, step=1, limit=6
    $region2: #{generator_forward.14} parent=1 // loop_pre_header
      _
    $region3: #{generator_forward.14} parent=1 // loop_header
      %s17 = sphi 0, %s21
      %p18 = scmp.ge.s32.totalorder %s17, 6
      %s24 = sphi 0, %s36
      %s25 = sphi 0, %s32
      %s26 = sphi 0, %s24
      %s27 = sphi 0, %s25
      %s28 = sphi 0, %s26
      %s29 = sphi 0, %s27
      %s39 = sphi 0, %s41
      %s42 = sphi 0, %s39
      %s43 = sphi 0, %s42
      %s59 = sphi 0, %s43
      %s65 = sphi 0, %s67
      %s68 = sphi 0, %s65
      %s69 = sphi 0, %s68
      %s85 = sphi 0, %s69
      %s91 = sphi 0, %s93
      %s94 = sphi 0, %s91
      %s95 = sphi 0, %s94
      %s111 = sphi 0, %s95
      %s119 = sphi 0, %s121
      %s122 = sphi 0, %s119
      %s123 = sphi 0, %s122
      %s139 = sphi 0, %s123
      %s147 = sphi 0, %s149
      %s150 = sphi 0, %s147
      %s151 = sphi 0, %s150
      %s167 = sphi 0, %s151
    $region4: #{generator_forward.14} parent=1 // loop_header_branch
      %20 = sbr.rel (%p18) target = $region8
    $region5: #{generator_forward.14} parent=1 // loop_body
      %s22 = ssub.s32 %s17, 1
      %s23 = ssub.s32 %s17, 2
      %s30 = sadd.s32 1, %s25
      %p31 = scmp.ge.s32.totalorder %s30, 4
      %s32 = scalar_select %p31, 0, %s30
      %s33 = sadd.s32 1, %s24
      %s34 = scalar_select %p31, %s33, %s24
      %p35 = scmp.ge.s32.totalorder %s34, 1
      %s36 = scalar_select %p35, 0, %s34
      %s37 = ssub.s32 %s24, %s36
      %p38 = scmp.eq.s32.totalorder %s37, 0
      %s40 = sadd.s32 %s39, 1
      %s41 = scalar_select %p38, %s39, %s40
      %p44 = pneg %p38
      %p45 = scmp.eq.s32.totalorder %s17, 3
      %p46 = por %p44, %p45
      %p47 = scmp.ne.s32.totalorder %s39, %s42
      %p48 = scmp.eq.s32.totalorder %s17, 0
      %p49 = por %p47, %p48
      %p50 = scmp.ne.s32.totalorder %s39, %s42
      %p51 = scmp.eq.s32.totalorder %s22, 3
      %p52 = por %p50, %p51
      %p53 = scmp.ne.s32.totalorder %s42, %s43
      %p54 = scmp.eq.s32.totalorder %s22, 0
      %p55 = por %p53, %p54
      %p56 = scmp.ne.s32.totalorder %s42, %s43
      %p57 = scmp.eq.s32.totalorder %s23, 3
      %p58 = por %p56, %p57
      %p60 = scmp.ne.s32.totalorder %s43, %s59
      %p61 = scmp.eq.s32.totalorder %s23, 0
      %p62 = por %p60, %p61
      %s63 = ssub.s32 %s25, %s32
      %p64 = scmp.eq.s32.totalorder %s63, 0
      %s66 = sadd.s32 %s65, 1
      %s67 = scalar_select %p64, %s65, %s66
      %p70 = pneg %p64
      %p71 = scmp.eq.s32.totalorder %s17, 3
      %p72 = por %p70, %p71
      %p73 = scmp.ne.s32.totalorder %s65, %s68
      %p74 = scmp.eq.s32.totalorder %s17, 0
      %p75 = por %p73, %p74
      %p76 = scmp.ne.s32.totalorder %s65, %s68
      %p77 = scmp.eq.s32.totalorder %s22, 3
      %p78 = por %p76, %p77
      %p79 = scmp.ne.s32.totalorder %s68, %s69
      %p80 = scmp.eq.s32.totalorder %s22, 0
      %p81 = por %p79, %p80
      %p82 = scmp.ne.s32.totalorder %s68, %s69
      %p83 = scmp.eq.s32.totalorder %s23, 3
      %p84 = por %p82, %p83
      %p86 = scmp.ne.s32.totalorder %s69, %s85
      %p87 = scmp.eq.s32.totalorder %s23, 0
      %p88 = por %p86, %p87
      %s89 = ssub.s32 %s25, %s32
      %p90 = scmp.eq.s32.totalorder %s89, 0
      %s92 = sadd.s32 %s91, 1
      %s93 = scalar_select %p90, %s91, %s92
      %p96 = pneg %p90
      %p97 = scmp.eq.s32.totalorder %s17, 3
      %p98 = por %p96, %p97
      %p99 = scmp.ne.s32.totalorder %s91, %s94
      %p100 = scmp.eq.s32.totalorder %s17, 0
      %p101 = por %p99, %p100
      %p102 = scmp.ne.s32.totalorder %s91, %s94
      %p103 = scmp.eq.s32.totalorder %s22, 3
      %p104 = por %p102, %p103
      %p105 = scmp.ne.s32.totalorder %s94, %s95
      %p106 = scmp.eq.s32.totalorder %s22, 0
      %p107 = por %p105, %p106
      %p108 = scmp.ne.s32.totalorder %s94, %s95
      %p109 = scmp.eq.s32.totalorder %s23, 3
      %p110 = por %p108, %p109
      %p112 = scmp.ne.s32.totalorder %s95, %s111
      %p113 = scmp.eq.s32.totalorder %s23, 0
      %p114 = por %p112, %p113
      %s115 = ssub.s32 %s24, %s36
      %s116 = ssub.s32 %s25, %s32
      %s117 = sor.u32 %s115, %s116
      %p118 = scmp.eq.s32.totalorder %s117, 0
      %s120 = sadd.s32 %s119, 1
      %s121 = scalar_select %p118, %s119, %s120
      %p124 = pneg %p118
      %p125 = scmp.eq.s32.totalorder %s17, 3
      %p126 = por %p124, %p125
      %p127 = scmp.ne.s32.totalorder %s119, %s122
      %p128 = scmp.eq.s32.totalorder %s17, 0
      %p129 = por %p127, %p128
      %p130 = scmp.ne.s32.totalorder %s119, %s122
      %p131 = scmp.eq.s32.totalorder %s22, 3
      %p132 = por %p130, %p131
      %p133 = scmp.ne.s32.totalorder %s122, %s123
      %p134 = scmp.eq.s32.totalorder %s22, 0
      %p135 = por %p133, %p134
      %p136 = scmp.ne.s32.totalorder %s122, %s123
      %p137 = scmp.eq.s32.totalorder %s23, 3
      %p138 = por %p136, %p137
      %p140 = scmp.ne.s32.totalorder %s123, %s139
      %p141 = scmp.eq.s32.totalorder %s23, 0
      %p142 = por %p140, %p141
      %s143 = ssub.s32 %s24, %s36
      %s144 = ssub.s32 %s25, %s32
      %s145 = sor.u32 %s143, %s144
      %p146 = scmp.eq.s32.totalorder %s145, 0
      %s148 = sadd.s32 %s147, 1
      %s149 = scalar_select %p146, %s147, %s148
      %p152 = pneg %p146
      %p153 = scmp.eq.s32.totalorder %s17, 3
      %p154 = por %p152, %p153
      %p155 = scmp.ne.s32.totalorder %s147, %s150
      %p156 = scmp.eq.s32.totalorder %s17, 0
      %p157 = por %p155, %p156
      %p158 = scmp.ne.s32.totalorder %s147, %s150
      %p159 = scmp.eq.s32.totalorder %s22, 3
      %p160 = por %p158, %p159
      %p161 = scmp.ne.s32.totalorder %s150, %s151
      %p162 = scmp.eq.s32.totalorder %s22, 0
      %p163 = por %p161, %p162
      %p164 = scmp.ne.s32.totalorder %s150, %s151
      %p165 = scmp.eq.s32.totalorder %s23, 3
      %p166 = por %p164, %p165
      %p168 = scmp.ne.s32.totalorder %s151, %s167
      %p169 = scmp.eq.s32.totalorder %s23, 0
      %p170 = por %p168, %p169
      %p171 = scmp.le.s32.totalorder 1, %s17
      %p172 = scmp.lt.s32.totalorder %s17, 5
      %p173 = pnand %p171, %p172
      %p174 = pneg %p173
      // Predicated region
      $region9: #{generator_forward.14} parent=5 // pred_check
        _
      $region10: #{generator_forward.14} parent=5 // pred_check_branch
        %176 = sbr.rel (%p173) target = $region12
      $region11: #{generator_forward.14} parent=5 // pred_region
        %s177 = ssub.s32 %s17, 1
        // Predicated region
        $region13: #{generator_forward.14} parent=11 // pred_check
          %p178 = pneg %p55
        $region14: #{generator_forward.14} parent=11 // pred_check_branch
          %180 = sbr.rel (%p178) target = $region16
        $region15: #{generator_forward.14} parent=11 // pred_region
          %s181 = smul.u32 2, %s26
          %p182 = scmp.lt.s32.totalorder %s181, 1
          %s183 = scalar_select %p182, %s181, 1
          %s184 = smul.addr %s183, 4
          %s185 = scalar_lea.vmem %s0, %s184
          %s186 = smul.u32 2, %s26
        $region16: #{generator_forward.14} parent=11 // pred_fallthru
          _
      $region12: #{generator_forward.14} parent=5 // pred_fallthru
        _
      %p187 = scmp.lt.s32.totalorder %s17, 4
      // Predicated region
      $region17: #{generator_forward.14} parent=5 // pred_check
        %p188 = pneg %p187
      $region18: #{generator_forward.14} parent=5 // pred_check_branch
        %190 = sbr.rel (%p188) target = $region20
      $region19: #{generator_forward.14} parent=5 // pred_region
        // Predicated region
        $region21: #{generator_forward.14} parent=19 // pred_check
          %p191 = pneg %p75
        $region22: #{generator_forward.14} parent=19 // pred_check_branch
          %193 = sbr.rel (%p191) target = $region24
        $region23: #{generator_forward.14} parent=19 // pred_region
          %s194 = sand.u32 %s65, 1
          %s195 = scalar_lea.sflag [#allocation3], %s194
          %s196 = sand.u32 %s65, 1
          %s197 = smul.addr %s196, 256
          %s198 = scalar_lea.vmem [#allocation2], %s197
          %s199 = smul.u32 4, %s25
          %s201 = ssub.s32 4096, 4096
          %202 = vsyncadd %s195, %s201
          %s203 = smul.addr %s199, 64
          %s204 = scalar_lea.hbm %s1, %s203
          %s205 = sshll.u32 %s198, 4
          %s206 = int_to_ptr.vmem [resolvable:$true] %s205
          %211 = dma.hbm_to_vmem [thread:$0]  %s204, 4096, %s206, %s195, 1024, 256, 16
        $region24: #{generator_forward.14} parent=19 // pred_fallthru
          _
        // Predicated region
        $region25: #{generator_forward.14} parent=19 // pred_check
          %p212 = pneg %p101
        $region26: #{generator_forward.14} parent=19 // pred_check_branch
          %214 = sbr.rel (%p212) target = $region28
        $region27: #{generator_forward.14} parent=19 // pred_region
          %s215 = smul.u32 4, %s25
          %p216 = scmp.lt.s32.totalorder %s215, 15
          %s217 = scalar_select %p216, %s215, 15
          %s218 = scalar_lea.vmem %s2, %s217
          %s219 = smul.u32 4, %s25
        $region28: #{generator_forward.14} parent=19 // pred_fallthru
          _
      $region20: #{generator_forward.14} parent=5 // pred_fallthru
        _
      %p220 = scmp.le.s32.totalorder 1, %s17
      %p221 = scmp.lt.s32.totalorder %s17, 5
      %p222 = pnand %p220, %p221
      %p223 = pneg %p222
      // Predicated region
      $region29: #{generator_forward.14} parent=5 // pred_check
        _
      $region30: #{generator_forward.14} parent=5 // pred_check_branch
        %225 = sbr.rel (%p222) target = $region32
      $region31: #{generator_forward.14} parent=5 // pred_region
        %s226 = ssub.s32 %s17, 1
        %s227 = sand.u32 %s68, 1
        %s228 = scalar_lea.sflag [#allocation3], %s227
        %s229 = sand.u32 %s68, 1
        %s230 = smul.addr %s229, 256
        %s231 = scalar_lea.vmem [#allocation2], %s230
        // Predicated region
        $region33: #{generator_forward.14} parent=31 // pred_check
          %p232 = pneg %p81
        $region34: #{generator_forward.14} parent=31 // pred_check_branch
          %234 = sbr.rel (%p232) target = $region36
        $region35: #{generator_forward.14} parent=31 // pred_region
          %235 = dma.done %s228, 4096
        $region36: #{generator_forward.14} parent=31 // pred_fallthru
          _
        %s236 = smul.u32 2, %s26
        %p237 = scmp.lt.s32.totalorder %s236, 1
        %s238 = scalar_select %p237, %s236, 1
        %s239 = smul.addr %s238, 4
        %s240 = scalar_lea.vmem %s0, %s239
        %p241 = pneg %p55
        %p242 = pneg %p52
        %s243 = sand.u32 %s68, 1
        %s244 = scalar_lea.sflag [#allocation3], %s243
        %s245 = sand.u32 %s68, 1
        %s246 = smul.addr %s245, 256
        %s247 = scalar_lea.vmem [#allocation2], %s246
        %p248 = pneg %p81
        %p249 = pneg %p78
        %s250 = smul.u32 4, %s27
        %p251 = scmp.lt.s32.totalorder %s250, 15
        %s252 = scalar_select %p251, %s250, 15
        %s253 = scalar_lea.vmem %s2, %s252
        %p254 = pneg %p107
        %p255 = pneg %p104
        %p256 = pneg %p135
        %p257 = pneg %p132
        %s258 = sand.u32 %s122, 1
        %s259 = sand.u32 %s122, 1
        %s260 = smul.addr %s259, 64
        %s261 = scalar_lea.vmem [#allocation5], %s260
        %p262 = pneg %p163
        %p263 = pneg %p160
        %s264 = sand.u32 %s150, 1
        %s265 = scalar_lea.sflag [#allocation4], %s264
        %s266 = sand.u32 %s150, 1
        %s267 = smul.addr %s266, 32
        %s268 = scalar_lea.vmem [#allocation6], %s267
        %s269 = smul.u32 2, %s26
        %p270 = scmp.lt.s32.totalorder %s269, 1
        %s271 = scalar_select %p270, %s269, 1
        %s272 = smul.addr %s271, 4
        %s273 = scalar_lea.vmem %s0, %s272
        %s274 = smul.u32 2, %s26
        %s275 = smul.u32 4, %s27
        %s276 = smul.u32 4, %s27
        %p277 = scmp.lt.s32.totalorder %s276, 15
        %s278 = scalar_select %p277, %s276, 15
        %s279 = scalar_lea.vmem %s2, %s278
        %s280 = smul.u32 4, %s27
        %s281 = smul.u32 2, %s26
        %s282 = smul.u32 4, %s27
        %s283 = smul.u32 4, %s27
        %v285 = vld [vmem:[%s273] sm:$0xf]
        %v286 = vld [vmem:[%s273 + $0x4] sm:$0xf]
        %v287 = vld [vmem:[%s231] sm:$0xff]
        %v288 = vld [vmem:[%s231 + $0x8] sm:$0xff]
        %v289 = vld [vmem:[%s231 + $0x10] sm:$0xff]
        %v290 = vld [vmem:[%s231 + $0x18] sm:$0xff]
        %v291 = vld [vmem:[%s231 + $0x20] sm:$0xff]
        %v292 = vld [vmem:[%s231 + $0x28] sm:$0xff]
        %v293 = vld [vmem:[%s231 + $0x30] sm:$0xff]
        %v294 = vld [vmem:[%s231 + $0x38] sm:$0xff]
        %v295 = vld [vmem:[%s231 + $0x40] sm:$0xff]
        %v296 = vld [vmem:[%s231 + $0x48] sm:$0xff]
        %v297 = vld [vmem:[%s231 + $0x50] sm:$0xff]
        %v298 = vld [vmem:[%s231 + $0x58] sm:$0xff]
        %v299 = vld [vmem:[%s231 + $0x60] sm:$0xff]
        %v300 = vld [vmem:[%s231 + $0x68] sm:$0xff]
        %v301 = vld [vmem:[%s231 + $0x70] sm:$0xff]
        %v302 = vld [vmem:[%s231 + $0x78] sm:$0xff]
        %v303 = vld [vmem:[%s231 + $0x80] sm:$0xff]
        %v304 = vld [vmem:[%s231 + $0x88] sm:$0xff]
        %v305 = vld [vmem:[%s231 + $0x90] sm:$0xff]
        %v306 = vld [vmem:[%s231 + $0x98] sm:$0xff]
        %v307 = vld [vmem:[%s231 + $0xa0] sm:$0xff]
        %v308 = vld [vmem:[%s231 + $0xa8] sm:$0xff]
        %v309 = vld [vmem:[%s231 + $0xb0] sm:$0xff]
        %v310 = vld [vmem:[%s231 + $0xb8] sm:$0xff]
        %v311 = vld [vmem:[%s231 + $0xc0] sm:$0xff]
        %v312 = vld [vmem:[%s231 + $0xc8] sm:$0xff]
        %v313 = vld [vmem:[%s231 + $0xd0] sm:$0xff]
        %v314 = vld [vmem:[%s231 + $0xd8] sm:$0xff]
        %v315 = vld [vmem:[%s231 + $0xe0] sm:$0xff]
        %v316 = vld [vmem:[%s231 + $0xe8] sm:$0xff]
        %v317 = vld [vmem:[%s231 + $0xf0] sm:$0xff]
        %v318 = vld [vmem:[%s231 + $0xf8] sm:$0xff]
        %v319 = vld [vmem:[%s279] sm:$0xf]
        %v321 = vlaneseq
        %v322 = vshrl.u32 %v321, 7
        %v323 = vsub.s32 0, %v322
        %v324 = vrot.slane %v319, %v323
        %v325 = vlaneseq
        %v326 = vshrl.u32 %v325, 7
        %v327 = vsub.s32 1, %v326
        %v328 = vrot.slane %v319, %v327
        %v329 = vlaneseq
        %v330 = vshrl.u32 %v329, 7
        %v331 = vsub.s32 2, %v330
        %v332 = vrot.slane %v319, %v331
        %v333 = vlaneseq
        %v334 = vshrl.u32 %v333, 7
        %v335 = vsub.s32 3, %v334
        %v336 = vrot.slane %v319, %v335
        %v343 = vunpack.c.l.b16 %v285
        %v344 = vunpack.c.l.b16 %v286
        %v345 = vpack.c.b16 %v344, %v343
        %v379 = vunpack.c.l.b16 %v287
        %v380 = vunpack.c.h.b16 %v287
        %v381 = vunpack.c.l.b16 %v288
        %v382 = vunpack.c.h.b16 %v288
        %v383 = vunpack.c.l.b16 %v289
        %v384 = vunpack.c.h.b16 %v289
        %v385 = vunpack.c.l.b16 %v290
        %v386 = vunpack.c.h.b16 %v290
        %v387 = vunpack.c.l.b16 %v291
        %v388 = vunpack.c.h.b16 %v291
        %v389 = vunpack.c.l.b16 %v292
        %v390 = vunpack.c.h.b16 %v292
        %v391 = vunpack.c.l.b16 %v293
        %v392 = vunpack.c.h.b16 %v293
        %v393 = vunpack.c.l.b16 %v294
        %v394 = vunpack.c.h.b16 %v294
        %v395 = vunpack.c.l.b16 %v295
        %v396 = vunpack.c.h.b16 %v295
        %v397 = vunpack.c.l.b16 %v296
        %v398 = vunpack.c.h.b16 %v296
        %v399 = vunpack.c.l.b16 %v297
        %v400 = vunpack.c.h.b16 %v297
        %v401 = vunpack.c.l.b16 %v298
        %v402 = vunpack.c.h.b16 %v298
        %v403 = vunpack.c.l.b16 %v299
        %v404 = vunpack.c.h.b16 %v299
        %v405 = vunpack.c.l.b16 %v300
        %v406 = vunpack.c.h.b16 %v300
        %v407 = vunpack.c.l.b16 %v301
        %v408 = vunpack.c.h.b16 %v301
        %v409 = vunpack.c.l.b16 %v302
        %v410 = vunpack.c.h.b16 %v302
        %v411 = vunpack.c.l.b16 %v303
        %v412 = vunpack.c.h.b16 %v303
        %v413 = vunpack.c.l.b16 %v304
        %v414 = vunpack.c.h.b16 %v304
        %v415 = vunpack.c.l.b16 %v305
        %v416 = vunpack.c.h.b16 %v305
        %v417 = vunpack.c.l.b16 %v306
        %v418 = vunpack.c.h.b16 %v306
        %v419 = vunpack.c.l.b16 %v307
        %v420 = vunpack.c.h.b16 %v307
        %v421 = vunpack.c.l.b16 %v308
        %v422 = vunpack.c.h.b16 %v308
        %v423 = vunpack.c.l.b16 %v309
        %v424 = vunpack.c.h.b16 %v309
        %v425 = vunpack.c.l.b16 %v310
        %v426 = vunpack.c.h.b16 %v310
        %v427 = vunpack.c.l.b16 %v311
        %v428 = vunpack.c.h.b16 %v311
        %v429 = vunpack.c.l.b16 %v312
        %v430 = vunpack.c.h.b16 %v312
        %v431 = vunpack.c.l.b16 %v313
        %v432 = vunpack.c.h.b16 %v313
        %v433 = vunpack.c.l.b16 %v314
        %v434 = vunpack.c.h.b16 %v314
        %v435 = vunpack.c.l.b16 %v315
        %v436 = vunpack.c.h.b16 %v315
        %v437 = vunpack.c.l.b16 %v316
        %v438 = vunpack.c.h.b16 %v316
        %v439 = vunpack.c.l.b16 %v317
        %v440 = vunpack.c.h.b16 %v317
        %v441 = vunpack.c.l.b16 %v318
        %v442 = vunpack.c.h.b16 %v318
        %v443 = vpack.c.b16 %v383, %v379
        %v444 = vpack.c.b16 %v384, %v380
        %v445 = vpack.c.b16 %v385, %v381
        %v446 = vpack.c.b16 %v386, %v382
        %v447 = vpack.c.b16 %v391, %v387
        %v448 = vpack.c.b16 %v392, %v388
        %v449 = vpack.c.b16 %v393, %v389
        %v450 = vpack.c.b16 %v394, %v390
        %v451 = vpack.c.b16 %v399, %v395
        %v452 = vpack.c.b16 %v400, %v396
        %v453 = vpack.c.b16 %v401, %v397
        %v454 = vpack.c.b16 %v402, %v398
        %v455 = vpack.c.b16 %v407, %v403
        %v456 = vpack.c.b16 %v408, %v404
        %v457 = vpack.c.b16 %v409, %v405
        %v458 = vpack.c.b16 %v410, %v406
        %v459 = vpack.c.b16 %v415, %v411
        %v460 = vpack.c.b16 %v416, %v412
        %v461 = vpack.c.b16 %v417, %v413
        %v462 = vpack.c.b16 %v418, %v414
        %v463 = vpack.c.b16 %v423, %v419
        %v464 = vpack.c.b16 %v424, %v420
        %v465 = vpack.c.b16 %v425, %v421
        %v466 = vpack.c.b16 %v426, %v422
        %v467 = vpack.c.b16 %v431, %v427
        %v468 = vpack.c.b16 %v432, %v428
        %v469 = vpack.c.b16 %v433, %v429
        %v470 = vpack.c.b16 %v434, %v430
        %v471 = vpack.c.b16 %v439, %v435
        %v472 = vpack.c.b16 %v440, %v436
        %v473 = vpack.c.b16 %v441, %v437
        %v474 = vpack.c.b16 %v442, %v438
        %507 = vmatprep.subr.bf16.mxu0 %v444
        %508 = vmatpush1.bf16.msra.mxu0 %v443
        %509 = vmatprep.subr.bf16.mxu0 %v448
        %510 = vmatpush1.bf16.msra.mxu0 %v447
        %511 = vmatprep.subr.bf16.mxu0 %v452
        %512 = vmatpush1.bf16.msra.mxu0 %v451
        %513 = vmatprep.subr.bf16.mxu0 %v456
        %514 = vmatpush1.bf16.msra.mxu0 %v455
        %515 = vmatprep.subr.bf16.mxu0 %v460
        %516 = vmatpush1.bf16.msra.mxu0 %v459
        %517 = vmatprep.subr.bf16.mxu0 %v464
        %518 = vmatpush1.bf16.msra.mxu0 %v463
        %519 = vmatprep.subr.bf16.mxu0 %v468
        %520 = vmatpush1.bf16.msra.mxu0 %v467
        %521 = vmatprep.subr.bf16.mxu0 %v472
        %522 = vmatpush1.bf16.msra.mxu0 %v471
        %523 = vmatprep.subr.bf16.mxu0 0
        %524 = vmatpush1.bf16.msra.mxu0 0
        %525 = vmatprep.subr.bf16.mxu0 0
        %526 = vmatpush1.bf16.msra.mxu0 0
        %527 = vmatprep.subr.bf16.mxu0 0
        %528 = vmatpush1.bf16.msra.mxu0 0
        %529 = vmatprep.subr.bf16.mxu0 0
        %530 = vmatpush1.bf16.msra.mxu0 0
        %531 = vmatprep.subr.bf16.mxu0 0
        %532 = vmatpush1.bf16.msra.mxu0 0
        %533 = vmatprep.subr.bf16.mxu0 0
        %534 = vmatpush1.bf16.msra.mxu0 0
        %535 = vmatprep.subr.bf16.mxu0 0
        %536 = vmatpush1.bf16.msra.mxu0 0
        %537 = vmatprep.subr.bf16.mxu0 0
        %538 = vmatpush1.bf16.msra.mxu0 0
        %539 = vmatprep.mubr.bf16.mxu0 0
        %540 = vmatmul.mubr.bf16.gmra.mrb[0].mxu0 %v345
        %v541 = vpop.f32.mrb[0].mxu0
        %v542 = vadd.f32 %v324, %v541
        %v543 = vpop.f32.mrb[0].mxu0
        %v544 = vadd.f32 %v328, %v543
        %v545 = vpop.f32.mrb[0].mxu0
        %v546 = vadd.f32 %v324, %v545
        %v547 = vpop.f32.mrb[0].mxu0
        %v548 = vadd.f32 %v328, %v547
        %549 = vdwg.mxu0
        %550 = vmatprep.subr.bf16.mxu0 %v446
        %551 = vmatpush1.bf16.msra.mxu0 %v445
        %552 = vmatprep.subr.bf16.mxu0 %v450
        %553 = vmatpush1.bf16.msra.mxu0 %v449
        %554 = vmatprep.subr.bf16.mxu0 %v454
        %555 = vmatpush1.bf16.msra.mxu0 %v453
        %556 = vmatprep.subr.bf16.mxu0 %v458
        %557 = vmatpush1.bf16.msra.mxu0 %v457
        %558 = vmatprep.subr.bf16.mxu0 %v462
        %559 = vmatpush1.bf16.msra.mxu0 %v461
        %560 = vmatprep.subr.bf16.mxu0 %v466
        %561 = vmatpush1.bf16.msra.mxu0 %v465
        %562 = vmatprep.subr.bf16.mxu0 %v470
        %563 = vmatpush1.bf16.msra.mxu0 %v469
        %564 = vmatprep.subr.bf16.mxu0 %v474
        %565 = vmatpush1.bf16.msra.mxu0 %v473
        %566 = vmatprep.subr.bf16.mxu0 0
        %567 = vmatpush1.bf16.msra.mxu0 0
        %568 = vmatprep.subr.bf16.mxu0 0
        %569 = vmatpush1.bf16.msra.mxu0 0
        %570 = vmatprep.subr.bf16.mxu0 0
        %571 = vmatpush1.bf16.msra.mxu0 0
        %572 = vmatprep.subr.bf16.mxu0 0
        %573 = vmatpush1.bf16.msra.mxu0 0
        %574 = vmatprep.subr.bf16.mxu0 0
        %575 = vmatpush1.bf16.msra.mxu0 0
        %576 = vmatprep.subr.bf16.mxu0 0
        %577 = vmatpush1.bf16.msra.mxu0 0
        %578 = vmatprep.subr.bf16.mxu0 0
        %579 = vmatpush1.bf16.msra.mxu0 0
        %580 = vmatprep.subr.bf16.mxu0 0
        %581 = vmatpush1.bf16.msra.mxu0 0
        %582 = vmatprep.mubr.bf16.mxu0 0
        %583 = vmatmul.mubr.bf16.gmra.mrb[0].mxu0 %v345
        %v584 = vpop.f32.mrb[0].mxu0
        %v585 = vadd.f32 %v332, %v584
        %v586 = vpop.f32.mrb[0].mxu0
        %v587 = vadd.f32 %v336, %v586
        %v588 = vpop.f32.mrb[0].mxu0
        %v589 = vadd.f32 %v332, %v588
        %v590 = vpop.f32.mrb[0].mxu0
        %v591 = vadd.f32 %v336, %v590
        %592 = vdwg.mxu0
        %593 = vst [vmem:[%s261] sm:$0xff] %v542
        %594 = vst [vmem:[%s261 + $0x8] sm:$0xff] %v544
        %595 = vst [vmem:[%s261 + $0x10] sm:$0xff] %v585
        %596 = vst [vmem:[%s261 + $0x18] sm:$0xff] %v587
        %597 = vst [vmem:[%s261 + $0x20] sm:$0xff] %v546
        %598 = vst [vmem:[%s261 + $0x28] sm:$0xff] %v548
        %599 = vst [vmem:[%s261 + $0x30] sm:$0xff] %v589
        %600 = vst [vmem:[%s261 + $0x38] sm:$0xff] %v591
        %s601 = smul.u32 %s26, 16
        %v602 = vlaneseq
        %v603 = vshrl.u32 %v602, 7
        %v604 = vadd.s32 %v603, 8
        %v605 = vstv %s601
        %v606 = vadd.s32 %v605, %v603
        %v607 = vadd.s32 %v605, %v604
        %vm608 = vcmp.lt.s32.totalorder %v606, 2
        %vm609 = vcmp.lt.s32.totalorder %v607, 2
        %v610 = vsel %vm608, 1, 0
        %v611 = vsel %vm609, 1, 0
        %v612 = vcvt.s32.f32 %v610
        %v613 = vcvt.s32.f32 %v611
        %v614 = vmul.f32 %v542, %v612
        %v615 = vmul.f32 %v544, %v612
        %v616 = vmul.f32 %v585, %v612
        %v617 = vmul.f32 %v587, %v612
        %v618 = vmul.f32 %v546, %v613
        %v619 = vmul.f32 %v548, %v613
        %v620 = vmul.f32 %v589, %v613
        %v621 = vmul.f32 %v591, %v613
        %v622 = vadd.f32 %v614, %v618
        %v623 = vrot.slane %v622, 4
        %v624 = vadd.f32 %v622, %v623
        %v625 = vrot.slane %v624, 2
        %v626 = vadd.f32 %v624, %v625
        %v627 = vrot.slane %v626, 1
        %v628 = vadd.f32 %v626, %v627
        %v629 = vadd.f32 %v615, %v619
        %v630 = vrot.slane %v629, 4
        %v631 = vadd.f32 %v629, %v630
        %v632 = vrot.slane %v631, 2
        %v633 = vadd.f32 %v631, %v632
        %v634 = vrot.slane %v633, 1
        %v635 = vadd.f32 %v633, %v634
        %v636 = vadd.f32 %v616, %v620
        %v637 = vrot.slane %v636, 4
        %v638 = vadd.f32 %v636, %v637
        %v639 = vrot.slane %v638, 2
        %v640 = vadd.f32 %v638, %v639
        %v641 = vrot.slane %v640, 1
        %v642 = vadd.f32 %v640, %v641
        %v643 = vadd.f32 %v617, %v621
        %v644 = vrot.slane %v643, 4
        %v645 = vadd.f32 %v643, %v644
        %v646 = vrot.slane %v645, 2
        %v647 = vadd.f32 %v645, %v646
        %v648 = vrot.slane %v647, 1
        %v649 = vadd.f32 %v647, %v648
        %v650 = vmul.f32 %v614, %v614
        %v651 = vmul.f32 %v615, %v615
        %v652 = vmul.f32 %v616, %v616
        %v653 = vmul.f32 %v617, %v617
        %v654 = vmul.f32 %v618, %v618
        %v655 = vmul.f32 %v619, %v619
        %v656 = vmul.f32 %v620, %v620
        %v657 = vmul.f32 %v621, %v621
        %v658 = vadd.f32 %v650, %v654
        %v659 = vrot.slane %v658, 4
        %v660 = vadd.f32 %v658, %v659
        %v661 = vrot.slane %v660, 2
        %v662 = vadd.f32 %v660, %v661
        %v663 = vrot.slane %v662, 1
        %v664 = vadd.f32 %v662, %v663
        %v665 = vadd.f32 %v651, %v655
        %v666 = vrot.slane %v665, 4
        %v667 = vadd.f32 %v665, %v666
        %v668 = vrot.slane %v667, 2
        %v669 = vadd.f32 %v667, %v668
        %v670 = vrot.slane %v669, 1
        %v671 = vadd.f32 %v669, %v670
        %v672 = vadd.f32 %v652, %v656
        %v673 = vrot.slane %v672, 4
        %v674 = vadd.f32 %v672, %v673
        %v675 = vrot.slane %v674, 2
        %v676 = vadd.f32 %v674, %v675
        %v677 = vrot.slane %v676, 1
        %v678 = vadd.f32 %v676, %v677
        %v679 = vadd.f32 %v653, %v657
        %v680 = vrot.slane %v679, 4
        %v681 = vadd.f32 %v679, %v680
        %v682 = vrot.slane %v681, 2
        %v683 = vadd.f32 %v681, %v682
        %v684 = vrot.slane %v683, 1
        %v685 = vadd.f32 %v683, %v684
        %vm686 = vcmp.eq.s32.totalorder %v603, 0
        %v687 = vsel %vm686, 1, 0
        %vm688 = vcmp.eq.s32.totalorder %v687, 1
        %v689 = vsel %vm688, %v628, 0.0
        %v690 = vsel %vm688, %v635, 0.0
        %v691 = vsel %vm688, %v642, 0.0
        %v692 = vsel %vm688, %v649, 0.0
        %vm693 = vcmp.eq.s32.totalorder %v603, 1
        %v694 = vsel %vm693, 1, 0
        %vm695 = vcmp.eq.s32.totalorder %v694, 1
        %v696 = vsel %vm695, %v664, 0.0
        %v697 = vsel %vm695, %v671, 0.0
        %v698 = vsel %vm695, %v678, 0.0
        %v699 = vsel %vm695, %v685, 0.0
        %v700 = vadd.f32 %v689, %v696
        %v701 = vadd.f32 %v690, %v697
        %v702 = vadd.f32 %v691, %v698
        %v703 = vadd.f32 %v692, %v699
        %704 = vst [vmem:[%s268] sm:$0xff] %v700
        %705 = vst [vmem:[%s268 + $0x8] sm:$0xff] %v701
        %706 = vst [vmem:[%s268 + $0x10] sm:$0xff] %v702
        %707 = vst [vmem:[%s268 + $0x18] sm:$0xff] %v703
        %s708 = sand.u32 %s122, 1
        %s709 = sand.u32 %s122, 1
        %s710 = smul.addr %s709, 64
        %s711 = scalar_lea.vmem [#allocation5], %s710
        %s712 = sand.u32 %s150, 1
        %s713 = scalar_lea.sflag [#allocation4], %s712
        %s714 = sand.u32 %s150, 1
        %s715 = smul.addr %s714, 32
        %s716 = scalar_lea.vmem [#allocation6], %s715
        // Predicated region
        $region37: #{generator_forward.14} parent=31 // pred_check
          %p717 = pneg %p132
        $region38: #{generator_forward.14} parent=31 // pred_check_branch
          %719 = sbr.rel (%p717) target = $region40
        $region39: #{generator_forward.14} parent=31 // pred_region
          %s720 = smul.u32 2, %s26
          %s721 = smul.u32 4, %s27
          %s722 = smul.addr %s720, 16
          %s723 = sadd.s32 %s721, %s722
          %s724 = smul.addr %s723, 8
          %s725 = scalar_lea.vmem %s3, %s724
          // Predicated region
          $region41: #{generator_forward.14} parent=39 // pred_check
            _
          $region42: #{generator_forward.14} parent=39 // pred_check_branch
            %727 = sbr.rel (0) target = $region44
          $region43: #{generator_forward.14} parent=39 // pred_region
            // Predicated region
            $region45: #{generator_forward.14} parent=43 // pred_check
              _
            $region46: #{generator_forward.14} parent=43 // pred_check_branch
              %729 = sbr.rel (0) target = $region48
            $region47: #{generator_forward.14} parent=43 // pred_region
              loop: start=0, step=1, limit=1
              $region49: #{generator_forward.14} parent=47 // loop_pre_header
                _
              $region50: #{generator_forward.14} parent=47 // loop_header
                %s731 = sphi 0, %s735
                %p732 = scmp.ge.s32.totalorder %s731, 1
                %s736 = sphi %s711, %s711
                %s737 = sphi %s725, %s725
              $region51: #{generator_forward.14} parent=47 // loop_header_branch
                %734 = sbr.rel (%p732) target = $region55
              $region52: #{generator_forward.14} parent=47 // loop_body
                %v738 = vld [vmem:[%s736] sm:$0xff]
                %739 = vst [vmem:[%s737] sm:$0xff] %v738
                %v740 = vld [vmem:[%s736 + $0x8] sm:$0xff]
                %741 = vst [vmem:[%s737 + $0x8] sm:$0xff] %v740
                %v742 = vld [vmem:[%s736 + $0x10] sm:$0xff]
                %743 = vst [vmem:[%s737 + $0x10] sm:$0xff] %v742
                %v744 = vld [vmem:[%s736 + $0x18] sm:$0xff]
                %745 = vst [vmem:[%s737 + $0x18] sm:$0xff] %v744
                %v746 = vld [vmem:[%s736 + $0x20] sm:$0xff]
                %747 = vst [vmem:[%s737 + $0x80] sm:$0xff] %v746
                %v748 = vld [vmem:[%s736 + $0x28] sm:$0xff]
                %749 = vst [vmem:[%s737 + $0x88] sm:$0xff] %v748
                %v750 = vld [vmem:[%s736 + $0x30] sm:$0xff]
                %751 = vst [vmem:[%s737 + $0x90] sm:$0xff] %v750
                %v752 = vld [vmem:[%s736 + $0x38] sm:$0xff]
                %753 = vst [vmem:[%s737 + $0x98] sm:$0xff] %v752
              $region53: #{generator_forward.14} parent=47 // loop_footer
                %s735 = sadd.s32 1, %s731
              $region54: #{generator_forward.14} parent=47 // loop_footer_branch
                %730 = sbr.rel target = $region50
              $region55: #{generator_forward.14} parent=47 // loop_exit
                _
            $region48: #{generator_forward.14} parent=43 // pred_fallthru
              _
            // Predicated region
            $region56: #{generator_forward.14} parent=43 // pred_check
              _
            $region57: #{generator_forward.14} parent=43 // pred_check_branch
              %755 = sbr.rel target = $region59
            $region58: #{generator_forward.14} parent=43 // pred_region
              _
            $region59: #{generator_forward.14} parent=43 // pred_fallthru
              _
          $region44: #{generator_forward.14} parent=39 // pred_fallthru
            _
          %756 = vnop
        $region40: #{generator_forward.14} parent=31 // pred_fallthru
          _
        // Predicated region
        $region60: #{generator_forward.14} parent=31 // pred_check
          %p757 = pneg %p160
        $region61: #{generator_forward.14} parent=31 // pred_check_branch
          %759 = sbr.rel (%p757) target = $region63
        $region62: #{generator_forward.14} parent=31 // pred_region
          %s760 = smul.u32 4, %s27
          %s762 = ssub.s32 512, 512
          %763 = vsyncadd %s713, %s762
          %s764 = smul.addr %s26, 16
          %s765 = sadd.s32 %s760, %s764
          %s766 = smul.addr %s765, 128
          %s767 = scalar_lea.hbm %s4, %s766
          %s769 = sshll.u32 %s716, 4
          %s770 = int_to_ptr.vmem [resolvable:$true] %s769
          %772 = dma.vmem_to_hbm [thread:$0]  %s770, 512, %s767, %s713
        $region63: #{generator_forward.14} parent=31 // pred_fallthru
          _
      $region32: #{generator_forward.14} parent=5 // pred_fallthru
        _
      %p773 = scmp.le.s32.totalorder 2, %s17
      // Predicated region
      $region64: #{generator_forward.14} parent=5 // pred_check
        %p774 = pneg %p773
      $region65: #{generator_forward.14} parent=5 // pred_check_branch
        %776 = sbr.rel (%p774) target = $region67
      $region66: #{generator_forward.14} parent=5 // pred_region
        %s777 = ssub.s32 %s17, 2
        // Predicated region
        $region68: #{generator_forward.14} parent=66 // pred_check
          %p778 = pneg %p138
        $region69: #{generator_forward.14} parent=66 // pred_check_branch
          %780 = sbr.rel (%p778) target = $region71
        $region70: #{generator_forward.14} parent=66 // pred_region
          %s781 = sand.u32 %s123, 1
          %s782 = sand.u32 %s123, 1
          %s783 = smul.addr %s782, 64
          %s784 = scalar_lea.vmem [#allocation5], %s783
        $region71: #{generator_forward.14} parent=66 // pred_fallthru
          _
        // Predicated region
        $region72: #{generator_forward.14} parent=66 // pred_check
          %p785 = pneg %p166
        $region73: #{generator_forward.14} parent=66 // pred_check_branch
          %787 = sbr.rel (%p785) target = $region75
        $region74: #{generator_forward.14} parent=66 // pred_region
          %s788 = sand.u32 %s151, 1
          %s789 = scalar_lea.sflag [#allocation4], %s788
          %s790 = sand.u32 %s151, 1
          %s791 = smul.addr %s790, 32
          %s792 = scalar_lea.vmem [#allocation6], %s791
          %793 = dma.done %s789, 512
        $region75: #{generator_forward.14} parent=66 // pred_fallthru
          _
      $region67: #{generator_forward.14} parent=5 // pred_fallthru
        _
    $region6: #{generator_forward.14} parent=1 // loop_footer
      %s21 = sadd.s32 1, %s17
    $region7: #{generator_forward.14} parent=1 // loop_footer_branch
      %16 = sbr.rel target = $region3
    $region8: #{generator_forward.14} parent=1 // loop_exit
      _
    %794 = vsyncpa [#allocation3], 1
    %s795 = scalar_lea.sflag [#allocation3], 1
    %796 = vsyncpa %s795, 1
    %797 = vsyncpa [#allocation4], 1
    %s798 = scalar_lea.sflag [#allocation4], 1
    %799 = vsyncpa %s798, 1

// kernel: generator_forward.15
$region0: #{generator_forward.15}
  #allocation0 [shape = 'u32[]', space=smem, size = 0x4, offset = 0x4, fixed_abs, tag = 'smem constant byte address 0x4 - core index']
  #allocation1 [shape = 'u32[144,128]{1,0:T(1,128)}', space=vmem, size = 0x12000, scoped, tag = 'internal scratch']
  %s0 = inlined_call_operand.vmem [shape: bf16[512,128], index: 0, kind: input, shape index: {}]
  %s1 = inlined_call_operand.vmem [shape: bf16[128,128], index: 1, kind: input, shape index: {}]
  %s2 = inlined_call_operand.vmem [shape: f32[1,128], index: 2, kind: input, shape index: {}]
  %s3 = inlined_call_operand.vmem [shape: f32[512,128], index: 3, kind: output, shape index: {0}]
  %s4 = inlined_call_operand.vmem [shape: f32[32,128], index: 4, kind: output, shape index: {1}]
  %5 = xla_tuple %s3, %s4
  %s6 = sld [smem:[#allocation0]]
  $region53: #{generator_forward.15} parent=0
    _
  %s8 = ssub.s32 1, %s6
  %s9 = scalar_select 0, %s8, %s6
  loop: start=0, step=1, limit=6
  $region2: #{generator_forward.15} parent=0 // loop_pre_header
    _
  $region3: #{generator_forward.15} parent=0 // loop_header
    %s11 = sphi 0, %s15
    %p12 = scmp.ge.s32.totalorder %s11, 6
    %s18 = sphi 0, %s30
    %s19 = sphi 0, %s26
    %s20 = sphi 0, %s18
    %s21 = sphi 0, %s19
    %s22 = sphi 0, %s20
    %s23 = sphi 0, %s21
    %s33 = sphi 0, %s35
    %s36 = sphi 0, %s33
    %s37 = sphi 0, %s36
    %s53 = sphi 0, %s37
    %s59 = sphi 0, %s61
    %s62 = sphi 0, %s59
    %s63 = sphi 0, %s62
    %s79 = sphi 0, %s63
    %s85 = sphi 0, %s87
    %s88 = sphi 0, %s85
    %s89 = sphi 0, %s88
    %s105 = sphi 0, %s89
    %s113 = sphi 0, %s115
    %s116 = sphi 0, %s113
    %s117 = sphi 0, %s116
    %s133 = sphi 0, %s117
    %s141 = sphi 0, %s143
    %s144 = sphi 0, %s141
    %s145 = sphi 0, %s144
    %s161 = sphi 0, %s145
  $region4: #{generator_forward.15} parent=0 // loop_header_branch
    %14 = sbr.rel (%p12) target = $region8
  $region5: #{generator_forward.15} parent=0 // loop_body
    %s16 = ssub.s32 %s11, 1
    %s17 = ssub.s32 %s11, 2
    %s24 = sadd.s32 1, %s19
    %p25 = scmp.ge.s32.totalorder %s24, 1
    %s26 = scalar_select %p25, 0, %s24
    %s27 = sadd.s32 1, %s18
    %s28 = scalar_select %p25, %s27, %s18
    %p29 = scmp.ge.s32.totalorder %s28, 4
    %s30 = scalar_select %p29, 0, %s28
    %s31 = ssub.s32 %s18, %s30
    %p32 = scmp.eq.s32.totalorder %s31, 0
    %s34 = sadd.s32 %s33, 1
    %s35 = scalar_select %p32, %s33, %s34
    %p38 = pneg %p32
    %p39 = scmp.eq.s32.totalorder %s11, 3
    %p40 = por %p38, %p39
    %p41 = scmp.ne.s32.totalorder %s33, %s36
    %p42 = scmp.eq.s32.totalorder %s11, 0
    %p43 = por %p41, %p42
    %p44 = scmp.ne.s32.totalorder %s33, %s36
    %p45 = scmp.eq.s32.totalorder %s16, 3
    %p46 = por %p44, %p45
    %p47 = scmp.ne.s32.totalorder %s36, %s37
    %p48 = scmp.eq.s32.totalorder %s16, 0
    %p49 = por %p47, %p48
    %p50 = scmp.ne.s32.totalorder %s36, %s37
    %p51 = scmp.eq.s32.totalorder %s17, 3
    %p52 = por %p50, %p51
    %p54 = scmp.ne.s32.totalorder %s37, %s53
    %p55 = scmp.eq.s32.totalorder %s17, 0
    %p56 = por %p54, %p55
    %s57 = ssub.s32 %s19, %s26
    %p58 = scmp.eq.s32.totalorder %s57, 0
    %s60 = sadd.s32 %s59, 1
    %s61 = scalar_select %p58, %s59, %s60
    %p64 = pneg %p58
    %p65 = scmp.eq.s32.totalorder %s11, 3
    %p66 = por %p64, %p65
    %p67 = scmp.ne.s32.totalorder %s59, %s62
    %p68 = scmp.eq.s32.totalorder %s11, 0
    %p69 = por %p67, %p68
    %p70 = scmp.ne.s32.totalorder %s59, %s62
    %p71 = scmp.eq.s32.totalorder %s16, 3
    %p72 = por %p70, %p71
    %p73 = scmp.ne.s32.totalorder %s62, %s63
    %p74 = scmp.eq.s32.totalorder %s16, 0
    %p75 = por %p73, %p74
    %p76 = scmp.ne.s32.totalorder %s62, %s63
    %p77 = scmp.eq.s32.totalorder %s17, 3
    %p78 = por %p76, %p77
    %p80 = scmp.ne.s32.totalorder %s63, %s79
    %p81 = scmp.eq.s32.totalorder %s17, 0
    %p82 = por %p80, %p81
    %s83 = ssub.s32 %s19, %s26
    %p84 = scmp.eq.s32.totalorder %s83, 0
    %s86 = sadd.s32 %s85, 1
    %s87 = scalar_select %p84, %s85, %s86
    %p90 = pneg %p84
    %p91 = scmp.eq.s32.totalorder %s11, 3
    %p92 = por %p90, %p91
    %p93 = scmp.ne.s32.totalorder %s85, %s88
    %p94 = scmp.eq.s32.totalorder %s11, 0
    %p95 = por %p93, %p94
    %p96 = scmp.ne.s32.totalorder %s85, %s88
    %p97 = scmp.eq.s32.totalorder %s16, 3
    %p98 = por %p96, %p97
    %p99 = scmp.ne.s32.totalorder %s88, %s89
    %p100 = scmp.eq.s32.totalorder %s16, 0
    %p101 = por %p99, %p100
    %p102 = scmp.ne.s32.totalorder %s88, %s89
    %p103 = scmp.eq.s32.totalorder %s17, 3
    %p104 = por %p102, %p103
    %p106 = scmp.ne.s32.totalorder %s89, %s105
    %p107 = scmp.eq.s32.totalorder %s17, 0
    %p108 = por %p106, %p107
    %s109 = ssub.s32 %s18, %s30
    %s110 = ssub.s32 %s19, %s26
    %s111 = sor.u32 %s109, %s110
    %p112 = scmp.eq.s32.totalorder %s111, 0
    %s114 = sadd.s32 %s113, 1
    %s115 = scalar_select %p112, %s113, %s114
    %p118 = pneg %p112
    %p119 = scmp.eq.s32.totalorder %s11, 3
    %p120 = por %p118, %p119
    %p121 = scmp.ne.s32.totalorder %s113, %s116
    %p122 = scmp.eq.s32.totalorder %s11, 0
    %p123 = por %p121, %p122
    %p124 = scmp.ne.s32.totalorder %s113, %s116
    %p125 = scmp.eq.s32.totalorder %s16, 3
    %p126 = por %p124, %p125
    %p127 = scmp.ne.s32.totalorder %s116, %s117
    %p128 = scmp.eq.s32.totalorder %s16, 0
    %p129 = por %p127, %p128
    %p130 = scmp.ne.s32.totalorder %s116, %s117
    %p131 = scmp.eq.s32.totalorder %s17, 3
    %p132 = por %p130, %p131
    %p134 = scmp.ne.s32.totalorder %s117, %s133
    %p135 = scmp.eq.s32.totalorder %s17, 0
    %p136 = por %p134, %p135
    %s137 = ssub.s32 %s18, %s30
    %s138 = ssub.s32 %s19, %s26
    %s139 = sor.u32 %s137, %s138
    %p140 = scmp.eq.s32.totalorder %s139, 0
    %s142 = sadd.s32 %s141, 1
    %s143 = scalar_select %p140, %s141, %s142
    %p146 = pneg %p140
    %p147 = scmp.eq.s32.totalorder %s11, 3
    %p148 = por %p146, %p147
    %p149 = scmp.ne.s32.totalorder %s141, %s144
    %p150 = scmp.eq.s32.totalorder %s11, 0
    %p151 = por %p149, %p150
    %p152 = scmp.ne.s32.totalorder %s141, %s144
    %p153 = scmp.eq.s32.totalorder %s16, 3
    %p154 = por %p152, %p153
    %p155 = scmp.ne.s32.totalorder %s144, %s145
    %p156 = scmp.eq.s32.totalorder %s16, 0
    %p157 = por %p155, %p156
    %p158 = scmp.ne.s32.totalorder %s144, %s145
    %p159 = scmp.eq.s32.totalorder %s17, 3
    %p160 = por %p158, %p159
    %p162 = scmp.ne.s32.totalorder %s145, %s161
    %p163 = scmp.eq.s32.totalorder %s17, 0
    %p164 = por %p162, %p163
    %p165 = scmp.le.s32.totalorder 1, %s11
    %p166 = scmp.lt.s32.totalorder %s11, 5
    %p167 = pnand %p165, %p166
    %p168 = pneg %p167
    // Predicated region
    $region9: #{generator_forward.15} parent=5 // pred_check
      _
    $region10: #{generator_forward.15} parent=5 // pred_check_branch
      %170 = sbr.rel (%p167) target = $region12
    $region11: #{generator_forward.15} parent=5 // pred_region
      %s171 = ssub.s32 %s11, 1
      // Predicated region
      $region13: #{generator_forward.15} parent=11 // pred_check
        %p172 = pneg %p75
      $region14: #{generator_forward.15} parent=11 // pred_check_branch
        %174 = sbr.rel (%p172) target = $region16
      $region15: #{generator_forward.15} parent=11 // pred_region
        %p175 = scmp.lt.s32.totalorder %s21, 0
        %s176 = scalar_select %p175, %s21, 0
        %s177 = smul.addr %s176, 4
        %s178 = scalar_lea.vmem %s1, %s177
      $region16: #{generator_forward.15} parent=11 // pred_fallthru
        _
      // Predicated region
      $region17: #{generator_forward.15} parent=11 // pred_check
        %p179 = pneg %p101
      $region18: #{generator_forward.15} parent=11 // pred_check_branch
        %181 = sbr.rel (%p179) target = $region20
      $region19: #{generator_forward.15} parent=11 // pred_region
        %p182 = scmp.lt.s32.totalorder %s21, 0
        %s183 = scalar_select %p182, %s21, 0
        %s184 = scalar_lea.vmem %s2, %s183
      $region20: #{generator_forward.15} parent=11 // pred_fallthru
        _
    $region12: #{generator_forward.15} parent=5 // pred_fallthru
      _
    %p185 = scmp.lt.s32.totalorder %s11, 4
    // Predicated region
    $region21: #{generator_forward.15} parent=5 // pred_check
      %p186 = pneg %p185
    $region22: #{generator_forward.15} parent=5 // pred_check_branch
      %188 = sbr.rel (%p186) target = $region24
    $region23: #{generator_forward.15} parent=5 // pred_region
      // Predicated region
      $region25: #{generator_forward.15} parent=23 // pred_check
        %p189 = pneg %p43
      $region26: #{generator_forward.15} parent=23 // pred_check_branch
        %191 = sbr.rel (%p189) target = $region28
      $region27: #{generator_forward.15} parent=23 // pred_region
        %s192 = smul.u32 16, %s18
        %p193 = scmp.lt.s32.totalorder %s192, 63
        %s194 = scalar_select %p193, %s192, 63
        %s195 = smul.addr %s194, 4
        %s196 = scalar_lea.vmem %s0, %s195
        %s197 = smul.u32 16, %s18
      $region28: #{generator_forward.15} parent=23 // pred_fallthru
        _
    $region24: #{generator_forward.15} parent=5 // pred_fallthru
      _
    %p198 = scmp.le.s32.totalorder 1, %s11
    %p199 = scmp.lt.s32.totalorder %s11, 5
    %p200 = pnand %p198, %p199
    %p201 = pneg %p200
    // Predicated region
    $region29: #{generator_forward.15} parent=5 // pred_check
      _
    $region30: #{generator_forward.15} parent=5 // pred_check_branch
      %203 = sbr.rel (%p200) target = $region32
    $region31: #{generator_forward.15} parent=5 // pred_region
      %s204 = ssub.s32 %s11, 1
      %s205 = smul.u32 16, %s20
      %p206 = scmp.lt.s32.totalorder %s205, 63
      %s207 = scalar_select %p206, %s205, 63
      %s208 = smul.addr %s207, 4
      %s209 = scalar_lea.vmem %s0, %s208
      %p210 = pneg %p49
      %p211 = pneg %p46
      %p212 = scmp.lt.s32.totalorder %s21, 0
      %s213 = scalar_select %p212, %s21, 0
      %s214 = smul.addr %s213, 4
      %s215 = scalar_lea.vmem %s1, %s214
      %p216 = pneg %p75
      %p217 = pneg %p72
      %p218 = scmp.lt.s32.totalorder %s21, 0
      %s219 = scalar_select %p218, %s21, 0
      %s220 = scalar_lea.vmem %s2, %s219
      %p221 = pneg %p101
      %p222 = pneg %p98
      %p223 = pneg %p129
      %p224 = pneg %p126
      %s225 = smul.u32 16, %s20
      %p226 = scmp.lt.s32.totalorder %s225, 63
      %s227 = scalar_select %p226, %s225, 63
      %p228 = scmp.lt.s32.totalorder %s21, 0
      %s229 = scalar_select %p228, %s21, 0
      %s230 = sadd.s32 %s229, %s227
      %s231 = smul.addr %s230, 8
      %s232 = scalar_lea.vmem %s3, %s231
      %p233 = pneg %p157
      %p234 = pneg %p154
      %p235 = scmp.lt.s32.totalorder %s20, 3
      %s236 = scalar_select %p235, %s20, 3
      %p237 = scmp.lt.s32.totalorder %s21, 0
      %s238 = scalar_select %p237, %s21, 0
      %s239 = sadd.s32 %s238, %s236
      %s240 = smul.addr %s239, 8
      %s241 = scalar_lea.vmem %s4, %s240
      %s242 = smul.u32 16, %s20
      %p243 = scmp.lt.s32.totalorder %s242, 63
      %s244 = scalar_select %p243, %s242, 63
      %s245 = smul.addr %s244, 4
      %s246 = scalar_lea.vmem %s0, %s245
      %s247 = smul.u32 16, %s20
      %p248 = scmp.lt.s32.totalorder %s21, 0
      %s249 = scalar_select %p248, %s21, 0
      %s250 = smul.addr %s249, 4
      %s251 = scalar_lea.vmem %s1, %s250
      %p252 = scmp.lt.s32.totalorder %s21, 0
      %s253 = scalar_select %p252, %s21, 0
      %s254 = scalar_lea.vmem %s2, %s253
      %s255 = smul.u32 16, %s20
      %p256 = scmp.lt.s32.totalorder %s255, 63
      %s257 = scalar_select %p256, %s255, 63
      %p258 = scmp.lt.s32.totalorder %s21, 0
      %s259 = scalar_select %p258, %s21, 0
      %s260 = sadd.s32 %s259, %s257
      %s261 = smul.addr %s260, 8
      %s262 = scalar_lea.vmem %s3, %s261
      %s263 = smul.u32 16, %s20
      %p264 = scmp.lt.s32.totalorder %s20, 3
      %s265 = scalar_select %p264, %s20, 3
      %p266 = scmp.lt.s32.totalorder %s21, 0
      %s267 = scalar_select %p266, %s21, 0
      %s268 = sadd.s32 %s267, %s265
      %s269 = smul.addr %s268, 8
      %s270 = scalar_lea.vmem %s4, %s269
      %v272 = vld [vmem:[%s246] sm:$0xf]
      %v273 = vld [vmem:[%s246 + $0x4] sm:$0xf]
      %v274 = vld [vmem:[%s246 + $0x8] sm:$0xf]
      %v275 = vld [vmem:[%s246 + $0xc] sm:$0xf]
      %v276 = vld [vmem:[%s246 + $0x10] sm:$0xf]
      %v277 = vld [vmem:[%s246 + $0x14] sm:$0xf]
      %v278 = vld [vmem:[%s246 + $0x18] sm:$0xf]
      %v279 = vld [vmem:[%s246 + $0x1c] sm:$0xf]
      %v280 = vld [vmem:[%s246 + $0x20] sm:$0xf]
      %v281 = vld [vmem:[%s246 + $0x24] sm:$0xf]
      %v282 = vld [vmem:[%s246 + $0x28] sm:$0xf]
      %v283 = vld [vmem:[%s246 + $0x2c] sm:$0xf]
      %v284 = vld [vmem:[%s246 + $0x30] sm:$0xf]
      %v285 = vld [vmem:[%s246 + $0x34] sm:$0xf]
      %v286 = vld [vmem:[%s246 + $0x38] sm:$0xf]
      %v287 = vld [vmem:[%s246 + $0x3c] sm:$0xf]
      %v288 = vld [vmem:[%s251] sm:$0xf]
      %v289 = vld [vmem:[%s251 + $0x4] sm:$0xf]
      %v290 = vld [vmem:[%s251 + $0x8] sm:$0xf]
      %v291 = vld [vmem:[%s251 + $0xc] sm:$0xf]
      %v292 = vld [vmem:[%s251 + $0x10] sm:$0xf]
      %v293 = vld [vmem:[%s251 + $0x14] sm:$0xf]
      %v294 = vld [vmem:[%s251 + $0x18] sm:$0xf]
      %v295 = vld [vmem:[%s251 + $0x1c] sm:$0xf]
      %v296 = vld [vmem:[%s251 + $0x20] sm:$0xf]
      %v297 = vld [vmem:[%s251 + $0x24] sm:$0xf]
      %v298 = vld [vmem:[%s251 + $0x28] sm:$0xf]
      %v299 = vld [vmem:[%s251 + $0x2c] sm:$0xf]
      %v300 = vld [vmem:[%s251 + $0x30] sm:$0xf]
      %v301 = vld [vmem:[%s251 + $0x34] sm:$0xf]
      %v302 = vld [vmem:[%s251 + $0x38] sm:$0xf]
      %v303 = vld [vmem:[%s251 + $0x3c] sm:$0xf]
      %v304 = vld [vmem:[%s254] sm:$0x1]
      %v306 = vlaneseq
      %v307 = vshrl.u32 %v306, 7
      %v308 = vsub.s32 0, %v307
      %v309 = vrot.slane %v304, %v308
      %v327 = vunpack.c.l.b16 %v272
      %v328 = vunpack.c.l.b16 %v273
      %v329 = vunpack.c.l.b16 %v274
      %v330 = vunpack.c.l.b16 %v275
      %v331 = vunpack.c.l.b16 %v276
      %v332 = vunpack.c.l.b16 %v277
      %v333 = vunpack.c.l.b16 %v278
      %v334 = vunpack.c.l.b16 %v279
      %v335 = vunpack.c.l.b16 %v280
      %v336 = vunpack.c.l.b16 %v281
      %v337 = vunpack.c.l.b16 %v282
      %v338 = vunpack.c.l.b16 %v283
      %v339 = vunpack.c.l.b16 %v284
      %v340 = vunpack.c.l.b16 %v285
      %v341 = vunpack.c.l.b16 %v286
      %v342 = vunpack.c.l.b16 %v287
      %v343 = vpack.c.b16 %v328, %v327
      %v344 = vpack.c.b16 %v330, %v329
      %v345 = vpack.c.b16 %v332, %v331
      %v346 = vpack.c.b16 %v334, %v333
      %v347 = vpack.c.b16 %v336, %v335
      %v348 = vpack.c.b16 %v338, %v337
      %v349 = vpack.c.b16 %v340, %v339
      %v350 = vpack.c.b16 %v342, %v341
      %v375 = vunpack.c.l.b16 %v288
      %v376 = vunpack.c.l.b16 %v289
      %v377 = vunpack.c.l.b16 %v290
      %v378 = vunpack.c.l.b16 %v291
      %v379 = vunpack.c.l.b16 %v292
      %v380 = vunpack.c.l.b16 %v293
      %v381 = vunpack.c.l.b16 %v294
      %v382 = vunpack.c.l.b16 %v295
      %v383 = vunpack.c.l.b16 %v296
      %v384 = vunpack.c.l.b16 %v297
      %v385 = vunpack.c.l.b16 %v298
      %v386 = vunpack.c.l.b16 %v299
      %v387 = vunpack.c.l.b16 %v300
      %v388 = vunpack.c.l.b16 %v301
      %v389 = vunpack.c.l.b16 %v302
      %v390 = vunpack.c.l.b16 %v303
      %v391 = vpack.c.b16 %v376, %v375
      %v392 = vpack.c.b16 %v378, %v377
      %v393 = vpack.c.b16 %v380, %v379
      %v394 = vpack.c.b16 %v382, %v381
      %v395 = vpack.c.b16 %v384, %v383
      %v396 = vpack.c.b16 %v386, %v385
      %v397 = vpack.c.b16 %v388, %v387
      %v398 = vpack.c.b16 %v390, %v389
      %407 = vmatprep.subr.bf16.mxu0 0
      %408 = vmatpush1.bf16.msra.mxu0 %v391
      %409 = vmatprep.subr.bf16.mxu0 0
      %410 = vmatpush1.bf16.msra.mxu0 %v392
      %411 = vmatprep.subr.bf16.mxu0 0
      %412 = vmatpush1.bf16.msra.mxu0 %v393
      %413 = vmatprep.subr.bf16.mxu0 0
      %414 = vmatpush1.bf16.msra.mxu0 %v394
      %415 = vmatprep.subr.bf16.mxu0 0
      %416 = vmatpush1.bf16.msra.mxu0 %v395
      %417 = vmatprep.subr.bf16.mxu0 0
      %418 = vmatpush1.bf16.msra.mxu0 %v396
      %419 = vmatprep.subr.bf16.mxu0 0
      %420 = vmatpush1.bf16.msra.mxu0 %v397
      %421 = vmatprep.subr.bf16.mxu0 0
      %422 = vmatpush1.bf16.msra.mxu0 %v398
      %423 = vmatprep.subr.bf16.mxu0 0
      %424 = vmatpush1.bf16.msra.mxu0 0
      %425 = vmatprep.subr.bf16.mxu0 0
      %426 = vmatpush1.bf16.msra.mxu0 0
      %427 = vmatprep.subr.bf16.mxu0 0
      %428 = vmatpush1.bf16.msra.mxu0 0
      %429 = vmatprep.subr.bf16.mxu0 0
      %430 = vmatpush1.bf16.msra.mxu0 0
      %431 = vmatprep.subr.bf16.mxu0 0
      %432 = vmatpush1.bf16.msra.mxu0 0
      %433 = vmatprep.subr.bf16.mxu0 0
      %434 = vmatpush1.bf16.msra.mxu0 0
      %435 = vmatprep.subr.bf16.mxu0 0
      %436 = vmatpush1.bf16.msra.mxu0 0
      %437 = vmatprep.subr.bf16.mxu0 0
      %438 = vmatpush1.bf16.msra.mxu0 0
      %439 = vmatprep.mubr.bf16.mxu0 0
      %440 = vmatmul.mubr.bf16.gmra.mrb[0].mxu0 %v343
      %v441 = vpop.f32.mrb[0].mxu0
      %v442 = vadd.f32 %v309, %v441
      %v443 = vpop.f32.mrb[0].mxu0
      %v444 = vpop.f32.mrb[0].mxu0
      %v445 = vadd.f32 %v309, %v444
      %v446 = vpop.f32.mrb[0].mxu0
      %447 = vmatprep.mubr.bf16.mxu0 0
      %448 = vmatmul.mubr.bf16.gmra.mrb[0].mxu0 %v344
      %v449 = vpop.f32.mrb[0].mxu0
      %v450 = vadd.f32 %v309, %v449
      %v451 = vpop.f32.mrb[0].mxu0
      %v452 = vpop.f32.mrb[0].mxu0
      %v453 = vadd.f32 %v309, %v452
      %v454 = vpop.f32.mrb[0].mxu0
      %455 = vmatprep.mubr.bf16.mxu0 0
      %456 = vmatmul.mubr.bf16.gmra.mrb[0].mxu0 %v345
      %v457 = vpop.f32.mrb[0].mxu0
      %v458 = vadd.f32 %v309, %v457
      %v459 = vpop.f32.mrb[0].mxu0
      %v460 = vpop.f32.mrb[0].mxu0
      %v461 = vadd.f32 %v309, %v460
      %v462 = vpop.f32.mrb[0].mxu0
      %463 = vmatprep.mubr.bf16.mxu0 0
      %464 = vmatmul.mubr.bf16.gmra.mrb[0].mxu0 %v346
      %v465 = vpop.f32.mrb[0].mxu0
      %v466 = vadd.f32 %v309, %v465
      %v467 = vpop.f32.mrb[0].mxu0
      %v468 = vpop.f32.mrb[0].mxu0
      %v469 = vadd.f32 %v309, %v468
      %v470 = vpop.f32.mrb[0].mxu0
      %471 = vmatprep.mubr.bf16.mxu0 0
      %472 = vmatmul.mubr.bf16.gmra.mrb[0].mxu0 %v347
      %v473 = vpop.f32.mrb[0].mxu0
      %v474 = vadd.f32 %v309, %v473
      %v475 = vpop.f32.mrb[0].mxu0
      %v476 = vpop.f32.mrb[0].mxu0
      %v477 = vadd.f32 %v309, %v476
      %v478 = vpop.f32.mrb[0].mxu0
      %479 = vmatprep.mubr.bf16.mxu0 0
      %480 = vmatmul.mubr.bf16.gmra.mrb[0].mxu0 %v348
      %v481 = vpop.f32.mrb[0].mxu0
      %v482 = vadd.f32 %v309, %v481
      %v483 = vpop.f32.mrb[0].mxu0
      %v484 = vpop.f32.mrb[0].mxu0
      %v485 = vadd.f32 %v309, %v484
      %v486 = vpop.f32.mrb[0].mxu0
      %487 = vmatprep.mubr.bf16.mxu0 0
      %488 = vmatmul.mubr.bf16.gmra.mrb[0].mxu0 %v349
      %v489 = vpop.f32.mrb[0].mxu0
      %v490 = vadd.f32 %v309, %v489
      %v491 = vpop.f32.mrb[0].mxu0
      %v492 = vpop.f32.mrb[0].mxu0
      %v493 = vadd.f32 %v309, %v492
      %v494 = vpop.f32.mrb[0].mxu0
      %495 = vmatprep.mubr.bf16.mxu0 0
      %496 = vmatmul.mubr.bf16.gmra.mrb[0].mxu0 %v350
      %v497 = vpop.f32.mrb[0].mxu0
      %v498 = vadd.f32 %v309, %v497
      %v499 = vpop.f32.mrb[0].mxu0
      %v500 = vpop.f32.mrb[0].mxu0
      %v501 = vadd.f32 %v309, %v500
      %v502 = vpop.f32.mrb[0].mxu0
      %503 = vdwg.mxu0
      %504 = vst [vmem:[%s262] sm:$0xff] %v442
      %505 = vst [vmem:[%s262 + $0x8] sm:$0xff] %v445
      %506 = vst [vmem:[%s262 + $0x10] sm:$0xff] %v450
      %507 = vst [vmem:[%s262 + $0x18] sm:$0xff] %v453
      %508 = vst [vmem:[%s262 + $0x20] sm:$0xff] %v458
      %509 = vst [vmem:[%s262 + $0x28] sm:$0xff] %v461
      %510 = vst [vmem:[%s262 + $0x30] sm:$0xff] %v466
      %511 = vst [vmem:[%s262 + $0x38] sm:$0xff] %v469
      %512 = vst [vmem:[%s262 + $0x40] sm:$0xff] %v474
      %513 = vst [vmem:[%s262 + $0x48] sm:$0xff] %v477
      %514 = vst [vmem:[%s262 + $0x50] sm:$0xff] %v482
      %515 = vst [vmem:[%s262 + $0x58] sm:$0xff] %v485
      %516 = vst [vmem:[%s262 + $0x60] sm:$0xff] %v490
      %517 = vst [vmem:[%s262 + $0x68] sm:$0xff] %v493
      %518 = vst [vmem:[%s262 + $0x70] sm:$0xff] %v498
      %519 = vst [vmem:[%s262 + $0x78] sm:$0xff] %v501
      %s520 = smul.u32 %s20, 128
      %v521 = vlaneseq
      %v522 = vshrl.u32 %v521, 7
      %v523 = vadd.s32 %v522, 8
      %v524 = vadd.s32 %v522, 16
      %v525 = vadd.s32 %v522, 24
      %v526 = vadd.s32 %v522, 32
      %v527 = vadd.s32 %v522, 40
      %v528 = vadd.s32 %v522, 48
      %v529 = vadd.s32 %v522, 56
      %v530 = vadd.s32 %v522, 64
      %v531 = vadd.s32 %v522, 72
      %v532 = vadd.s32 %v522, 80
      %v533 = vadd.s32 %v522, 88
      %v534 = vadd.s32 %v522, 96
      %v535 = vadd.s32 %v522, 104
      %v536 = vadd.s32 %v522, 112
      %v537 = vadd.s32 %v522, 120
      %v538 = vstv %s520
      %v539 = vadd.s32 %v538, %v522
      %v540 = vadd.s32 %v538, %v523
      %v541 = vadd.s32 %v538, %v524
      %v542 = vadd.s32 %v538, %v525
      %v543 = vadd.s32 %v538, %v526
      %v544 = vadd.s32 %v538, %v527
      %v545 = vadd.s32 %v538, %v528
      %v546 = vadd.s32 %v538, %v529
      %v547 = vadd.s32 %v538, %v530
      %v548 = vadd.s32 %v538, %v531
      %v549 = vadd.s32 %v538, %v532
      %v550 = vadd.s32 %v538, %v533
      %v551 = vadd.s32 %v538, %v534
      %v552 = vadd.s32 %v538, %v535
      %v553 = vadd.s32 %v538, %v536
      %v554 = vadd.s32 %v538, %v537
      %vm555 = vcmp.lt.s32.totalorder %v539, 512
      %vm556 = vcmp.lt.s32.totalorder %v540, 512
      %vm557 = vcmp.lt.s32.totalorder %v541, 512
      %vm558 = vcmp.lt.s32.totalorder %v542, 512
      %vm559 = vcmp.lt.s32.totalorder %v543, 512
      %vm560 = vcmp.lt.s32.totalorder %v544, 512
      %vm561 = vcmp.lt.s32.totalorder %v545, 512
      %vm562 = vcmp.lt.s32.totalorder %v546, 512
      %vm563 = vcmp.lt.s32.totalorder %v547, 512
      %vm564 = vcmp.lt.s32.totalorder %v548, 512
      %vm565 = vcmp.lt.s32.totalorder %v549, 512
      %vm566 = vcmp.lt.s32.totalorder %v550, 512
      %vm567 = vcmp.lt.s32.totalorder %v551, 512
      %vm568 = vcmp.lt.s32.totalorder %v552, 512
      %vm569 = vcmp.lt.s32.totalorder %v553, 512
      %vm570 = vcmp.lt.s32.totalorder %v554, 512
      %v571 = vsel %vm555, 1, 0
      %v572 = vsel %vm556, 1, 0
      %v573 = vsel %vm557, 1, 0
      %v574 = vsel %vm558, 1, 0
      %v575 = vsel %vm559, 1, 0
      %v576 = vsel %vm560, 1, 0
      %v577 = vsel %vm561, 1, 0
      %v578 = vsel %vm562, 1, 0
      %v579 = vsel %vm563, 1, 0
      %v580 = vsel %vm564, 1, 0
      %v581 = vsel %vm565, 1, 0
      %v582 = vsel %vm566, 1, 0
      %v583 = vsel %vm567, 1, 0
      %v584 = vsel %vm568, 1, 0
      %v585 = vsel %vm569, 1, 0
      %v586 = vsel %vm570, 1, 0
      %v587 = vcvt.s32.f32 %v571
      %v588 = vcvt.s32.f32 %v572
      %v589 = vcvt.s32.f32 %v573
      %v590 = vcvt.s32.f32 %v574
      %v591 = vcvt.s32.f32 %v575
      %v592 = vcvt.s32.f32 %v576
      %v593 = vcvt.s32.f32 %v577
      %v594 = vcvt.s32.f32 %v578
      %v595 = vcvt.s32.f32 %v579
      %v596 = vcvt.s32.f32 %v580
      %v597 = vcvt.s32.f32 %v581
      %v598 = vcvt.s32.f32 %v582
      %v599 = vcvt.s32.f32 %v583
      %v600 = vcvt.s32.f32 %v584
      %v601 = vcvt.s32.f32 %v585
      %v602 = vcvt.s32.f32 %v586
      %v603 = vmul.f32 %v442, %v587
      %v604 = vmul.f32 %v445, %v588
      %v605 = vmul.f32 %v450, %v589
      %v606 = vmul.f32 %v453, %v590
      %v607 = vmul.f32 %v458, %v591
      %v608 = vmul.f32 %v461, %v592
      %v609 = vmul.f32 %v466, %v593
      %v610 = vmul.f32 %v469, %v594
      %v611 = vmul.f32 %v474, %v595
      %v612 = vmul.f32 %v477, %v596
      %v613 = vmul.f32 %v482, %v597
      %v614 = vmul.f32 %v485, %v598
      %v615 = vmul.f32 %v490, %v599
      %v616 = vmul.f32 %v493, %v600
      %v617 = vmul.f32 %v498, %v601
      %v618 = vmul.f32 %v501, %v602
      %v619 = vadd.f32 %v603, %v604
      %v620 = vadd.f32 %v619, %v605
      %v621 = vadd.f32 %v620, %v606
      %v622 = vadd.f32 %v621, %v607
      %v623 = vadd.f32 %v622, %v608
      %v624 = vadd.f32 %v623, %v609
      %v625 = vadd.f32 %v624, %v610
      %v626 = vadd.f32 %v625, %v611
      %v627 = vadd.f32 %v626, %v612
      %v628 = vadd.f32 %v627, %v613
      %v629 = vadd.f32 %v628, %v614
      %v630 = vadd.f32 %v629, %v615
      %v631 = vadd.f32 %v630, %v616
      %v632 = vadd.f32 %v631, %v617
      %v633 = vadd.f32 %v632, %v618
      %v634 = vrot.slane %v633, 4
      %v635 = vadd.f32 %v633, %v634
      %v636 = vrot.slane %v635, 2
      %v637 = vadd.f32 %v635, %v636
      %v638 = vrot.slane %v637, 1
      %v639 = vadd.f32 %v637, %v638
      %v640 = vmul.f32 %v603, %v603
      %v641 = vmul.f32 %v604, %v604
      %v642 = vmul.f32 %v605, %v605
      %v643 = vmul.f32 %v606, %v606
      %v644 = vmul.f32 %v607, %v607
      %v645 = vmul.f32 %v608, %v608
      %v646 = vmul.f32 %v609, %v609
      %v647 = vmul.f32 %v610, %v610
      %v648 = vmul.f32 %v611, %v611
      %v649 = vmul.f32 %v612, %v612
      %v650 = vmul.f32 %v613, %v613
      %v651 = vmul.f32 %v614, %v614
      %v652 = vmul.f32 %v615, %v615
      %v653 = vmul.f32 %v616, %v616
      %v654 = vmul.f32 %v617, %v617
      %v655 = vmul.f32 %v618, %v618
      %v656 = vadd.f32 %v640, %v641
      %v657 = vadd.f32 %v656, %v642
      %v658 = vadd.f32 %v657, %v643
      %v659 = vadd.f32 %v658, %v644
      %v660 = vadd.f32 %v659, %v645
      %v661 = vadd.f32 %v660, %v646
      %v662 = vadd.f32 %v661, %v647
      %v663 = vadd.f32 %v662, %v648
      %v664 = vadd.f32 %v663, %v649
      %v665 = vadd.f32 %v664, %v650
      %v666 = vadd.f32 %v665, %v651
      %v667 = vadd.f32 %v666, %v652
      %v668 = vadd.f32 %v667, %v653
      %v669 = vadd.f32 %v668, %v654
      %v670 = vadd.f32 %v669, %v655
      %v671 = vrot.slane %v670, 4
      %v672 = vadd.f32 %v670, %v671
      %v673 = vrot.slane %v672, 2
      %v674 = vadd.f32 %v672, %v673
      %v675 = vrot.slane %v674, 1
      %v676 = vadd.f32 %v674, %v675
      %vm677 = vcmp.eq.s32.totalorder %v522, 0
      %v678 = vsel %vm677, 1, 0
      %vm679 = vcmp.eq.s32.totalorder %v678, 1
      %v680 = vsel %vm679, %v639, 0.0
      %vm681 = vcmp.eq.s32.totalorder %v522, 1
      %v682 = vsel %vm681, 1, 0
      %vm683 = vcmp.eq.s32.totalorder %v682, 1
      %v684 = vsel %vm683, %v676, 0.0
      %v685 = vadd.f32 %v680, %v684
      %686 = vst [vmem:[%s270] sm:$0xff] %v685
      %s687 = smul.u32 16, %s20
      %p688 = scmp.lt.s32.totalorder %s687, 63
      %s689 = scalar_select %p688, %s687, 63
      %p690 = scmp.lt.s32.totalorder %s21, 0
      %s691 = scalar_select %p690, %s21, 0
      %s692 = sadd.s32 %s691, %s689
      %s693 = smul.addr %s692, 8
      %s694 = scalar_lea.vmem %s3, %s693
      %p695 = scmp.lt.s32.totalorder %s20, 3
      %s696 = scalar_select %p695, %s20, 3
      %p697 = scmp.lt.s32.totalorder %s21, 0
      %s698 = scalar_select %p697, %s21, 0
      %s699 = sadd.s32 %s698, %s696
      %s700 = smul.addr %s699, 8
      %s701 = scalar_lea.vmem %s4, %s700
      // Predicated region
      $region33: #{generator_forward.15} parent=31 // pred_check
        %p702 = pneg %p126
      $region34: #{generator_forward.15} parent=31 // pred_check_branch
        %704 = sbr.rel (%p702) target = $region36
      $region35: #{generator_forward.15} parent=31 // pred_region
        %s705 = smul.u32 16, %s20
      $region36: #{generator_forward.15} parent=31 // pred_fallthru
        _
      // Predicated region
      $region37: #{generator_forward.15} parent=31 // pred_check
        %p706 = pneg %p154
      $region38: #{generator_forward.15} parent=31 // pred_check_branch
        %708 = sbr.rel (%p706) target = $region40
      $region39: #{generator_forward.15} parent=31 // pred_region
        _
      $region40: #{generator_forward.15} parent=31 // pred_fallthru
        _
    $region32: #{generator_forward.15} parent=5 // pred_fallthru
      _
    %p709 = scmp.le.s32.totalorder 2, %s11
    // Predicated region
    $region41: #{generator_forward.15} parent=5 // pred_check
      %p710 = pneg %p709
    $region42: #{generator_forward.15} parent=5 // pred_check_branch
      %712 = sbr.rel (%p710) target = $region44
    $region43: #{generator_forward.15} parent=5 // pred_region
      %s713 = ssub.s32 %s11, 2
      // Predicated region
      $region45: #{generator_forward.15} parent=43 // pred_check
        %p714 = pneg %p132
      $region46: #{generator_forward.15} parent=43 // pred_check_branch
        %716 = sbr.rel (%p714) target = $region48
      $region47: #{generator_forward.15} parent=43 // pred_region
        %s717 = smul.u32 16, %s22
        %p718 = scmp.lt.s32.totalorder %s717, 63
        %s719 = scalar_select %p718, %s717, 63
        %p720 = scmp.lt.s32.totalorder %s23, 0
        %s721 = scalar_select %p720, %s23, 0
        %s722 = sadd.s32 %s721, %s719
        %s723 = smul.addr %s722, 8
        %s724 = scalar_lea.vmem %s3, %s723
      $region48: #{generator_forward.15} parent=43 // pred_fallthru
        _
      // Predicated region
      $region49: #{generator_forward.15} parent=43 // pred_check
        %p725 = pneg %p160
      $region50: #{generator_forward.15} parent=43 // pred_check_branch
        %727 = sbr.rel (%p725) target = $region52
      $region51: #{generator_forward.15} parent=43 // pred_region
        %p728 = scmp.lt.s32.totalorder %s22, 3
        %s729 = scalar_select %p728, %s22, 3
        %p730 = scmp.lt.s32.totalorder %s23, 0
        %s731 = scalar_select %p730, %s23, 0
        %s732 = sadd.s32 %s731, %s729
        %s733 = smul.addr %s732, 8
        %s734 = scalar_lea.vmem %s4, %s733
      $region52: #{generator_forward.15} parent=43 // pred_fallthru
        _
    $region44: #{generator_forward.15} parent=5 // pred_fallthru
      _
  $region6: #{generator_forward.15} parent=0 // loop_footer
    %s15 = sadd.s32 1, %s11
  $region7: #{generator_forward.15} parent=0 // loop_footer_branch
    %10 = sbr.rel target = $region3
  $region8: #{generator_forward.15} parent=0 // loop_exit
    _

// kernel: generator_forward.16
$region0: #{generator_forward.16}
  #allocation0 [shape = 'u32[]', space=smem, size = 0x4, offset = 0x4, fixed_abs, tag = 'smem constant byte address 0x4 - core index']
  #allocation1 [shape = 'u32[144,128]{1,0:T(1,128)}', space=vmem, size = 0x12000, scoped, tag = 'internal scratch']
  %s0 = inlined_call_operand.vmem [shape: f32[4,128,128], index: 0, kind: input, shape index: {}]
  %s1 = inlined_call_operand.vmem [shape: f32[1,1,128], index: 1, kind: input, shape index: {}]
  %s2 = inlined_call_operand.vmem [shape: f32[1,1,128], index: 2, kind: input, shape index: {}]
  %s3 = inlined_call_operand.vmem [shape: f32[128,128], index: 3, kind: output, shape index: {}]
  %s4 = sld [smem:[#allocation0]]
  $region22: #{generator_forward.16} parent=0
    _
  %s6 = ssub.s32 1, %s4
  %s7 = scalar_select 0, %s6, %s4
  // Predicated region
  $region2: #{generator_forward.16} parent=0 // pred_check
    _
  $region3: #{generator_forward.16} parent=0 // pred_check_branch
    %9 = sbr.rel (0) target = $region5
  $region4: #{generator_forward.16} parent=0 // pred_region
    _
  $region5: #{generator_forward.16} parent=0 // pred_fallthru
    _
  // Predicated region
  $region6: #{generator_forward.16} parent=0 // pred_check
    _
  $region7: #{generator_forward.16} parent=0 // pred_check_branch
    %11 = sbr.rel (0) target = $region9
  $region8: #{generator_forward.16} parent=0 // pred_region
    _
  $region9: #{generator_forward.16} parent=0 // pred_fallthru
    _
  // Predicated region
  $region10: #{generator_forward.16} parent=0 // pred_check
    _
  $region11: #{generator_forward.16} parent=0 // pred_check_branch
    %13 = sbr.rel (0) target = $region13
  $region12: #{generator_forward.16} parent=0 // pred_region
    _
  $region13: #{generator_forward.16} parent=0 // pred_fallthru
    _
  %v14 = vld [vmem:[%s0] sm:$0xff]
  %v15 = vld [vmem:[%s0 + $0x8] sm:$0xff]
  %v16 = vld [vmem:[%s0 + $0x10] sm:$0xff]
  %v17 = vld [vmem:[%s0 + $0x18] sm:$0xff]
  %v18 = vld [vmem:[%s0 + $0x20] sm:$0xff]
  %v19 = vld [vmem:[%s0 + $0x28] sm:$0xff]
  %v20 = vld [vmem:[%s0 + $0x30] sm:$0xff]
  %v21 = vld [vmem:[%s0 + $0x38] sm:$0xff]
  %v22 = vld [vmem:[%s0 + $0x40] sm:$0xff]
  %v23 = vld [vmem:[%s0 + $0x48] sm:$0xff]
  %v24 = vld [vmem:[%s0 + $0x50] sm:$0xff]
  %v25 = vld [vmem:[%s0 + $0x58] sm:$0xff]
  %v26 = vld [vmem:[%s0 + $0x60] sm:$0xff]
  %v27 = vld [vmem:[%s0 + $0x68] sm:$0xff]
  %v28 = vld [vmem:[%s0 + $0x70] sm:$0xff]
  %v29 = vld [vmem:[%s0 + $0x78] sm:$0xff]
  %v30 = vld [vmem:[%s0 + $0x80] sm:$0xff]
  %v31 = vld [vmem:[%s0 + $0x88] sm:$0xff]
  %v32 = vld [vmem:[%s0 + $0x90] sm:$0xff]
  %v33 = vld [vmem:[%s0 + $0x98] sm:$0xff]
  %v34 = vld [vmem:[%s0 + $0xa0] sm:$0xff]
  %v35 = vld [vmem:[%s0 + $0xa8] sm:$0xff]
  %v36 = vld [vmem:[%s0 + $0xb0] sm:$0xff]
  %v37 = vld [vmem:[%s0 + $0xb8] sm:$0xff]
  %v38 = vld [vmem:[%s0 + $0xc0] sm:$0xff]
  %v39 = vld [vmem:[%s0 + $0xc8] sm:$0xff]
  %v40 = vld [vmem:[%s0 + $0xd0] sm:$0xff]
  %v41 = vld [vmem:[%s0 + $0xd8] sm:$0xff]
  %v42 = vld [vmem:[%s0 + $0xe0] sm:$0xff]
  %v43 = vld [vmem:[%s0 + $0xe8] sm:$0xff]
  %v44 = vld [vmem:[%s0 + $0xf0] sm:$0xff]
  %v45 = vld [vmem:[%s0 + $0xf8] sm:$0xff]
  %v46 = vld [vmem:[%s0 + $0x100] sm:$0xff]
  %v47 = vld [vmem:[%s0 + $0x108] sm:$0xff]
  %v48 = vld [vmem:[%s0 + $0x110] sm:$0xff]
  %v49 = vld [vmem:[%s0 + $0x118] sm:$0xff]
  %v50 = vld [vmem:[%s0 + $0x120] sm:$0xff]
  %v51 = vld [vmem:[%s0 + $0x128] sm:$0xff]
  %v52 = vld [vmem:[%s0 + $0x130] sm:$0xff]
  %v53 = vld [vmem:[%s0 + $0x138] sm:$0xff]
  %v54 = vld [vmem:[%s0 + $0x140] sm:$0xff]
  %v55 = vld [vmem:[%s0 + $0x148] sm:$0xff]
  %v56 = vld [vmem:[%s0 + $0x150] sm:$0xff]
  %v57 = vld [vmem:[%s0 + $0x158] sm:$0xff]
  %v58 = vld [vmem:[%s0 + $0x160] sm:$0xff]
  %v59 = vld [vmem:[%s0 + $0x168] sm:$0xff]
  %v60 = vld [vmem:[%s0 + $0x170] sm:$0xff]
  %v61 = vld [vmem:[%s0 + $0x178] sm:$0xff]
  %v62 = vld [vmem:[%s0 + $0x180] sm:$0xff]
  %v63 = vld [vmem:[%s0 + $0x188] sm:$0xff]
  %v64 = vld [vmem:[%s0 + $0x190] sm:$0xff]
  %v65 = vld [vmem:[%s0 + $0x198] sm:$0xff]
  %v66 = vld [vmem:[%s0 + $0x1a0] sm:$0xff]
  %v67 = vld [vmem:[%s0 + $0x1a8] sm:$0xff]
  %v68 = vld [vmem:[%s0 + $0x1b0] sm:$0xff]
  %v69 = vld [vmem:[%s0 + $0x1b8] sm:$0xff]
  %v70 = vld [vmem:[%s0 + $0x1c0] sm:$0xff]
  %v71 = vld [vmem:[%s0 + $0x1c8] sm:$0xff]
  %v72 = vld [vmem:[%s0 + $0x1d0] sm:$0xff]
  %v73 = vld [vmem:[%s0 + $0x1d8] sm:$0xff]
  %v74 = vld [vmem:[%s0 + $0x1e0] sm:$0xff]
  %v75 = vld [vmem:[%s0 + $0x1e8] sm:$0xff]
  %v76 = vld [vmem:[%s0 + $0x1f0] sm:$0xff]
  %v77 = vld [vmem:[%s0 + $0x1f8] sm:$0xff]
  %v78 = vld [vmem:[%s1] sm:$0x1]
  %v80 = vlaneseq
  %v81 = vshrl.u32 %v80, 7
  %v82 = vsub.s32 0, %v81
  %v83 = vrot.slane %v78, %v82
  %v85 = vmul.f32 %v14, %v83
  %v86 = vmul.f32 %v15, %v83
  %v87 = vmul.f32 %v16, %v83
  %v88 = vmul.f32 %v17, %v83
  %v89 = vmul.f32 %v18, %v83
  %v90 = vmul.f32 %v19, %v83
  %v91 = vmul.f32 %v20, %v83
  %v92 = vmul.f32 %v21, %v83
  %v93 = vmul.f32 %v22, %v83
  %v94 = vmul.f32 %v23, %v83
  %v95 = vmul.f32 %v24, %v83
  %v96 = vmul.f32 %v25, %v83
  %v97 = vmul.f32 %v26, %v83
  %v98 = vmul.f32 %v27, %v83
  %v99 = vmul.f32 %v28, %v83
  %v100 = vmul.f32 %v29, %v83
  %v101 = vmul.f32 %v30, %v83
  %v102 = vmul.f32 %v31, %v83
  %v103 = vmul.f32 %v32, %v83
  %v104 = vmul.f32 %v33, %v83
  %v105 = vmul.f32 %v34, %v83
  %v106 = vmul.f32 %v35, %v83
  %v107 = vmul.f32 %v36, %v83
  %v108 = vmul.f32 %v37, %v83
  %v109 = vmul.f32 %v38, %v83
  %v110 = vmul.f32 %v39, %v83
  %v111 = vmul.f32 %v40, %v83
  %v112 = vmul.f32 %v41, %v83
  %v113 = vmul.f32 %v42, %v83
  %v114 = vmul.f32 %v43, %v83
  %v115 = vmul.f32 %v44, %v83
  %v116 = vmul.f32 %v45, %v83
  %v117 = vmul.f32 %v46, %v83
  %v118 = vmul.f32 %v47, %v83
  %v119 = vmul.f32 %v48, %v83
  %v120 = vmul.f32 %v49, %v83
  %v121 = vmul.f32 %v50, %v83
  %v122 = vmul.f32 %v51, %v83
  %v123 = vmul.f32 %v52, %v83
  %v124 = vmul.f32 %v53, %v83
  %v125 = vmul.f32 %v54, %v83
  %v126 = vmul.f32 %v55, %v83
  %v127 = vmul.f32 %v56, %v83
  %v128 = vmul.f32 %v57, %v83
  %v129 = vmul.f32 %v58, %v83
  %v130 = vmul.f32 %v59, %v83
  %v131 = vmul.f32 %v60, %v83
  %v132 = vmul.f32 %v61, %v83
  %v133 = vmul.f32 %v62, %v83
  %v134 = vmul.f32 %v63, %v83
  %v135 = vmul.f32 %v64, %v83
  %v136 = vmul.f32 %v65, %v83
  %v137 = vmul.f32 %v66, %v83
  %v138 = vmul.f32 %v67, %v83
  %v139 = vmul.f32 %v68, %v83
  %v140 = vmul.f32 %v69, %v83
  %v141 = vmul.f32 %v70, %v83
  %v142 = vmul.f32 %v71, %v83
  %v143 = vmul.f32 %v72, %v83
  %v144 = vmul.f32 %v73, %v83
  %v145 = vmul.f32 %v74, %v83
  %v146 = vmul.f32 %v75, %v83
  %v147 = vmul.f32 %v76, %v83
  %v148 = vmul.f32 %v77, %v83
  %v149 = vld [vmem:[%s2] sm:$0x1]
  %v151 = vlaneseq
  %v152 = vshrl.u32 %v151, 7
  %v153 = vsub.s32 0, %v152
  %v154 = vrot.slane %v149, %v153
  %v156 = vadd.f32 %v85, %v154
  %v157 = vadd.f32 %v86, %v154
  %v158 = vadd.f32 %v87, %v154
  %v159 = vadd.f32 %v88, %v154
  %v160 = vadd.f32 %v89, %v154
  %v161 = vadd.f32 %v90, %v154
  %v162 = vadd.f32 %v91, %v154
  %v163 = vadd.f32 %v92, %v154
  %v164 = vadd.f32 %v93, %v154
  %v165 = vadd.f32 %v94, %v154
  %v166 = vadd.f32 %v95, %v154
  %v167 = vadd.f32 %v96, %v154
  %v168 = vadd.f32 %v97, %v154
  %v169 = vadd.f32 %v98, %v154
  %v170 = vadd.f32 %v99, %v154
  %v171 = vadd.f32 %v100, %v154
  %v172 = vadd.f32 %v101, %v154
  %v173 = vadd.f32 %v102, %v154
  %v174 = vadd.f32 %v103, %v154
  %v175 = vadd.f32 %v104, %v154
  %v176 = vadd.f32 %v105, %v154
  %v177 = vadd.f32 %v106, %v154
  %v178 = vadd.f32 %v107, %v154
  %v179 = vadd.f32 %v108, %v154
  %v180 = vadd.f32 %v109, %v154
  %v181 = vadd.f32 %v110, %v154
  %v182 = vadd.f32 %v111, %v154
  %v183 = vadd.f32 %v112, %v154
  %v184 = vadd.f32 %v113, %v154
  %v185 = vadd.f32 %v114, %v154
  %v186 = vadd.f32 %v115, %v154
  %v187 = vadd.f32 %v116, %v154
  %v188 = vadd.f32 %v117, %v154
  %v189 = vadd.f32 %v118, %v154
  %v190 = vadd.f32 %v119, %v154
  %v191 = vadd.f32 %v120, %v154
  %v192 = vadd.f32 %v121, %v154
  %v193 = vadd.f32 %v122, %v154
  %v194 = vadd.f32 %v123, %v154
  %v195 = vadd.f32 %v124, %v154
  %v196 = vadd.f32 %v125, %v154
  %v197 = vadd.f32 %v126, %v154
  %v198 = vadd.f32 %v127, %v154
  %v199 = vadd.f32 %v128, %v154
  %v200 = vadd.f32 %v129, %v154
  %v201 = vadd.f32 %v130, %v154
  %v202 = vadd.f32 %v131, %v154
  %v203 = vadd.f32 %v132, %v154
  %v204 = vadd.f32 %v133, %v154
  %v205 = vadd.f32 %v134, %v154
  %v206 = vadd.f32 %v135, %v154
  %v207 = vadd.f32 %v136, %v154
  %v208 = vadd.f32 %v137, %v154
  %v209 = vadd.f32 %v138, %v154
  %v210 = vadd.f32 %v139, %v154
  %v211 = vadd.f32 %v140, %v154
  %v212 = vadd.f32 %v141, %v154
  %v213 = vadd.f32 %v142, %v154
  %v214 = vadd.f32 %v143, %v154
  %v215 = vadd.f32 %v144, %v154
  %v216 = vadd.f32 %v145, %v154
  %v217 = vadd.f32 %v146, %v154
  %v218 = vadd.f32 %v147, %v154
  %v219 = vadd.f32 %v148, %v154
  %vm220 = vcmp.ge.f32.partialorder %v156, 0.0
  %vm221 = vcmp.ge.f32.partialorder %v157, 0.0
  %vm222 = vcmp.ge.f32.partialorder %v158, 0.0
  %vm223 = vcmp.ge.f32.partialorder %v159, 0.0
  %vm224 = vcmp.ge.f32.partialorder %v160, 0.0
  %vm225 = vcmp.ge.f32.partialorder %v161, 0.0
  %vm226 = vcmp.ge.f32.partialorder %v162, 0.0
  %vm227 = vcmp.ge.f32.partialorder %v163, 0.0
  %vm228 = vcmp.ge.f32.partialorder %v164, 0.0
  %vm229 = vcmp.ge.f32.partialorder %v165, 0.0
  %vm230 = vcmp.ge.f32.partialorder %v166, 0.0
  %vm231 = vcmp.ge.f32.partialorder %v167, 0.0
  %vm232 = vcmp.ge.f32.partialorder %v168, 0.0
  %vm233 = vcmp.ge.f32.partialorder %v169, 0.0
  %vm234 = vcmp.ge.f32.partialorder %v170, 0.0
  %vm235 = vcmp.ge.f32.partialorder %v171, 0.0
  %vm236 = vcmp.ge.f32.partialorder %v172, 0.0
  %vm237 = vcmp.ge.f32.partialorder %v173, 0.0
  %vm238 = vcmp.ge.f32.partialorder %v174, 0.0
  %vm239 = vcmp.ge.f32.partialorder %v175, 0.0
  %vm240 = vcmp.ge.f32.partialorder %v176, 0.0
  %vm241 = vcmp.ge.f32.partialorder %v177, 0.0
  %vm242 = vcmp.ge.f32.partialorder %v178, 0.0
  %vm243 = vcmp.ge.f32.partialorder %v179, 0.0
  %vm244 = vcmp.ge.f32.partialorder %v180, 0.0
  %vm245 = vcmp.ge.f32.partialorder %v181, 0.0
  %vm246 = vcmp.ge.f32.partialorder %v182, 0.0
  %vm247 = vcmp.ge.f32.partialorder %v183, 0.0
  %vm248 = vcmp.ge.f32.partialorder %v184, 0.0
  %vm249 = vcmp.ge.f32.partialorder %v185, 0.0
  %vm250 = vcmp.ge.f32.partialorder %v186, 0.0
  %vm251 = vcmp.ge.f32.partialorder %v187, 0.0
  %vm252 = vcmp.ge.f32.partialorder %v188, 0.0
  %vm253 = vcmp.ge.f32.partialorder %v189, 0.0
  %vm254 = vcmp.ge.f32.partialorder %v190, 0.0
  %vm255 = vcmp.ge.f32.partialorder %v191, 0.0
  %vm256 = vcmp.ge.f32.partialorder %v192, 0.0
  %vm257 = vcmp.ge.f32.partialorder %v193, 0.0
  %vm258 = vcmp.ge.f32.partialorder %v194, 0.0
  %vm259 = vcmp.ge.f32.partialorder %v195, 0.0
  %vm260 = vcmp.ge.f32.partialorder %v196, 0.0
  %vm261 = vcmp.ge.f32.partialorder %v197, 0.0
  %vm262 = vcmp.ge.f32.partialorder %v198, 0.0
  %vm263 = vcmp.ge.f32.partialorder %v199, 0.0
  %vm264 = vcmp.ge.f32.partialorder %v200, 0.0
  %vm265 = vcmp.ge.f32.partialorder %v201, 0.0
  %vm266 = vcmp.ge.f32.partialorder %v202, 0.0
  %vm267 = vcmp.ge.f32.partialorder %v203, 0.0
  %vm268 = vcmp.ge.f32.partialorder %v204, 0.0
  %vm269 = vcmp.ge.f32.partialorder %v205, 0.0
  %vm270 = vcmp.ge.f32.partialorder %v206, 0.0
  %vm271 = vcmp.ge.f32.partialorder %v207, 0.0
  %vm272 = vcmp.ge.f32.partialorder %v208, 0.0
  %vm273 = vcmp.ge.f32.partialorder %v209, 0.0
  %vm274 = vcmp.ge.f32.partialorder %v210, 0.0
  %vm275 = vcmp.ge.f32.partialorder %v211, 0.0
  %vm276 = vcmp.ge.f32.partialorder %v212, 0.0
  %vm277 = vcmp.ge.f32.partialorder %v213, 0.0
  %vm278 = vcmp.ge.f32.partialorder %v214, 0.0
  %vm279 = vcmp.ge.f32.partialorder %v215, 0.0
  %vm280 = vcmp.ge.f32.partialorder %v216, 0.0
  %vm281 = vcmp.ge.f32.partialorder %v217, 0.0
  %vm282 = vcmp.ge.f32.partialorder %v218, 0.0
  %vm283 = vcmp.ge.f32.partialorder %v219, 0.0
  %v284 = vmul.f32 %v156, 0.2
  %v285 = vmul.f32 %v157, 0.2
  %v286 = vmul.f32 %v158, 0.2
  %v287 = vmul.f32 %v159, 0.2
  %v288 = vmul.f32 %v160, 0.2
  %v289 = vmul.f32 %v161, 0.2
  %v290 = vmul.f32 %v162, 0.2
  %v291 = vmul.f32 %v163, 0.2
  %v292 = vmul.f32 %v164, 0.2
  %v293 = vmul.f32 %v165, 0.2
  %v294 = vmul.f32 %v166, 0.2
  %v295 = vmul.f32 %v167, 0.2
  %v296 = vmul.f32 %v168, 0.2
  %v297 = vmul.f32 %v169, 0.2
  %v298 = vmul.f32 %v170, 0.2
  %v299 = vmul.f32 %v171, 0.2
  %v300 = vmul.f32 %v172, 0.2
  %v301 = vmul.f32 %v173, 0.2
  %v302 = vmul.f32 %v174, 0.2
  %v303 = vmul.f32 %v175, 0.2
  %v304 = vmul.f32 %v176, 0.2
  %v305 = vmul.f32 %v177, 0.2
  %v306 = vmul.f32 %v178, 0.2
  %v307 = vmul.f32 %v179, 0.2
  %v308 = vmul.f32 %v180, 0.2
  %v309 = vmul.f32 %v181, 0.2
  %v310 = vmul.f32 %v182, 0.2
  %v311 = vmul.f32 %v183, 0.2
  %v312 = vmul.f32 %v184, 0.2
  %v313 = vmul.f32 %v185, 0.2
  %v314 = vmul.f32 %v186, 0.2
  %v315 = vmul.f32 %v187, 0.2
  %v316 = vmul.f32 %v188, 0.2
  %v317 = vmul.f32 %v189, 0.2
  %v318 = vmul.f32 %v190, 0.2
  %v319 = vmul.f32 %v191, 0.2
  %v320 = vmul.f32 %v192, 0.2
  %v321 = vmul.f32 %v193, 0.2
  %v322 = vmul.f32 %v194, 0.2
  %v323 = vmul.f32 %v195, 0.2
  %v324 = vmul.f32 %v196, 0.2
  %v325 = vmul.f32 %v197, 0.2
  %v326 = vmul.f32 %v198, 0.2
  %v327 = vmul.f32 %v199, 0.2
  %v328 = vmul.f32 %v200, 0.2
  %v329 = vmul.f32 %v201, 0.2
  %v330 = vmul.f32 %v202, 0.2
  %v331 = vmul.f32 %v203, 0.2
  %v332 = vmul.f32 %v204, 0.2
  %v333 = vmul.f32 %v205, 0.2
  %v334 = vmul.f32 %v206, 0.2
  %v335 = vmul.f32 %v207, 0.2
  %v336 = vmul.f32 %v208, 0.2
  %v337 = vmul.f32 %v209, 0.2
  %v338 = vmul.f32 %v210, 0.2
  %v339 = vmul.f32 %v211, 0.2
  %v340 = vmul.f32 %v212, 0.2
  %v341 = vmul.f32 %v213, 0.2
  %v342 = vmul.f32 %v214, 0.2
  %v343 = vmul.f32 %v215, 0.2
  %v344 = vmul.f32 %v216, 0.2
  %v345 = vmul.f32 %v217, 0.2
  %v346 = vmul.f32 %v218, 0.2
  %v347 = vmul.f32 %v219, 0.2
  %v348 = vsel %vm220, %v156, %v284
  %v349 = vsel %vm221, %v157, %v285
  %v350 = vsel %vm222, %v158, %v286
  %v351 = vsel %vm223, %v159, %v287
  %v352 = vsel %vm224, %v160, %v288
  %v353 = vsel %vm225, %v161, %v289
  %v354 = vsel %vm226, %v162, %v290
  %v355 = vsel %vm227, %v163, %v291
  %v356 = vsel %vm228, %v164, %v292
  %v357 = vsel %vm229, %v165, %v293
  %v358 = vsel %vm230, %v166, %v294
  %v359 = vsel %vm231, %v167, %v295
  %v360 = vsel %vm232, %v168, %v296
  %v361 = vsel %vm233, %v169, %v297
  %v362 = vsel %vm234, %v170, %v298
  %v363 = vsel %vm235, %v171, %v299
  %v364 = vsel %vm236, %v172, %v300
  %v365 = vsel %vm237, %v173, %v301
  %v366 = vsel %vm238, %v174, %v302
  %v367 = vsel %vm239, %v175, %v303
  %v368 = vsel %vm240, %v176, %v304
  %v369 = vsel %vm241, %v177, %v305
  %v370 = vsel %vm242, %v178, %v306
  %v371 = vsel %vm243, %v179, %v307
  %v372 = vsel %vm244, %v180, %v308
  %v373 = vsel %vm245, %v181, %v309
  %v374 = vsel %vm246, %v182, %v310
  %v375 = vsel %vm247, %v183, %v311
  %v376 = vsel %vm248, %v184, %v312
  %v377 = vsel %vm249, %v185, %v313
  %v378 = vsel %vm250, %v186, %v314
  %v379 = vsel %vm251, %v187, %v315
  %v380 = vsel %vm252, %v188, %v316
  %v381 = vsel %vm253, %v189, %v317
  %v382 = vsel %vm254, %v190, %v318
  %v383 = vsel %vm255, %v191, %v319
  %v384 = vsel %vm256, %v192, %v320
  %v385 = vsel %vm257, %v193, %v321
  %v386 = vsel %vm258, %v194, %v322
  %v387 = vsel %vm259, %v195, %v323
  %v388 = vsel %vm260, %v196, %v324
  %v389 = vsel %vm261, %v197, %v325
  %v390 = vsel %vm262, %v198, %v326
  %v391 = vsel %vm263, %v199, %v327
  %v392 = vsel %vm264, %v200, %v328
  %v393 = vsel %vm265, %v201, %v329
  %v394 = vsel %vm266, %v202, %v330
  %v395 = vsel %vm267, %v203, %v331
  %v396 = vsel %vm268, %v204, %v332
  %v397 = vsel %vm269, %v205, %v333
  %v398 = vsel %vm270, %v206, %v334
  %v399 = vsel %vm271, %v207, %v335
  %v400 = vsel %vm272, %v208, %v336
  %v401 = vsel %vm273, %v209, %v337
  %v402 = vsel %vm274, %v210, %v338
  %v403 = vsel %vm275, %v211, %v339
  %v404 = vsel %vm276, %v212, %v340
  %v405 = vsel %vm277, %v213, %v341
  %v406 = vsel %vm278, %v214, %v342
  %v407 = vsel %vm279, %v215, %v343
  %v408 = vsel %vm280, %v216, %v344
  %v409 = vsel %vm281, %v217, %v345
  %v410 = vsel %vm282, %v218, %v346
  %v411 = vsel %vm283, %v219, %v347
  %v412 = vmax.f32 %v348, %v364
  %v413 = vmax.f32 %v412, %v380
  %v414 = vmax.f32 %v413, %v396
  %v415 = vmax.f32 %v349, %v365
  %v416 = vmax.f32 %v415, %v381
  %v417 = vmax.f32 %v416, %v397
  %v418 = vmax.f32 %v350, %v366
  %v419 = vmax.f32 %v418, %v382
  %v420 = vmax.f32 %v419, %v398
  %v421 = vmax.f32 %v351, %v367
  %v422 = vmax.f32 %v421, %v383
  %v423 = vmax.f32 %v422, %v399
  %v424 = vmax.f32 %v352, %v368
  %v425 = vmax.f32 %v424, %v384
  %v426 = vmax.f32 %v425, %v400
  %v427 = vmax.f32 %v353, %v369
  %v428 = vmax.f32 %v427, %v385
  %v429 = vmax.f32 %v428, %v401
  %v430 = vmax.f32 %v354, %v370
  %v431 = vmax.f32 %v430, %v386
  %v432 = vmax.f32 %v431, %v402
  %v433 = vmax.f32 %v355, %v371
  %v434 = vmax.f32 %v433, %v387
  %v435 = vmax.f32 %v434, %v403
  %v436 = vmax.f32 %v356, %v372
  %v437 = vmax.f32 %v436, %v388
  %v438 = vmax.f32 %v437, %v404
  %v439 = vmax.f32 %v357, %v373
  %v440 = vmax.f32 %v439, %v389
  %v441 = vmax.f32 %v440, %v405
  %v442 = vmax.f32 %v358, %v374
  %v443 = vmax.f32 %v442, %v390
  %v444 = vmax.f32 %v443, %v406
  %v445 = vmax.f32 %v359, %v375
  %v446 = vmax.f32 %v445, %v391
  %v447 = vmax.f32 %v446, %v407
  %v448 = vmax.f32 %v360, %v376
  %v449 = vmax.f32 %v448, %v392
  %v450 = vmax.f32 %v449, %v408
  %v451 = vmax.f32 %v361, %v377
  %v452 = vmax.f32 %v451, %v393
  %v453 = vmax.f32 %v452, %v409
  %v454 = vmax.f32 %v362, %v378
  %v455 = vmax.f32 %v454, %v394
  %v456 = vmax.f32 %v455, %v410
  %v457 = vmax.f32 %v363, %v379
  %v458 = vmax.f32 %v457, %v395
  %v459 = vmax.f32 %v458, %v411
  %460 = vst [vmem:[%s3] sm:$0xff] %v414
  %461 = vst [vmem:[%s3 + $0x8] sm:$0xff] %v417
  %462 = vst [vmem:[%s3 + $0x10] sm:$0xff] %v420
  %463 = vst [vmem:[%s3 + $0x18] sm:$0xff] %v423
  %464 = vst [vmem:[%s3 + $0x20] sm:$0xff] %v426
  %465 = vst [vmem:[%s3 + $0x28] sm:$0xff] %v429
  %466 = vst [vmem:[%s3 + $0x30] sm:$0xff] %v432
  %467 = vst [vmem:[%s3 + $0x38] sm:$0xff] %v435
  %468 = vst [vmem:[%s3 + $0x40] sm:$0xff] %v438
  %469 = vst [vmem:[%s3 + $0x48] sm:$0xff] %v441
  %470 = vst [vmem:[%s3 + $0x50] sm:$0xff] %v444
  %471 = vst [vmem:[%s3 + $0x58] sm:$0xff] %v447
  %472 = vst [vmem:[%s3 + $0x60] sm:$0xff] %v450
  %473 = vst [vmem:[%s3 + $0x68] sm:$0xff] %v453
  %474 = vst [vmem:[%s3 + $0x70] sm:$0xff] %v456
  %475 = vst [vmem:[%s3 + $0x78] sm:$0xff] %v459
  // Predicated region
  $region14: #{generator_forward.16} parent=0 // pred_check
    _
  $region15: #{generator_forward.16} parent=0 // pred_check_branch
    %477 = sbr.rel (0) target = $region17
  $region16: #{generator_forward.16} parent=0 // pred_region
    _
  $region17: #{generator_forward.16} parent=0 // pred_fallthru
    _
  // Predicated region
  $region18: #{generator_forward.16} parent=0 // pred_check
    _
  $region19: #{generator_forward.16} parent=0 // pred_check_branch
    %479 = sbr.rel (0) target = $region21
  $region20: #{generator_forward.16} parent=0 // pred_region
    _
  $region21: #{generator_forward.16} parent=0 // pred_fallthru
    _

// kernel: generator_forward.18
$region0: #{generator_forward.18}
  #allocation0 [shape = 'u32[]', space=smem, size = 0x4, offset = 0x4, fixed_abs, tag = 'smem constant byte address 0x4 - core index']
  #allocation1 [shape = 'u32[144,128]{1,0:T(1,128)}', space=vmem, size = 0x12000, scoped, tag = 'internal scratch']
  %s0 = inlined_call_operand.vmem [shape: f32[4,32,128], index: 0, kind: input, shape index: {}]
  %s1 = inlined_call_operand.vmem [shape: f32[1,1,128], index: 1, kind: input, shape index: {}]
  %s2 = inlined_call_operand.vmem [shape: f32[1,1,128], index: 2, kind: input, shape index: {}]
  %s3 = inlined_call_operand.vmem [shape: f32[32,128], index: 3, kind: output, shape index: {}]
  %s4 = sld [smem:[#allocation0]]
  $region22: #{generator_forward.18} parent=0
    _
  %s6 = ssub.s32 1, %s4
  %s7 = scalar_select 0, %s6, %s4
  // Predicated region
  $region2: #{generator_forward.18} parent=0 // pred_check
    _
  $region3: #{generator_forward.18} parent=0 // pred_check_branch
    %9 = sbr.rel (0) target = $region5
  $region4: #{generator_forward.18} parent=0 // pred_region
    _
  $region5: #{generator_forward.18} parent=0 // pred_fallthru
    _
  // Predicated region
  $region6: #{generator_forward.18} parent=0 // pred_check
    _
  $region7: #{generator_forward.18} parent=0 // pred_check_branch
    %11 = sbr.rel (0) target = $region9
  $region8: #{generator_forward.18} parent=0 // pred_region
    _
  $region9: #{generator_forward.18} parent=0 // pred_fallthru
    _
  // Predicated region
  $region10: #{generator_forward.18} parent=0 // pred_check
    _
  $region11: #{generator_forward.18} parent=0 // pred_check_branch
    %13 = sbr.rel (0) target = $region13
  $region12: #{generator_forward.18} parent=0 // pred_region
    _
  $region13: #{generator_forward.18} parent=0 // pred_fallthru
    _
  %v14 = vld [vmem:[%s0] sm:$0xff]
  %v15 = vld [vmem:[%s0 + $0x8] sm:$0xff]
  %v16 = vld [vmem:[%s0 + $0x10] sm:$0xff]
  %v17 = vld [vmem:[%s0 + $0x18] sm:$0xff]
  %v18 = vld [vmem:[%s0 + $0x20] sm:$0xff]
  %v19 = vld [vmem:[%s0 + $0x28] sm:$0xff]
  %v20 = vld [vmem:[%s0 + $0x30] sm:$0xff]
  %v21 = vld [vmem:[%s0 + $0x38] sm:$0xff]
  %v22 = vld [vmem:[%s0 + $0x40] sm:$0xff]
  %v23 = vld [vmem:[%s0 + $0x48] sm:$0xff]
  %v24 = vld [vmem:[%s0 + $0x50] sm:$0xff]
  %v25 = vld [vmem:[%s0 + $0x58] sm:$0xff]
  %v26 = vld [vmem:[%s0 + $0x60] sm:$0xff]
  %v27 = vld [vmem:[%s0 + $0x68] sm:$0xff]
  %v28 = vld [vmem:[%s0 + $0x70] sm:$0xff]
  %v29 = vld [vmem:[%s0 + $0x78] sm:$0xff]
  %v30 = vld [vmem:[%s1] sm:$0x1]
  %v32 = vlaneseq
  %v33 = vshrl.u32 %v32, 7
  %v34 = vsub.s32 0, %v33
  %v35 = vrot.slane %v30, %v34
  %v37 = vmul.f32 %v14, %v35
  %v38 = vmul.f32 %v15, %v35
  %v39 = vmul.f32 %v16, %v35
  %v40 = vmul.f32 %v17, %v35
  %v41 = vmul.f32 %v18, %v35
  %v42 = vmul.f32 %v19, %v35
  %v43 = vmul.f32 %v20, %v35
  %v44 = vmul.f32 %v21, %v35
  %v45 = vmul.f32 %v22, %v35
  %v46 = vmul.f32 %v23, %v35
  %v47 = vmul.f32 %v24, %v35
  %v48 = vmul.f32 %v25, %v35
  %v49 = vmul.f32 %v26, %v35
  %v50 = vmul.f32 %v27, %v35
  %v51 = vmul.f32 %v28, %v35
  %v52 = vmul.f32 %v29, %v35
  %v53 = vld [vmem:[%s2] sm:$0x1]
  %v55 = vlaneseq
  %v56 = vshrl.u32 %v55, 7
  %v57 = vsub.s32 0, %v56
  %v58 = vrot.slane %v53, %v57
  %v60 = vadd.f32 %v37, %v58
  %v61 = vadd.f32 %v38, %v58
  %v62 = vadd.f32 %v39, %v58
  %v63 = vadd.f32 %v40, %v58
  %v64 = vadd.f32 %v41, %v58
  %v65 = vadd.f32 %v42, %v58
  %v66 = vadd.f32 %v43, %v58
  %v67 = vadd.f32 %v44, %v58
  %v68 = vadd.f32 %v45, %v58
  %v69 = vadd.f32 %v46, %v58
  %v70 = vadd.f32 %v47, %v58
  %v71 = vadd.f32 %v48, %v58
  %v72 = vadd.f32 %v49, %v58
  %v73 = vadd.f32 %v50, %v58
  %v74 = vadd.f32 %v51, %v58
  %v75 = vadd.f32 %v52, %v58
  %vm76 = vcmp.ge.f32.partialorder %v60, 0.0
  %vm77 = vcmp.ge.f32.partialorder %v61, 0.0
  %vm78 = vcmp.ge.f32.partialorder %v62, 0.0
  %vm79 = vcmp.ge.f32.partialorder %v63, 0.0
  %vm80 = vcmp.ge.f32.partialorder %v64, 0.0
  %vm81 = vcmp.ge.f32.partialorder %v65, 0.0
  %vm82 = vcmp.ge.f32.partialorder %v66, 0.0
  %vm83 = vcmp.ge.f32.partialorder %v67, 0.0
  %vm84 = vcmp.ge.f32.partialorder %v68, 0.0
  %vm85 = vcmp.ge.f32.partialorder %v69, 0.0
  %vm86 = vcmp.ge.f32.partialorder %v70, 0.0
  %vm87 = vcmp.ge.f32.partialorder %v71, 0.0
  %vm88 = vcmp.ge.f32.partialorder %v72, 0.0
  %vm89 = vcmp.ge.f32.partialorder %v73, 0.0
  %vm90 = vcmp.ge.f32.partialorder %v74, 0.0
  %vm91 = vcmp.ge.f32.partialorder %v75, 0.0
  %v92 = vmul.f32 %v60, 0.2
  %v93 = vmul.f32 %v61, 0.2
  %v94 = vmul.f32 %v62, 0.2
  %v95 = vmul.f32 %v63, 0.2
  %v96 = vmul.f32 %v64, 0.2
  %v97 = vmul.f32 %v65, 0.2
  %v98 = vmul.f32 %v66, 0.2
  %v99 = vmul.f32 %v67, 0.2
  %v100 = vmul.f32 %v68, 0.2
  %v101 = vmul.f32 %v69, 0.2
  %v102 = vmul.f32 %v70, 0.2
  %v103 = vmul.f32 %v71, 0.2
  %v104 = vmul.f32 %v72, 0.2
  %v105 = vmul.f32 %v73, 0.2
  %v106 = vmul.f32 %v74, 0.2
  %v107 = vmul.f32 %v75, 0.2
  %v108 = vsel %vm76, %v60, %v92
  %v109 = vsel %vm77, %v61, %v93
  %v110 = vsel %vm78, %v62, %v94
  %v111 = vsel %vm79, %v63, %v95
  %v112 = vsel %vm80, %v64, %v96
  %v113 = vsel %vm81, %v65, %v97
  %v114 = vsel %vm82, %v66, %v98
  %v115 = vsel %vm83, %v67, %v99
  %v116 = vsel %vm84, %v68, %v100
  %v117 = vsel %vm85, %v69, %v101
  %v118 = vsel %vm86, %v70, %v102
  %v119 = vsel %vm87, %v71, %v103
  %v120 = vsel %vm88, %v72, %v104
  %v121 = vsel %vm89, %v73, %v105
  %v122 = vsel %vm90, %v74, %v106
  %v123 = vsel %vm91, %v75, %v107
  %v124 = vmax.f32 %v108, %v112
  %v125 = vmax.f32 %v124, %v116
  %v126 = vmax.f32 %v125, %v120
  %v127 = vmax.f32 %v109, %v113
  %v128 = vmax.f32 %v127, %v117
  %v129 = vmax.f32 %v128, %v121
  %v130 = vmax.f32 %v110, %v114
  %v131 = vmax.f32 %v130, %v118
  %v132 = vmax.f32 %v131, %v122
  %v133 = vmax.f32 %v111, %v115
  %v134 = vmax.f32 %v133, %v119
  %v135 = vmax.f32 %v134, %v123
  %136 = vst [vmem:[%s3] sm:$0xff] %v126
  %137 = vst [vmem:[%s3 + $0x8] sm:$0xff] %v129
  %138 = vst [vmem:[%s3 + $0x10] sm:$0xff] %v132
  %139 = vst [vmem:[%s3 + $0x18] sm:$0xff] %v135
  // Predicated region
  $region14: #{generator_forward.18} parent=0 // pred_check
    _
  $region15: #{generator_forward.18} parent=0 // pred_check_branch
    %141 = sbr.rel (0) target = $region17
  $region16: #{generator_forward.18} parent=0 // pred_region
    _
  $region17: #{generator_forward.18} parent=0 // pred_fallthru
    _
  // Predicated region
  $region18: #{generator_forward.18} parent=0 // pred_check
    _
  $region19: #{generator_forward.18} parent=0 // pred_check_branch
    %143 = sbr.rel (0) target = $region21
  $region20: #{generator_forward.18} parent=0 // pred_region
    _
  $region21: #{generator_forward.18} parent=0 // pred_fallthru
    _

// kernel: generator_forward.17
$region0: #{generator_forward.17}
  #allocation0 [shape = 'u32[]', space=smem, size = 0x4, offset = 0x4, fixed_abs, tag = 'smem constant byte address 0x4 - core index']
  #allocation1 [shape = 'u32[144,128]{1,0:T(1,128)}', space=vmem, size = 0x12000, scoped, tag = 'internal scratch']
  %s0 = inlined_call_operand.vmem [shape: bf16[128,256], index: 0, kind: input, shape index: {}]
  %s1 = inlined_call_operand.vmem [shape: bf16[256,128], index: 1, kind: input, shape index: {}]
  %s2 = inlined_call_operand.vmem [shape: f32[1,128], index: 2, kind: input, shape index: {}]
  %s3 = inlined_call_operand.vmem [shape: f32[128,128], index: 3, kind: output, shape index: {0}]
  %s4 = inlined_call_operand.vmem [shape: f32[8,128], index: 4, kind: output, shape index: {1}]
  %5 = xla_tuple %s3, %s4
  %s6 = sld [smem:[#allocation0]]
  $region30: #{generator_forward.17} parent=0
    _
  %s8 = ssub.s32 1, %s6
  %s9 = scalar_select 0, %s8, %s6
  // Predicated region
  $region2: #{generator_forward.17} parent=0 // pred_check
    _
  $region3: #{generator_forward.17} parent=0 // pred_check_branch
    %11 = sbr.rel (0) target = $region5
  $region4: #{generator_forward.17} parent=0 // pred_region
    _
  $region5: #{generator_forward.17} parent=0 // pred_fallthru
    _
  // Predicated region
  $region6: #{generator_forward.17} parent=0 // pred_check
    _
  $region7: #{generator_forward.17} parent=0 // pred_check_branch
    %13 = sbr.rel (0) target = $region9
  $region8: #{generator_forward.17} parent=0 // pred_region
    _
  $region9: #{generator_forward.17} parent=0 // pred_fallthru
    _
  // Predicated region
  $region10: #{generator_forward.17} parent=0 // pred_check
    _
  $region11: #{generator_forward.17} parent=0 // pred_check_branch
    %15 = sbr.rel (0) target = $region13
  $region12: #{generator_forward.17} parent=0 // pred_region
    _
  $region13: #{generator_forward.17} parent=0 // pred_fallthru
    _
  %v17 = vld [vmem:[%s0] sm:$0xff]
  %v18 = vld [vmem:[%s0 + $0x8] sm:$0xff]
  %v19 = vld [vmem:[%s0 + $0x10] sm:$0xff]
  %v20 = vld [vmem:[%s0 + $0x18] sm:$0xff]
  %v21 = vld [vmem:[%s0 + $0x20] sm:$0xff]
  %v22 = vld [vmem:[%s0 + $0x28] sm:$0xff]
  %v23 = vld [vmem:[%s0 + $0x30] sm:$0xff]
  %v24 = vld [vmem:[%s0 + $0x38] sm:$0xff]
  %v25 = vld [vmem:[%s0 + $0x40] sm:$0xff]
  %v26 = vld [vmem:[%s0 + $0x48] sm:$0xff]
  %v27 = vld [vmem:[%s0 + $0x50] sm:$0xff]
  %v28 = vld [vmem:[%s0 + $0x58] sm:$0xff]
  %v29 = vld [vmem:[%s0 + $0x60] sm:$0xff]
  %v30 = vld [vmem:[%s0 + $0x68] sm:$0xff]
  %v31 = vld [vmem:[%s0 + $0x70] sm:$0xff]
  %v32 = vld [vmem:[%s0 + $0x78] sm:$0xff]
  %v33 = vld [vmem:[%s1] sm:$0xf]
  %v34 = vld [vmem:[%s1 + $0x4] sm:$0xf]
  %v35 = vld [vmem:[%s1 + $0x8] sm:$0xf]
  %v36 = vld [vmem:[%s1 + $0xc] sm:$0xf]
  %v37 = vld [vmem:[%s1 + $0x10] sm:$0xf]
  %v38 = vld [vmem:[%s1 + $0x14] sm:$0xf]
  %v39 = vld [vmem:[%s1 + $0x18] sm:$0xf]
  %v40 = vld [vmem:[%s1 + $0x1c] sm:$0xf]
  %v41 = vld [vmem:[%s1 + $0x20] sm:$0xf]
  %v42 = vld [vmem:[%s1 + $0x24] sm:$0xf]
  %v43 = vld [vmem:[%s1 + $0x28] sm:$0xf]
  %v44 = vld [vmem:[%s1 + $0x2c] sm:$0xf]
  %v45 = vld [vmem:[%s1 + $0x30] sm:$0xf]
  %v46 = vld [vmem:[%s1 + $0x34] sm:$0xf]
  %v47 = vld [vmem:[%s1 + $0x38] sm:$0xf]
  %v48 = vld [vmem:[%s1 + $0x3c] sm:$0xf]
  %v49 = vld [vmem:[%s1 + $0x40] sm:$0xf]
  %v50 = vld [vmem:[%s1 + $0x44] sm:$0xf]
  %v51 = vld [vmem:[%s1 + $0x48] sm:$0xf]
  %v52 = vld [vmem:[%s1 + $0x4c] sm:$0xf]
  %v53 = vld [vmem:[%s1 + $0x50] sm:$0xf]
  %v54 = vld [vmem:[%s1 + $0x54] sm:$0xf]
  %v55 = vld [vmem:[%s1 + $0x58] sm:$0xf]
  %v56 = vld [vmem:[%s1 + $0x5c] sm:$0xf]
  %v57 = vld [vmem:[%s1 + $0x60] sm:$0xf]
  %v58 = vld [vmem:[%s1 + $0x64] sm:$0xf]
  %v59 = vld [vmem:[%s1 + $0x68] sm:$0xf]
  %v60 = vld [vmem:[%s1 + $0x6c] sm:$0xf]
  %v61 = vld [vmem:[%s1 + $0x70] sm:$0xf]
  %v62 = vld [vmem:[%s1 + $0x74] sm:$0xf]
  %v63 = vld [vmem:[%s1 + $0x78] sm:$0xf]
  %v64 = vld [vmem:[%s1 + $0x7c] sm:$0xf]
  %v65 = vld [vmem:[%s2] sm:$0x1]
  %v67 = vlaneseq
  %v68 = vshrl.u32 %v67, 7
  %v69 = vsub.s32 0, %v68
  %v70 = vrot.slane %v65, %v69
  %v88 = vunpack.c.l.b16 %v17
  %v89 = vunpack.c.h.b16 %v17
  %v90 = vunpack.c.l.b16 %v18
  %v91 = vunpack.c.h.b16 %v18
  %v92 = vunpack.c.l.b16 %v19
  %v93 = vunpack.c.h.b16 %v19
  %v94 = vunpack.c.l.b16 %v20
  %v95 = vunpack.c.h.b16 %v20
  %v96 = vunpack.c.l.b16 %v21
  %v97 = vunpack.c.h.b16 %v21
  %v98 = vunpack.c.l.b16 %v22
  %v99 = vunpack.c.h.b16 %v22
  %v100 = vunpack.c.l.b16 %v23
  %v101 = vunpack.c.h.b16 %v23
  %v102 = vunpack.c.l.b16 %v24
  %v103 = vunpack.c.h.b16 %v24
  %v104 = vunpack.c.l.b16 %v25
  %v105 = vunpack.c.h.b16 %v25
  %v106 = vunpack.c.l.b16 %v26
  %v107 = vunpack.c.h.b16 %v26
  %v108 = vunpack.c.l.b16 %v27
  %v109 = vunpack.c.h.b16 %v27
  %v110 = vunpack.c.l.b16 %v28
  %v111 = vunpack.c.h.b16 %v28
  %v112 = vunpack.c.l.b16 %v29
  %v113 = vunpack.c.h.b16 %v29
  %v114 = vunpack.c.l.b16 %v30
  %v115 = vunpack.c.h.b16 %v30
  %v116 = vunpack.c.l.b16 %v31
  %v117 = vunpack.c.h.b16 %v31
  %v118 = vunpack.c.l.b16 %v32
  %v119 = vunpack.c.h.b16 %v32
  %v120 = vpack.c.b16 %v90, %v88
  %v121 = vpack.c.b16 %v91, %v89
  %v122 = vpack.c.b16 %v94, %v92
  %v123 = vpack.c.b16 %v95, %v93
  %v124 = vpack.c.b16 %v98, %v96
  %v125 = vpack.c.b16 %v99, %v97
  %v126 = vpack.c.b16 %v102, %v100
  %v127 = vpack.c.b16 %v103, %v101
  %v128 = vpack.c.b16 %v106, %v104
  %v129 = vpack.c.b16 %v107, %v105
  %v130 = vpack.c.b16 %v110, %v108
  %v131 = vpack.c.b16 %v111, %v109
  %v132 = vpack.c.b16 %v114, %v112
  %v133 = vpack.c.b16 %v115, %v113
  %v134 = vpack.c.b16 %v118, %v116
  %v135 = vpack.c.b16 %v119, %v117
  %v184 = vunpack.c.l.b16 %v33
  %v185 = vunpack.c.l.b16 %v34
  %v186 = vunpack.c.l.b16 %v35
  %v187 = vunpack.c.l.b16 %v36
  %v188 = vunpack.c.l.b16 %v37
  %v189 = vunpack.c.l.b16 %v38
  %v190 = vunpack.c.l.b16 %v39
  %v191 = vunpack.c.l.b16 %v40
  %v192 = vunpack.c.l.b16 %v41
  %v193 = vunpack.c.l.b16 %v42
  %v194 = vunpack.c.l.b16 %v43
  %v195 = vunpack.c.l.b16 %v44
  %v196 = vunpack.c.l.b16 %v45
  %v197 = vunpack.c.l.b16 %v46
  %v198 = vunpack.c.l.b16 %v47
  %v199 = vunpack.c.l.b16 %v48
  %v200 = vunpack.c.l.b16 %v49
  %v201 = vunpack.c.l.b16 %v50
  %v202 = vunpack.c.l.b16 %v51
  %v203 = vunpack.c.l.b16 %v52
  %v204 = vunpack.c.l.b16 %v53
  %v205 = vunpack.c.l.b16 %v54
  %v206 = vunpack.c.l.b16 %v55
  %v207 = vunpack.c.l.b16 %v56
  %v208 = vunpack.c.l.b16 %v57
  %v209 = vunpack.c.l.b16 %v58
  %v210 = vunpack.c.l.b16 %v59
  %v211 = vunpack.c.l.b16 %v60
  %v212 = vunpack.c.l.b16 %v61
  %v213 = vunpack.c.l.b16 %v62
  %v214 = vunpack.c.l.b16 %v63
  %v215 = vunpack.c.l.b16 %v64
  %v216 = vpack.c.b16 %v185, %v184
  %v217 = vpack.c.b16 %v187, %v186
  %v218 = vpack.c.b16 %v189, %v188
  %v219 = vpack.c.b16 %v191, %v190
  %v220 = vpack.c.b16 %v193, %v192
  %v221 = vpack.c.b16 %v195, %v194
  %v222 = vpack.c.b16 %v197, %v196
  %v223 = vpack.c.b16 %v199, %v198
  %v224 = vpack.c.b16 %v201, %v200
  %v225 = vpack.c.b16 %v203, %v202
  %v226 = vpack.c.b16 %v205, %v204
  %v227 = vpack.c.b16 %v207, %v206
  %v228 = vpack.c.b16 %v209, %v208
  %v229 = vpack.c.b16 %v211, %v210
  %v230 = vpack.c.b16 %v213, %v212
  %v231 = vpack.c.b16 %v215, %v214
  %248 = vmatprep.subr.bf16.mxu0 0
  %249 = vmatpush1.bf16.msra.mxu0 %v216
  %250 = vmatprep.subr.bf16.mxu0 0
  %251 = vmatpush1.bf16.msra.mxu0 %v217
  %252 = vmatprep.subr.bf16.mxu0 0
  %253 = vmatpush1.bf16.msra.mxu0 %v218
  %254 = vmatprep.subr.bf16.mxu0 0
  %255 = vmatpush1.bf16.msra.mxu0 %v219
  %256 = vmatprep.subr.bf16.mxu0 0
  %257 = vmatpush1.bf16.msra.mxu0 %v220
  %258 = vmatprep.subr.bf16.mxu0 0
  %259 = vmatpush1.bf16.msra.mxu0 %v221
  %260 = vmatprep.subr.bf16.mxu0 0
  %261 = vmatpush1.bf16.msra.mxu0 %v222
  %262 = vmatprep.subr.bf16.mxu0 0
  %263 = vmatpush1.bf16.msra.mxu0 %v223
  %264 = vmatprep.subr.bf16.mxu0 0
  %265 = vmatpush1.bf16.msra.mxu0 %v224
  %266 = vmatprep.subr.bf16.mxu0 0
  %267 = vmatpush1.bf16.msra.mxu0 %v225
  %268 = vmatprep.subr.bf16.mxu0 0
  %269 = vmatpush1.bf16.msra.mxu0 %v226
  %270 = vmatprep.subr.bf16.mxu0 0
  %271 = vmatpush1.bf16.msra.mxu0 %v227
  %272 = vmatprep.subr.bf16.mxu0 0
  %273 = vmatpush1.bf16.msra.mxu0 %v228
  %274 = vmatprep.subr.bf16.mxu0 0
  %275 = vmatpush1.bf16.msra.mxu0 %v229
  %276 = vmatprep.subr.bf16.mxu0 0
  %277 = vmatpush1.bf16.msra.mxu0 %v230
  %278 = vmatprep.subr.bf16.mxu0 0
  %279 = vmatpush1.bf16.msra.mxu0 %v231
  %280 = vmatprep.mubr.bf16.mxu0 %v121
  %281 = vmatmul.mubr.bf16.gmra.mrb[0].mxu0 %v120
  %v282 = vpop.f32.mrb[0].mxu0
  %v283 = vadd.f32 %v70, %v282
  %v284 = vpop.f32.mrb[0].mxu0
  %v285 = vpop.f32.mrb[0].mxu0
  %v286 = vadd.f32 %v70, %v285
  %v287 = vpop.f32.mrb[0].mxu0
  %288 = vmatprep.mubr.bf16.mxu0 %v123
  %289 = vmatmul.mubr.bf16.gmra.mrb[0].mxu0 %v122
  %v290 = vpop.f32.mrb[0].mxu0
  %v291 = vadd.f32 %v70, %v290
  %v292 = vpop.f32.mrb[0].mxu0
  %v293 = vpop.f32.mrb[0].mxu0
  %v294 = vadd.f32 %v70, %v293
  %v295 = vpop.f32.mrb[0].mxu0
  %296 = vmatprep.mubr.bf16.mxu0 %v125
  %297 = vmatmul.mubr.bf16.gmra.mrb[0].mxu0 %v124
  %v298 = vpop.f32.mrb[0].mxu0
  %v299 = vadd.f32 %v70, %v298
  %v300 = vpop.f32.mrb[0].mxu0
  %v301 = vpop.f32.mrb[0].mxu0
  %v302 = vadd.f32 %v70, %v301
  %v303 = vpop.f32.mrb[0].mxu0
  %304 = vmatprep.mubr.bf16.mxu0 %v127
  %305 = vmatmul.mubr.bf16.gmra.mrb[0].mxu0 %v126
  %v306 = vpop.f32.mrb[0].mxu0
  %v307 = vadd.f32 %v70, %v306
  %v308 = vpop.f32.mrb[0].mxu0
  %v309 = vpop.f32.mrb[0].mxu0
  %v310 = vadd.f32 %v70, %v309
  %v311 = vpop.f32.mrb[0].mxu0
  %312 = vmatprep.mubr.bf16.mxu0 %v129
  %313 = vmatmul.mubr.bf16.gmra.mrb[0].mxu0 %v128
  %v314 = vpop.f32.mrb[0].mxu0
  %v315 = vadd.f32 %v70, %v314
  %v316 = vpop.f32.mrb[0].mxu0
  %v317 = vpop.f32.mrb[0].mxu0
  %v318 = vadd.f32 %v70, %v317
  %v319 = vpop.f32.mrb[0].mxu0
  %320 = vmatprep.mubr.bf16.mxu0 %v131
  %321 = vmatmul.mubr.bf16.gmra.mrb[0].mxu0 %v130
  %v322 = vpop.f32.mrb[0].mxu0
  %v323 = vadd.f32 %v70, %v322
  %v324 = vpop.f32.mrb[0].mxu0
  %v325 = vpop.f32.mrb[0].mxu0
  %v326 = vadd.f32 %v70, %v325
  %v327 = vpop.f32.mrb[0].mxu0
  %328 = vmatprep.mubr.bf16.mxu0 %v133
  %329 = vmatmul.mubr.bf16.gmra.mrb[0].mxu0 %v132
  %v330 = vpop.f32.mrb[0].mxu0
  %v331 = vadd.f32 %v70, %v330
  %v332 = vpop.f32.mrb[0].mxu0
  %v333 = vpop.f32.mrb[0].mxu0
  %v334 = vadd.f32 %v70, %v333
  %v335 = vpop.f32.mrb[0].mxu0
  %336 = vmatprep.mubr.bf16.mxu0 %v135
  %337 = vmatmul.mubr.bf16.gmra.mrb[0].mxu0 %v134
  %v338 = vpop.f32.mrb[0].mxu0
  %v339 = vadd.f32 %v70, %v338
  %v340 = vpop.f32.mrb[0].mxu0
  %v341 = vpop.f32.mrb[0].mxu0
  %v342 = vadd.f32 %v70, %v341
  %v343 = vpop.f32.mrb[0].mxu0
  %344 = vdwg.mxu0
  %345 = vst [vmem:[%s3] sm:$0xff] %v283
  %346 = vst [vmem:[%s3 + $0x8] sm:$0xff] %v286
  %347 = vst [vmem:[%s3 + $0x10] sm:$0xff] %v291
  %348 = vst [vmem:[%s3 + $0x18] sm:$0xff] %v294
  %349 = vst [vmem:[%s3 + $0x20] sm:$0xff] %v299
  %350 = vst [vmem:[%s3 + $0x28] sm:$0xff] %v302
  %351 = vst [vmem:[%s3 + $0x30] sm:$0xff] %v307
  %352 = vst [vmem:[%s3 + $0x38] sm:$0xff] %v310
  %353 = vst [vmem:[%s3 + $0x40] sm:$0xff] %v315
  %354 = vst [vmem:[%s3 + $0x48] sm:$0xff] %v318
  %355 = vst [vmem:[%s3 + $0x50] sm:$0xff] %v323
  %356 = vst [vmem:[%s3 + $0x58] sm:$0xff] %v326
  %357 = vst [vmem:[%s3 + $0x60] sm:$0xff] %v331
  %358 = vst [vmem:[%s3 + $0x68] sm:$0xff] %v334
  %359 = vst [vmem:[%s3 + $0x70] sm:$0xff] %v339
  %360 = vst [vmem:[%s3 + $0x78] sm:$0xff] %v342
  %s361 = smul.u32 0, 128
  %v362 = vlaneseq
  %v363 = vshrl.u32 %v362, 7
  %v364 = vadd.s32 %v363, 8
  %v365 = vadd.s32 %v363, 16
  %v366 = vadd.s32 %v363, 24
  %v367 = vadd.s32 %v363, 32
  %v368 = vadd.s32 %v363, 40
  %v369 = vadd.s32 %v363, 48
  %v370 = vadd.s32 %v363, 56
  %v371 = vadd.s32 %v363, 64
  %v372 = vadd.s32 %v363, 72
  %v373 = vadd.s32 %v363, 80
  %v374 = vadd.s32 %v363, 88
  %v375 = vadd.s32 %v363, 96
  %v376 = vadd.s32 %v363, 104
  %v377 = vadd.s32 %v363, 112
  %v378 = vadd.s32 %v363, 120
  %v379 = vstv %s361
  %v380 = vadd.s32 %v379, %v363
  %v381 = vadd.s32 %v379, %v364
  %v382 = vadd.s32 %v379, %v365
  %v383 = vadd.s32 %v379, %v366
  %v384 = vadd.s32 %v379, %v367
  %v385 = vadd.s32 %v379, %v368
  %v386 = vadd.s32 %v379, %v369
  %v387 = vadd.s32 %v379, %v370
  %v388 = vadd.s32 %v379, %v371
  %v389 = vadd.s32 %v379, %v372
  %v390 = vadd.s32 %v379, %v373
  %v391 = vadd.s32 %v379, %v374
  %v392 = vadd.s32 %v379, %v375
  %v393 = vadd.s32 %v379, %v376
  %v394 = vadd.s32 %v379, %v377
  %v395 = vadd.s32 %v379, %v378
  %vm396 = vcmp.lt.s32.totalorder %v380, 128
  %vm397 = vcmp.lt.s32.totalorder %v381, 128
  %vm398 = vcmp.lt.s32.totalorder %v382, 128
  %vm399 = vcmp.lt.s32.totalorder %v383, 128
  %vm400 = vcmp.lt.s32.totalorder %v384, 128
  %vm401 = vcmp.lt.s32.totalorder %v385, 128
  %vm402 = vcmp.lt.s32.totalorder %v386, 128
  %vm403 = vcmp.lt.s32.totalorder %v387, 128
  %vm404 = vcmp.lt.s32.totalorder %v388, 128
  %vm405 = vcmp.lt.s32.totalorder %v389, 128
  %vm406 = vcmp.lt.s32.totalorder %v390, 128
  %vm407 = vcmp.lt.s32.totalorder %v391, 128
  %vm408 = vcmp.lt.s32.totalorder %v392, 128
  %vm409 = vcmp.lt.s32.totalorder %v393, 128
  %vm410 = vcmp.lt.s32.totalorder %v394, 128
  %vm411 = vcmp.lt.s32.totalorder %v395, 128
  %v412 = vsel %vm396, 1, 0
  %v413 = vsel %vm397, 1, 0
  %v414 = vsel %vm398, 1, 0
  %v415 = vsel %vm399, 1, 0
  %v416 = vsel %vm400, 1, 0
  %v417 = vsel %vm401, 1, 0
  %v418 = vsel %vm402, 1, 0
  %v419 = vsel %vm403, 1, 0
  %v420 = vsel %vm404, 1, 0
  %v421 = vsel %vm405, 1, 0
  %v422 = vsel %vm406, 1, 0
  %v423 = vsel %vm407, 1, 0
  %v424 = vsel %vm408, 1, 0
  %v425 = vsel %vm409, 1, 0
  %v426 = vsel %vm410, 1, 0
  %v427 = vsel %vm411, 1, 0
  %v428 = vcvt.s32.f32 %v412
  %v429 = vcvt.s32.f32 %v413
  %v430 = vcvt.s32.f32 %v414
  %v431 = vcvt.s32.f32 %v415
  %v432 = vcvt.s32.f32 %v416
  %v433 = vcvt.s32.f32 %v417
  %v434 = vcvt.s32.f32 %v418
  %v435 = vcvt.s32.f32 %v419
  %v436 = vcvt.s32.f32 %v420
  %v437 = vcvt.s32.f32 %v421
  %v438 = vcvt.s32.f32 %v422
  %v439 = vcvt.s32.f32 %v423
  %v440 = vcvt.s32.f32 %v424
  %v441 = vcvt.s32.f32 %v425
  %v442 = vcvt.s32.f32 %v426
  %v443 = vcvt.s32.f32 %v427
  %v444 = vmul.f32 %v283, %v428
  %v445 = vmul.f32 %v286, %v429
  %v446 = vmul.f32 %v291, %v430
  %v447 = vmul.f32 %v294, %v431
  %v448 = vmul.f32 %v299, %v432
  %v449 = vmul.f32 %v302, %v433
  %v450 = vmul.f32 %v307, %v434
  %v451 = vmul.f32 %v310, %v435
  %v452 = vmul.f32 %v315, %v436
  %v453 = vmul.f32 %v318, %v437
  %v454 = vmul.f32 %v323, %v438
  %v455 = vmul.f32 %v326, %v439
  %v456 = vmul.f32 %v331, %v440
  %v457 = vmul.f32 %v334, %v441
  %v458 = vmul.f32 %v339, %v442
  %v459 = vmul.f32 %v342, %v443
  %v460 = vadd.f32 %v444, %v445
  %v461 = vadd.f32 %v460, %v446
  %v462 = vadd.f32 %v461, %v447
  %v463 = vadd.f32 %v462, %v448
  %v464 = vadd.f32 %v463, %v449
  %v465 = vadd.f32 %v464, %v450
  %v466 = vadd.f32 %v465, %v451
  %v467 = vadd.f32 %v466, %v452
  %v468 = vadd.f32 %v467, %v453
  %v469 = vadd.f32 %v468, %v454
  %v470 = vadd.f32 %v469, %v455
  %v471 = vadd.f32 %v470, %v456
  %v472 = vadd.f32 %v471, %v457
  %v473 = vadd.f32 %v472, %v458
  %v474 = vadd.f32 %v473, %v459
  %v475 = vrot.slane %v474, 4
  %v476 = vadd.f32 %v474, %v475
  %v477 = vrot.slane %v476, 2
  %v478 = vadd.f32 %v476, %v477
  %v479 = vrot.slane %v478, 1
  %v480 = vadd.f32 %v478, %v479
  %v481 = vmul.f32 %v444, %v444
  %v482 = vmul.f32 %v445, %v445
  %v483 = vmul.f32 %v446, %v446
  %v484 = vmul.f32 %v447, %v447
  %v485 = vmul.f32 %v448, %v448
  %v486 = vmul.f32 %v449, %v449
  %v487 = vmul.f32 %v450, %v450
  %v488 = vmul.f32 %v451, %v451
  %v489 = vmul.f32 %v452, %v452
  %v490 = vmul.f32 %v453, %v453
  %v491 = vmul.f32 %v454, %v454
  %v492 = vmul.f32 %v455, %v455
  %v493 = vmul.f32 %v456, %v456
  %v494 = vmul.f32 %v457, %v457
  %v495 = vmul.f32 %v458, %v458
  %v496 = vmul.f32 %v459, %v459
  %v497 = vadd.f32 %v481, %v482
  %v498 = vadd.f32 %v497, %v483
  %v499 = vadd.f32 %v498, %v484
  %v500 = vadd.f32 %v499, %v485
  %v501 = vadd.f32 %v500, %v486
  %v502 = vadd.f32 %v501, %v487
  %v503 = vadd.f32 %v502, %v488
  %v504 = vadd.f32 %v503, %v489
  %v505 = vadd.f32 %v504, %v490
  %v506 = vadd.f32 %v505, %v491
  %v507 = vadd.f32 %v506, %v492
  %v508 = vadd.f32 %v507, %v493
  %v509 = vadd.f32 %v508, %v494
  %v510 = vadd.f32 %v509, %v495
  %v511 = vadd.f32 %v510, %v496
  %v512 = vrot.slane %v511, 4
  %v513 = vadd.f32 %v511, %v512
  %v514 = vrot.slane %v513, 2
  %v515 = vadd.f32 %v513, %v514
  %v516 = vrot.slane %v515, 1
  %v517 = vadd.f32 %v515, %v516
  %vm518 = vcmp.eq.s32.totalorder %v363, 0
  %v519 = vsel %vm518, 1, 0
  %vm520 = vcmp.eq.s32.totalorder %v519, 1
  %v521 = vsel %vm520, %v480, 0.0
  %vm522 = vcmp.eq.s32.totalorder %v363, 1
  %v523 = vsel %vm522, 1, 0
  %vm524 = vcmp.eq.s32.totalorder %v523, 1
  %v525 = vsel %vm524, %v517, 0.0
  %v526 = vadd.f32 %v521, %v525
  %527 = vst [vmem:[%s4] sm:$0xff] %v526
  // Predicated region
  $region14: #{generator_forward.17} parent=0 // pred_check
    _
  $region15: #{generator_forward.17} parent=0 // pred_check_branch
    %529 = sbr.rel (0) target = $region17
  $region16: #{generator_forward.17} parent=0 // pred_region
    _
  $region17: #{generator_forward.17} parent=0 // pred_fallthru
    _
  // Predicated region
  $region18: #{generator_forward.17} parent=0 // pred_check
    _
  $region19: #{generator_forward.17} parent=0 // pred_check_branch
    %531 = sbr.rel (0) target = $region21
  $region20: #{generator_forward.17} parent=0 // pred_region
    _
  $region21: #{generator_forward.17} parent=0 // pred_fallthru
    _
  // Predicated region
  $region22: #{generator_forward.17} parent=0 // pred_check
    _
  $region23: #{generator_forward.17} parent=0 // pred_check_branch
    %533 = sbr.rel (0) target = $region25
  $region24: #{generator_forward.17} parent=0 // pred_region
    _
  $region25: #{generator_forward.17} parent=0 // pred_fallthru
    _
  // Predicated region
  $region26: #{generator_forward.17} parent=0 // pred_check
    _
  $region27: #{generator_forward.17} parent=0 // pred_check_branch
    %535 = sbr.rel (0) target = $region29
  $region28: #{generator_forward.17} parent=0 // pred_region
    _
  $region29: #{generator_forward.17} parent=0 // pred_fallthru
    _

// kernel: generator_forward.20
$region0: #{generator_forward.20}
  #allocation0 [shape = 'u32[]', space=smem, size = 0x4, offset = 0x4, fixed_abs, tag = 'smem constant byte address 0x4 - core index']
  #allocation1 [shape = 'u32[144,128]{1,0:T(1,128)}', space=vmem, size = 0x12000, scoped, tag = 'internal scratch']
  %s0 = inlined_call_operand.vmem [shape: f32[4,8,128], index: 0, kind: input, shape index: {}]
  %s1 = inlined_call_operand.vmem [shape: f32[1,1,128], index: 1, kind: input, shape index: {}]
  %s2 = inlined_call_operand.vmem [shape: f32[1,1,128], index: 2, kind: input, shape index: {}]
  %s3 = inlined_call_operand.vmem [shape: f32[8,128], index: 3, kind: output, shape index: {}]
  %s4 = sld [smem:[#allocation0]]
  $region22: #{generator_forward.20} parent=0
    _
  %s6 = ssub.s32 1, %s4
  %s7 = scalar_select 0, %s6, %s4
  // Predicated region
  $region2: #{generator_forward.20} parent=0 // pred_check
    _
  $region3: #{generator_forward.20} parent=0 // pred_check_branch
    %9 = sbr.rel (0) target = $region5
  $region4: #{generator_forward.20} parent=0 // pred_region
    _
  $region5: #{generator_forward.20} parent=0 // pred_fallthru
    _
  // Predicated region
  $region6: #{generator_forward.20} parent=0 // pred_check
    _
  $region7: #{generator_forward.20} parent=0 // pred_check_branch
    %11 = sbr.rel (0) target = $region9
  $region8: #{generator_forward.20} parent=0 // pred_region
    _
  $region9: #{generator_forward.20} parent=0 // pred_fallthru
    _
  // Predicated region
  $region10: #{generator_forward.20} parent=0 // pred_check
    _
  $region11: #{generator_forward.20} parent=0 // pred_check_branch
    %13 = sbr.rel (0) target = $region13
  $region12: #{generator_forward.20} parent=0 // pred_region
    _
  $region13: #{generator_forward.20} parent=0 // pred_fallthru
    _
  %v14 = vld [vmem:[%s0] sm:$0xff]
  %v15 = vld [vmem:[%s0 + $0x8] sm:$0xff]
  %v16 = vld [vmem:[%s0 + $0x10] sm:$0xff]
  %v17 = vld [vmem:[%s0 + $0x18] sm:$0xff]
  %v18 = vld [vmem:[%s1] sm:$0x1]
  %v20 = vlaneseq
  %v21 = vshrl.u32 %v20, 7
  %v22 = vsub.s32 0, %v21
  %v23 = vrot.slane %v18, %v22
  %v25 = vmul.f32 %v14, %v23
  %v26 = vmul.f32 %v15, %v23
  %v27 = vmul.f32 %v16, %v23
  %v28 = vmul.f32 %v17, %v23
  %v29 = vld [vmem:[%s2] sm:$0x1]
  %v31 = vlaneseq
  %v32 = vshrl.u32 %v31, 7
  %v33 = vsub.s32 0, %v32
  %v34 = vrot.slane %v29, %v33
  %v36 = vadd.f32 %v25, %v34
  %v37 = vadd.f32 %v26, %v34
  %v38 = vadd.f32 %v27, %v34
  %v39 = vadd.f32 %v28, %v34
  %vm40 = vcmp.ge.f32.partialorder %v36, 0.0
  %vm41 = vcmp.ge.f32.partialorder %v37, 0.0
  %vm42 = vcmp.ge.f32.partialorder %v38, 0.0
  %vm43 = vcmp.ge.f32.partialorder %v39, 0.0
  %v44 = vmul.f32 %v36, 0.2
  %v45 = vmul.f32 %v37, 0.2
  %v46 = vmul.f32 %v38, 0.2
  %v47 = vmul.f32 %v39, 0.2
  %v48 = vsel %vm40, %v36, %v44
  %v49 = vsel %vm41, %v37, %v45
  %v50 = vsel %vm42, %v38, %v46
  %v51 = vsel %vm43, %v39, %v47
  %v52 = vmax.f32 %v48, %v49
  %v53 = vmax.f32 %v50, %v51
  %v54 = vmax.f32 %v52, %v53
  %55 = vst [vmem:[%s3] sm:$0xff] %v54
  // Predicated region
  $region14: #{generator_forward.20} parent=0 // pred_check
    _
  $region15: #{generator_forward.20} parent=0 // pred_check_branch
    %57 = sbr.rel (0) target = $region17
  $region16: #{generator_forward.20} parent=0 // pred_region
    _
  $region17: #{generator_forward.20} parent=0 // pred_fallthru
    _
  // Predicated region
  $region18: #{generator_forward.20} parent=0 // pred_check
    _
  $region19: #{generator_forward.20} parent=0 // pred_check_branch
    %59 = sbr.rel (0) target = $region21
  $region20: #{generator_forward.20} parent=0 // pred_region
    _
  $region21: #{generator_forward.20} parent=0 // pred_fallthru
    _

// kernel: tile.38
$region0: #{tile.38}
  #allocation0 [shape = 's32[1]{0}', space=sflag, size = 0x4, scoped, tag = 'scoped memory for tile.38']
  %s0 = inlined_call_operand.vmem [shape: f32[32], index: 0, kind: input, shape index: {}]
  %s1 = inlined_call_operand.vmem [shape: f32[4,32], index: 1, kind: output, shape index: {}]
  // Predicated region
  $region2: #{tile.38} parent=0 // pred_check
    _
  $region3: #{tile.38} parent=0 // pred_check_branch
    %3 = sbr.rel (0) target = $region5
  $region4: #{tile.38} parent=0 // pred_region
    _
  $region5: #{tile.38} parent=0 // pred_fallthru
    _
  %v4 = vld [vmem:[%s0] ss:$0 sm:$0xff]
  %5 = vst [vmem:[%s1] sm:$0xf] %v4

// kernel: generator_forward.19
$region0: #{generator_forward.19}
  #allocation0 [shape = 'u32[]', space=smem, size = 0x4, offset = 0x4, fixed_abs, tag = 'smem constant byte address 0x4 - core index']
  #allocation1 [shape = 'u32[144,128]{1,0:T(1,128)}', space=vmem, size = 0x12000, scoped, tag = 'internal scratch']
  %s0 = inlined_call_operand.vmem [shape: bf16[32,384], index: 0, kind: input, shape index: {}]
  %s1 = inlined_call_operand.vmem [shape: bf16[384,128], index: 1, kind: input, shape index: {}]
  %s2 = inlined_call_operand.vmem [shape: f32[1,128], index: 2, kind: input, shape index: {}]
  %s3 = inlined_call_operand.vmem [shape: f32[32,128], index: 3, kind: output, shape index: {0}]
  %s4 = inlined_call_operand.vmem [shape: f32[8,128], index: 4, kind: output, shape index: {1}]
  %5 = xla_tuple %s3, %s4
  %s6 = sld [smem:[#allocation0]]
  $region30: #{generator_forward.19} parent=0
    _
  %s8 = ssub.s32 1, %s6
  %s9 = scalar_select 0, %s8, %s6
  // Predicated region
  $region2: #{generator_forward.19} parent=0 // pred_check
    _
  $region3: #{generator_forward.19} parent=0 // pred_check_branch
    %11 = sbr.rel (0) target = $region5
  $region4: #{generator_forward.19} parent=0 // pred_region
    _
  $region5: #{generator_forward.19} parent=0 // pred_fallthru
    _
  // Predicated region
  $region6: #{generator_forward.19} parent=0 // pred_check
    _
  $region7: #{generator_forward.19} parent=0 // pred_check_branch
    %13 = sbr.rel (0) target = $region9
  $region8: #{generator_forward.19} parent=0 // pred_region
    _
  $region9: #{generator_forward.19} parent=0 // pred_fallthru
    _
  // Predicated region
  $region10: #{generator_forward.19} parent=0 // pred_check
    _
  $region11: #{generator_forward.19} parent=0 // pred_check_branch
    %15 = sbr.rel (0) target = $region13
  $region12: #{generator_forward.19} parent=0 // pred_region
    _
  $region13: #{generator_forward.19} parent=0 // pred_fallthru
    _
  %v17 = vld [vmem:[%s0] sm:$0xff]
  %v18 = vld [vmem:[%s0 + $0x8] sm:$0xf]
  %v19 = vld [vmem:[%s0 + $0xc] sm:$0xff]
  %v20 = vld [vmem:[%s0 + $0x14] sm:$0xf]
  %v21 = vld [vmem:[%s0 + $0x18] sm:$0xff]
  %v22 = vld [vmem:[%s0 + $0x20] sm:$0xf]
  %v23 = vld [vmem:[%s0 + $0x24] sm:$0xff]
  %v24 = vld [vmem:[%s0 + $0x2c] sm:$0xf]
  %v25 = vld [vmem:[%s1] sm:$0xf]
  %v26 = vld [vmem:[%s1 + $0x4] sm:$0xf]
  %v27 = vld [vmem:[%s1 + $0x8] sm:$0xf]
  %v28 = vld [vmem:[%s1 + $0xc] sm:$0xf]
  %v29 = vld [vmem:[%s1 + $0x10] sm:$0xf]
  %v30 = vld [vmem:[%s1 + $0x14] sm:$0xf]
  %v31 = vld [vmem:[%s1 + $0x18] sm:$0xf]
  %v32 = vld [vmem:[%s1 + $0x1c] sm:$0xf]
  %v33 = vld [vmem:[%s1 + $0x20] sm:$0xf]
  %v34 = vld [vmem:[%s1 + $0x24] sm:$0xf]
  %v35 = vld [vmem:[%s1 + $0x28] sm:$0xf]
  %v36 = vld [vmem:[%s1 + $0x2c] sm:$0xf]
  %v37 = vld [vmem:[%s1 + $0x30] sm:$0xf]
  %v38 = vld [vmem:[%s1 + $0x34] sm:$0xf]
  %v39 = vld [vmem:[%s1 + $0x38] sm:$0xf]
  %v40 = vld [vmem:[%s1 + $0x3c] sm:$0xf]
  %v41 = vld [vmem:[%s1 + $0x40] sm:$0xf]
  %v42 = vld [vmem:[%s1 + $0x44] sm:$0xf]
  %v43 = vld [vmem:[%s1 + $0x48] sm:$0xf]
  %v44 = vld [vmem:[%s1 + $0x4c] sm:$0xf]
  %v45 = vld [vmem:[%s1 + $0x50] sm:$0xf]
  %v46 = vld [vmem:[%s1 + $0x54] sm:$0xf]
  %v47 = vld [vmem:[%s1 + $0x58] sm:$0xf]
  %v48 = vld [vmem:[%s1 + $0x5c] sm:$0xf]
  %v49 = vld [vmem:[%s1 + $0x60] sm:$0xf]
  %v50 = vld [vmem:[%s1 + $0x64] sm:$0xf]
  %v51 = vld [vmem:[%s1 + $0x68] sm:$0xf]
  %v52 = vld [vmem:[%s1 + $0x6c] sm:$0xf]
  %v53 = vld [vmem:[%s1 + $0x70] sm:$0xf]
  %v54 = vld [vmem:[%s1 + $0x74] sm:$0xf]
  %v55 = vld [vmem:[%s1 + $0x78] sm:$0xf]
  %v56 = vld [vmem:[%s1 + $0x7c] sm:$0xf]
  %v57 = vld [vmem:[%s1 + $0x80] sm:$0xf]
  %v58 = vld [vmem:[%s1 + $0x84] sm:$0xf]
  %v59 = vld [vmem:[%s1 + $0x88] sm:$0xf]
  %v60 = vld [vmem:[%s1 + $0x8c] sm:$0xf]
  %v61 = vld [vmem:[%s1 + $0x90] sm:$0xf]
  %v62 = vld [vmem:[%s1 + $0x94] sm:$0xf]
  %v63 = vld [vmem:[%s1 + $0x98] sm:$0xf]
  %v64 = vld [vmem:[%s1 + $0x9c] sm:$0xf]
  %v65 = vld [vmem:[%s1 + $0xa0] sm:$0xf]
  %v66 = vld [vmem:[%s1 + $0xa4] sm:$0xf]
  %v67 = vld [vmem:[%s1 + $0xa8] sm:$0xf]
  %v68 = vld [vmem:[%s1 + $0xac] sm:$0xf]
  %v69 = vld [vmem:[%s1 + $0xb0] sm:$0xf]
  %v70 = vld [vmem:[%s1 + $0xb4] sm:$0xf]
  %v71 = vld [vmem:[%s1 + $0xb8] sm:$0xf]
  %v72 = vld [vmem:[%s1 + $0xbc] sm:$0xf]
  %v73 = vld [vmem:[%s2] sm:$0x1]
  %v75 = vlaneseq
  %v76 = vshrl.u32 %v75, 7
  %v77 = vsub.s32 0, %v76
  %v78 = vrot.slane %v73, %v77
  %v88 = vunpack.c.l.b16 %v17
  %v89 = vunpack.c.h.b16 %v17
  %v90 = vunpack.c.l.b16 %v18
  %v91 = vunpack.c.l.b16 %v19
  %v92 = vunpack.c.h.b16 %v19
  %v93 = vunpack.c.l.b16 %v20
  %v94 = vunpack.c.l.b16 %v21
  %v95 = vunpack.c.h.b16 %v21
  %v96 = vunpack.c.l.b16 %v22
  %v97 = vunpack.c.l.b16 %v23
  %v98 = vunpack.c.h.b16 %v23
  %v99 = vunpack.c.l.b16 %v24
  %v100 = vpack.c.b16 %v91, %v88
  %v101 = vpack.c.b16 %v92, %v89
  %v102 = vpack.c.b16 %v93, %v90
  %v103 = vpack.c.b16 %v97, %v94
  %v104 = vpack.c.b16 %v98, %v95
  %v105 = vpack.c.b16 %v99, %v96
  %v160 = vunpack.c.l.b16 %v25
  %v161 = vunpack.c.l.b16 %v26
  %v162 = vunpack.c.l.b16 %v27
  %v163 = vunpack.c.l.b16 %v28
  %v164 = vunpack.c.l.b16 %v29
  %v165 = vunpack.c.l.b16 %v30
  %v166 = vunpack.c.l.b16 %v31
  %v167 = vunpack.c.l.b16 %v32
  %v168 = vunpack.c.l.b16 %v33
  %v169 = vunpack.c.l.b16 %v34
  %v170 = vunpack.c.l.b16 %v35
  %v171 = vunpack.c.l.b16 %v36
  %v172 = vunpack.c.l.b16 %v37
  %v173 = vunpack.c.l.b16 %v38
  %v174 = vunpack.c.l.b16 %v39
  %v175 = vunpack.c.l.b16 %v40
  %v176 = vunpack.c.l.b16 %v41
  %v177 = vunpack.c.l.b16 %v42
  %v178 = vunpack.c.l.b16 %v43
  %v179 = vunpack.c.l.b16 %v44
  %v180 = vunpack.c.l.b16 %v45
  %v181 = vunpack.c.l.b16 %v46
  %v182 = vunpack.c.l.b16 %v47
  %v183 = vunpack.c.l.b16 %v48
  %v184 = vunpack.c.l.b16 %v49
  %v185 = vunpack.c.l.b16 %v50
  %v186 = vunpack.c.l.b16 %v51
  %v187 = vunpack.c.l.b16 %v52
  %v188 = vunpack.c.l.b16 %v53
  %v189 = vunpack.c.l.b16 %v54
  %v190 = vunpack.c.l.b16 %v55
  %v191 = vunpack.c.l.b16 %v56
  %v192 = vunpack.c.l.b16 %v57
  %v193 = vunpack.c.l.b16 %v58
  %v194 = vunpack.c.l.b16 %v59
  %v195 = vunpack.c.l.b16 %v60
  %v196 = vunpack.c.l.b16 %v61
  %v197 = vunpack.c.l.b16 %v62
  %v198 = vunpack.c.l.b16 %v63
  %v199 = vunpack.c.l.b16 %v64
  %v200 = vunpack.c.l.b16 %v65
  %v201 = vunpack.c.l.b16 %v66
  %v202 = vunpack.c.l.b16 %v67
  %v203 = vunpack.c.l.b16 %v68
  %v204 = vunpack.c.l.b16 %v69
  %v205 = vunpack.c.l.b16 %v70
  %v206 = vunpack.c.l.b16 %v71
  %v207 = vunpack.c.l.b16 %v72
  %v208 = vpack.c.b16 %v161, %v160
  %v209 = vpack.c.b16 %v163, %v162
  %v210 = vpack.c.b16 %v165, %v164
  %v211 = vpack.c.b16 %v167, %v166
  %v212 = vpack.c.b16 %v169, %v168
  %v213 = vpack.c.b16 %v171, %v170
  %v214 = vpack.c.b16 %v173, %v172
  %v215 = vpack.c.b16 %v175, %v174
  %v216 = vpack.c.b16 %v177, %v176
  %v217 = vpack.c.b16 %v179, %v178
  %v218 = vpack.c.b16 %v181, %v180
  %v219 = vpack.c.b16 %v183, %v182
  %v220 = vpack.c.b16 %v185, %v184
  %v221 = vpack.c.b16 %v187, %v186
  %v222 = vpack.c.b16 %v189, %v188
  %v223 = vpack.c.b16 %v191, %v190
  %v224 = vpack.c.b16 %v193, %v192
  %v225 = vpack.c.b16 %v195, %v194
  %v226 = vpack.c.b16 %v197, %v196
  %v227 = vpack.c.b16 %v199, %v198
  %v228 = vpack.c.b16 %v201, %v200
  %v229 = vpack.c.b16 %v203, %v202
  %v230 = vpack.c.b16 %v205, %v204
  %v231 = vpack.c.b16 %v207, %v206
  %256 = vmatprep.subr.bf16.mxu0 0
  %257 = vmatpush1.bf16.msra.mxu0 %v208
  %258 = vmatprep.subr.bf16.mxu0 0
  %259 = vmatpush1.bf16.msra.mxu0 %v209
  %260 = vmatprep.subr.bf16.mxu0 0
  %261 = vmatpush1.bf16.msra.mxu0 %v210
  %262 = vmatprep.subr.bf16.mxu0 0
  %263 = vmatpush1.bf16.msra.mxu0 %v211
  %264 = vmatprep.subr.bf16.mxu0 0
  %265 = vmatpush1.bf16.msra.mxu0 %v212
  %266 = vmatprep.subr.bf16.mxu0 0
  %267 = vmatpush1.bf16.msra.mxu0 %v213
  %268 = vmatprep.subr.bf16.mxu0 0
  %269 = vmatpush1.bf16.msra.mxu0 %v214
  %270 = vmatprep.subr.bf16.mxu0 0
  %271 = vmatpush1.bf16.msra.mxu0 %v215
  %272 = vmatprep.subr.bf16.mxu0 0
  %273 = vmatpush1.bf16.msra.mxu0 %v216
  %274 = vmatprep.subr.bf16.mxu0 0
  %275 = vmatpush1.bf16.msra.mxu0 %v217
  %276 = vmatprep.subr.bf16.mxu0 0
  %277 = vmatpush1.bf16.msra.mxu0 %v218
  %278 = vmatprep.subr.bf16.mxu0 0
  %279 = vmatpush1.bf16.msra.mxu0 %v219
  %280 = vmatprep.subr.bf16.mxu0 0
  %281 = vmatpush1.bf16.msra.mxu0 %v220
  %282 = vmatprep.subr.bf16.mxu0 0
  %283 = vmatpush1.bf16.msra.mxu0 %v221
  %284 = vmatprep.subr.bf16.mxu0 0
  %285 = vmatpush1.bf16.msra.mxu0 %v222
  %286 = vmatprep.subr.bf16.mxu0 0
  %287 = vmatpush1.bf16.msra.mxu0 %v223
  %288 = vmatprep.mubr.bf16.mxu0 %v101
  %289 = vmatmul.mubr.bf16.gmra.mrb[0].mxu0 %v100
  %v290 = vpop.f32.mrb[0].mxu0
  %v291 = vadd.f32 %v78, %v290
  %v292 = vpop.f32.mrb[0].mxu0
  %v293 = vpop.f32.mrb[0].mxu0
  %v294 = vadd.f32 %v78, %v293
  %v295 = vpop.f32.mrb[0].mxu0
  %296 = vmatprep.mubr.bf16.mxu0 %v104
  %297 = vmatmul.mubr.bf16.gmra.mrb[0].mxu0 %v103
  %v298 = vpop.f32.mrb[0].mxu0
  %v299 = vadd.f32 %v78, %v298
  %v300 = vpop.f32.mrb[0].mxu0
  %v301 = vpop.f32.mrb[0].mxu0
  %v302 = vadd.f32 %v78, %v301
  %v303 = vpop.f32.mrb[0].mxu0
  %304 = vdwg.mxu0
  %305 = vmatprep.subr.bf16.mxu0 0
  %306 = vmatpush1.bf16.msra.mxu0 %v224
  %307 = vmatprep.subr.bf16.mxu0 0
  %308 = vmatpush1.bf16.msra.mxu0 %v225
  %309 = vmatprep.subr.bf16.mxu0 0
  %310 = vmatpush1.bf16.msra.mxu0 %v226
  %311 = vmatprep.subr.bf16.mxu0 0
  %312 = vmatpush1.bf16.msra.mxu0 %v227
  %313 = vmatprep.subr.bf16.mxu0 0
  %314 = vmatpush1.bf16.msra.mxu0 %v228
  %315 = vmatprep.subr.bf16.mxu0 0
  %316 = vmatpush1.bf16.msra.mxu0 %v229
  %317 = vmatprep.subr.bf16.mxu0 0
  %318 = vmatpush1.bf16.msra.mxu0 %v230
  %319 = vmatprep.subr.bf16.mxu0 0
  %320 = vmatpush1.bf16.msra.mxu0 %v231
  %321 = vmatprep.subr.bf16.mxu0 0
  %322 = vmatpush1.bf16.msra.mxu0 0
  %323 = vmatprep.subr.bf16.mxu0 0
  %324 = vmatpush1.bf16.msra.mxu0 0
  %325 = vmatprep.subr.bf16.mxu0 0
  %326 = vmatpush1.bf16.msra.mxu0 0
  %327 = vmatprep.subr.bf16.mxu0 0
  %328 = vmatpush1.bf16.msra.mxu0 0
  %329 = vmatprep.subr.bf16.mxu0 0
  %330 = vmatpush1.bf16.msra.mxu0 0
  %331 = vmatprep.subr.bf16.mxu0 0
  %332 = vmatpush1.bf16.msra.mxu0 0
  %333 = vmatprep.subr.bf16.mxu0 0
  %334 = vmatpush1.bf16.msra.mxu0 0
  %335 = vmatprep.subr.bf16.mxu0 0
  %336 = vmatpush1.bf16.msra.mxu0 0
  %337 = vmatprep.mubr.bf16.mxu0 0
  %338 = vmatmul.mubr.bf16.gmra.mrb[0].mxu0 %v102
  %v339 = vpop.f32.mrb[0].mxu0
  %v340 = vadd.f32 %v291, %v339
  %v341 = vpop.f32.mrb[0].mxu0
  %v342 = vpop.f32.mrb[0].mxu0
  %v343 = vadd.f32 %v294, %v342
  %v344 = vpop.f32.mrb[0].mxu0
  %345 = vmatprep.mubr.bf16.mxu0 0
  %346 = vmatmul.mubr.bf16.gmra.mrb[0].mxu0 %v105
  %v347 = vpop.f32.mrb[0].mxu0
  %v348 = vadd.f32 %v299, %v347
  %v349 = vpop.f32.mrb[0].mxu0
  %v350 = vpop.f32.mrb[0].mxu0
  %v351 = vadd.f32 %v302, %v350
  %v352 = vpop.f32.mrb[0].mxu0
  %353 = vdwg.mxu0
  %354 = vst [vmem:[%s3] sm:$0xff] %v340
  %355 = vst [vmem:[%s3 + $0x8] sm:$0xff] %v343
  %356 = vst [vmem:[%s3 + $0x10] sm:$0xff] %v348
  %357 = vst [vmem:[%s3 + $0x18] sm:$0xff] %v351
  %s358 = smul.u32 0, 32
  %v359 = vlaneseq
  %v360 = vshrl.u32 %v359, 7
  %v361 = vadd.s32 %v360, 8
  %v362 = vadd.s32 %v360, 16
  %v363 = vadd.s32 %v360, 24
  %v364 = vstv %s358
  %v365 = vadd.s32 %v364, %v360
  %v366 = vadd.s32 %v364, %v361
  %v367 = vadd.s32 %v364, %v362
  %v368 = vadd.s32 %v364, %v363
  %vm369 = vcmp.lt.s32.totalorder %v365, 32
  %vm370 = vcmp.lt.s32.totalorder %v366, 32
  %vm371 = vcmp.lt.s32.totalorder %v367, 32
  %vm372 = vcmp.lt.s32.totalorder %v368, 32
  %v373 = vsel %vm369, 1, 0
  %v374 = vsel %vm370, 1, 0
  %v375 = vsel %vm371, 1, 0
  %v376 = vsel %vm372, 1, 0
  %v377 = vcvt.s32.f32 %v373
  %v378 = vcvt.s32.f32 %v374
  %v379 = vcvt.s32.f32 %v375
  %v380 = vcvt.s32.f32 %v376
  %v381 = vmul.f32 %v340, %v377
  %v382 = vmul.f32 %v343, %v378
  %v383 = vmul.f32 %v348, %v379
  %v384 = vmul.f32 %v351, %v380
  %v385 = vadd.f32 %v381, %v382
  %v386 = vadd.f32 %v385, %v383
  %v387 = vadd.f32 %v386, %v384
  %v388 = vrot.slane %v387, 4
  %v389 = vadd.f32 %v387, %v388
  %v390 = vrot.slane %v389, 2
  %v391 = vadd.f32 %v389, %v390
  %v392 = vrot.slane %v391, 1
  %v393 = vadd.f32 %v391, %v392
  %v394 = vmul.f32 %v381, %v381
  %v395 = vmul.f32 %v382, %v382
  %v396 = vmul.f32 %v383, %v383
  %v397 = vmul.f32 %v384, %v384
  %v398 = vadd.f32 %v394, %v395
  %v399 = vadd.f32 %v398, %v396
  %v400 = vadd.f32 %v399, %v397
  %v401 = vrot.slane %v400, 4
  %v402 = vadd.f32 %v400, %v401
  %v403 = vrot.slane %v402, 2
  %v404 = vadd.f32 %v402, %v403
  %v405 = vrot.slane %v404, 1
  %v406 = vadd.f32 %v404, %v405
  %vm407 = vcmp.eq.s32.totalorder %v360, 0
  %v408 = vsel %vm407, 1, 0
  %vm409 = vcmp.eq.s32.totalorder %v408, 1
  %v410 = vsel %vm409, %v393, 0.0
  %vm411 = vcmp.eq.s32.totalorder %v360, 1
  %v412 = vsel %vm411, 1, 0
  %vm413 = vcmp.eq.s32.totalorder %v412, 1
  %v414 = vsel %vm413, %v406, 0.0
  %v415 = vadd.f32 %v410, %v414
  %416 = vst [vmem:[%s4] sm:$0xff] %v415
  // Predicated region
  $region14: #{generator_forward.19} parent=0 // pred_check
    _
  $region15: #{generator_forward.19} parent=0 // pred_check_branch
    %418 = sbr.rel (0) target = $region17
  $region16: #{generator_forward.19} parent=0 // pred_region
    _
  $region17: #{generator_forward.19} parent=0 // pred_fallthru
    _
  // Predicated region
  $region18: #{generator_forward.19} parent=0 // pred_check
    _
  $region19: #{generator_forward.19} parent=0 // pred_check_branch
    %420 = sbr.rel (0) target = $region21
  $region20: #{generator_forward.19} parent=0 // pred_region
    _
  $region21: #{generator_forward.19} parent=0 // pred_fallthru
    _
  // Predicated region
  $region22: #{generator_forward.19} parent=0 // pred_check
    _
  $region23: #{generator_forward.19} parent=0 // pred_check_branch
    %422 = sbr.rel (0) target = $region25
  $region24: #{generator_forward.19} parent=0 // pred_region
    _
  $region25: #{generator_forward.19} parent=0 // pred_fallthru
    _
  // Predicated region
  $region26: #{generator_forward.19} parent=0 // pred_check
    _
  $region27: #{generator_forward.19} parent=0 // pred_check_branch
    %424 = sbr.rel (0) target = $region29
  $region28: #{generator_forward.19} parent=0 // pred_region
    _
  $region29: #{generator_forward.19} parent=0 // pred_fallthru
    _

// kernel: generator_forward.22
$region0: #{generator_forward.22}
  #allocation0 [shape = 'u32[]', space=smem, size = 0x4, offset = 0x4, fixed_abs, tag = 'smem constant byte address 0x4 - core index']
  #allocation1 [shape = 'u32[144,128]{1,0:T(1,128)}', space=vmem, size = 0x12000, scoped, tag = 'internal scratch']
  %s0 = inlined_call_operand.vmem [shape: f32[1,8,128], index: 0, kind: input, shape index: {}]
  %s1 = inlined_call_operand.vmem [shape: f32[1,1,128], index: 1, kind: input, shape index: {}]
  %s2 = inlined_call_operand.vmem [shape: f32[1,1,128], index: 2, kind: input, shape index: {}]
  %s3 = inlined_call_operand.vmem [shape: f32[8,128], index: 3, kind: output, shape index: {}]
  %s4 = sld [smem:[#allocation0]]
  $region22: #{generator_forward.22} parent=0
    _
  %s6 = ssub.s32 1, %s4
  %s7 = scalar_select 0, %s6, %s4
  // Predicated region
  $region2: #{generator_forward.22} parent=0 // pred_check
    _
  $region3: #{generator_forward.22} parent=0 // pred_check_branch
    %9 = sbr.rel (0) target = $region5
  $region4: #{generator_forward.22} parent=0 // pred_region
    _
  $region5: #{generator_forward.22} parent=0 // pred_fallthru
    _
  // Predicated region
  $region6: #{generator_forward.22} parent=0 // pred_check
    _
  $region7: #{generator_forward.22} parent=0 // pred_check_branch
    %11 = sbr.rel (0) target = $region9
  $region8: #{generator_forward.22} parent=0 // pred_region
    _
  $region9: #{generator_forward.22} parent=0 // pred_fallthru
    _
  // Predicated region
  $region10: #{generator_forward.22} parent=0 // pred_check
    _
  $region11: #{generator_forward.22} parent=0 // pred_check_branch
    %13 = sbr.rel (0) target = $region13
  $region12: #{generator_forward.22} parent=0 // pred_region
    _
  $region13: #{generator_forward.22} parent=0 // pred_fallthru
    _
  %v14 = vld [vmem:[%s0] sm:$0xff]
  %v15 = vld [vmem:[%s1] sm:$0x1]
  %v17 = vlaneseq
  %v18 = vshrl.u32 %v17, 7
  %v19 = vsub.s32 0, %v18
  %v20 = vrot.slane %v15, %v19
  %v22 = vmul.f32 %v14, %v20
  %v23 = vld [vmem:[%s2] sm:$0x1]
  %v25 = vlaneseq
  %v26 = vshrl.u32 %v25, 7
  %v27 = vsub.s32 0, %v26
  %v28 = vrot.slane %v23, %v27
  %v30 = vadd.f32 %v22, %v28
  %v31 = vmax.f32 %v30, 0.0
  %32 = vst [vmem:[%s3] sm:$0xff] %v31
  // Predicated region
  $region14: #{generator_forward.22} parent=0 // pred_check
    _
  $region15: #{generator_forward.22} parent=0 // pred_check_branch
    %34 = sbr.rel (0) target = $region17
  $region16: #{generator_forward.22} parent=0 // pred_region
    _
  $region17: #{generator_forward.22} parent=0 // pred_fallthru
    _
  // Predicated region
  $region18: #{generator_forward.22} parent=0 // pred_check
    _
  $region19: #{generator_forward.22} parent=0 // pred_check_branch
    %36 = sbr.rel (0) target = $region21
  $region20: #{generator_forward.22} parent=0 // pred_region
    _
  $region21: #{generator_forward.22} parent=0 // pred_fallthru
    _

// kernel: tile.48
$region0: #{tile.48}
  #allocation0 [shape = 's32[1]{0}', space=sflag, size = 0x4, scoped, tag = 'scoped memory for tile.48']
  %s0 = inlined_call_operand.vmem [shape: f32[16], index: 0, kind: input, shape index: {}]
  %s1 = inlined_call_operand.vmem [shape: f32[4,16], index: 1, kind: output, shape index: {}]
  // Predicated region
  $region2: #{tile.48} parent=0 // pred_check
    _
  $region3: #{tile.48} parent=0 // pred_check_branch
    %3 = sbr.rel (0) target = $region5
  $region4: #{tile.48} parent=0 // pred_region
    _
  $region5: #{tile.48} parent=0 // pred_fallthru
    _
  %v4 = vld [vmem:[%s0] ss:$0 sm:$0xff]
  %5 = vst [vmem:[%s1] sm:$0xf] %v4

// kernel: tile.49
$region0: #{tile.49}
  %s0 = inlined_call_operand.vmem [shape: f32[4,16], index: 0, kind: input, shape index: {}]
  %s1 = inlined_call_operand.vmem [shape: f32[64], index: 1, kind: output, shape index: {}]
  $region1: #{tile.49} parent=0
    #allocation0 [shape = 'u8[4096]{0}', space=vmem, size = 0x1000, scoped, tag = 'scoped mem for output reshape']
    #allocation1 [shape = 'u8[4096]{0}', space=vmem, size = 0x1000, scoped, tag = 'scoped mem for input reshape']
    %s3 = sshllo.u32 0, 4
    %v4 = vld [vmem:[%s0] sm:%s3]
    %5 = vst [vmem:[#allocation1] sm:%s3] %v4
    %v6 = vld [vmem:[#allocation1] sm:$0x1]
    %vm7 = vcmask 130048
    %8 = vst.msk [vmem:[#allocation0] sm:$0x1] %vm7, %v6
    %s9 = scalar_lea.vmem [#allocation1], 3
    %v10 = vld [vmem:[%s9] sm:$0x1]
    %11 = vrot.lane.b32.xlu0 %v10, 48
    %v12 = vpop.permute.xlu0 %11
    %vm13 = vcmask 523648
    %14 = vst.msk [vmem:[#allocation0] sm:$0x1] %vm13, %v12
    %s15 = scalar_lea.vmem [#allocation1], 2
    %v16 = vld [vmem:[%s15] sm:$0x1]
    %17 = vrot.lane.b32.xlu0 %v16, 32
    %v18 = vpop.permute.xlu0 %17
    %vm19 = vcmask 392448
    %20 = vst.msk [vmem:[#allocation0] sm:$0x1] %vm19, %v18
    %s21 = scalar_lea.vmem [#allocation1], 1
    %v22 = vld [vmem:[%s21] sm:$0x1]
    %23 = vrot.lane.b32.xlu0 %v22, 16
    %v24 = vpop.permute.xlu0 %23
    %vm25 = vcmask 261248
    %26 = vst.msk [vmem:[#allocation0] sm:$0x1] %vm25, %v24
    %s28 = sshllo.u32 0, 1
    %v30 = vld [vmem:[#allocation0] sm:%s28]
    %s31 = sshllo.u32 0, 1
    %32 = vst [vmem:[%s1] sm:%s31] %v30

// kernel: generator_forward.21
$region0: #{generator_forward.21}
  #allocation0 [shape = 'u32[]', space=smem, size = 0x4, offset = 0x4, fixed_abs, tag = 'smem constant byte address 0x4 - core index']
  #allocation1 [shape = 'u32[144,128]{1,0:T(1,128)}', space=vmem, size = 0x12000, scoped, tag = 'internal scratch']
  %s0 = inlined_call_operand.vmem [shape: bf16[16,640], index: 0, kind: input, shape index: {}]
  %s1 = inlined_call_operand.vmem [shape: bf16[640,128], index: 1, kind: input, shape index: {}]
  %s2 = inlined_call_operand.vmem [shape: f32[1,128], index: 2, kind: input, shape index: {}]
  %s3 = inlined_call_operand.vmem [shape: f32[16,128], index: 3, kind: output, shape index: {0}]
  %s4 = inlined_call_operand.vmem [shape: f32[8,128], index: 4, kind: output, shape index: {1}]
  %5 = xla_tuple %s3, %s4
  %s6 = sld [smem:[#allocation0]]
  $region30: #{generator_forward.21} parent=0
    _
  %s8 = ssub.s32 1, %s6
  %s9 = scalar_select 0, %s8, %s6
  // Predicated region
  $region2: #{generator_forward.21} parent=0 // pred_check
    _
  $region3: #{generator_forward.21} parent=0 // pred_check_branch
    %11 = sbr.rel (0) target = $region5
  $region4: #{generator_forward.21} parent=0 // pred_region
    _
  $region5: #{generator_forward.21} parent=0 // pred_fallthru
    _
  // Predicated region
  $region6: #{generator_forward.21} parent=0 // pred_check
    _
  $region7: #{generator_forward.21} parent=0 // pred_check_branch
    %13 = sbr.rel (0) target = $region9
  $region8: #{generator_forward.21} parent=0 // pred_region
    _
  $region9: #{generator_forward.21} parent=0 // pred_fallthru
    _
  // Predicated region
  $region10: #{generator_forward.21} parent=0 // pred_check
    _
  $region11: #{generator_forward.21} parent=0 // pred_check_branch
    %15 = sbr.rel (0) target = $region13
  $region12: #{generator_forward.21} parent=0 // pred_region
    _
  $region13: #{generator_forward.21} parent=0 // pred_fallthru
    _
  %v17 = vld [vmem:[%s0] sm:$0xff]
  %v18 = vld [vmem:[%s0 + $0x8] sm:$0xff]
  %v19 = vld [vmem:[%s0 + $0x10] sm:$0xf]
  %v20 = vld [vmem:[%s0 + $0x14] sm:$0xff]
  %v21 = vld [vmem:[%s0 + $0x1c] sm:$0xff]
  %v22 = vld [vmem:[%s0 + $0x24] sm:$0xf]
  %v23 = vld [vmem:[%s1] sm:$0xf]
  %v24 = vld [vmem:[%s1 + $0x4] sm:$0xf]
  %v25 = vld [vmem:[%s1 + $0x8] sm:$0xf]
  %v26 = vld [vmem:[%s1 + $0xc] sm:$0xf]
  %v27 = vld [vmem:[%s1 + $0x10] sm:$0xf]
  %v28 = vld [vmem:[%s1 + $0x14] sm:$0xf]
  %v29 = vld [vmem:[%s1 + $0x18] sm:$0xf]
  %v30 = vld [vmem:[%s1 + $0x1c] sm:$0xf]
  %v31 = vld [vmem:[%s1 + $0x20] sm:$0xf]
  %v32 = vld [vmem:[%s1 + $0x24] sm:$0xf]
  %v33 = vld [vmem:[%s1 + $0x28] sm:$0xf]
  %v34 = vld [vmem:[%s1 + $0x2c] sm:$0xf]
  %v35 = vld [vmem:[%s1 + $0x30] sm:$0xf]
  %v36 = vld [vmem:[%s1 + $0x34] sm:$0xf]
  %v37 = vld [vmem:[%s1 + $0x38] sm:$0xf]
  %v38 = vld [vmem:[%s1 + $0x3c] sm:$0xf]
  %v39 = vld [vmem:[%s1 + $0x40] sm:$0xf]
  %v40 = vld [vmem:[%s1 + $0x44] sm:$0xf]
  %v41 = vld [vmem:[%s1 + $0x48] sm:$0xf]
  %v42 = vld [vmem:[%s1 + $0x4c] sm:$0xf]
  %v43 = vld [vmem:[%s1 + $0x50] sm:$0xf]
  %v44 = vld [vmem:[%s1 + $0x54] sm:$0xf]
  %v45 = vld [vmem:[%s1 + $0x58] sm:$0xf]
  %v46 = vld [vmem:[%s1 + $0x5c] sm:$0xf]
  %v47 = vld [vmem:[%s1 + $0x60] sm:$0xf]
  %v48 = vld [vmem:[%s1 + $0x64] sm:$0xf]
  %v49 = vld [vmem:[%s1 + $0x68] sm:$0xf]
  %v50 = vld [vmem:[%s1 + $0x6c] sm:$0xf]
  %v51 = vld [vmem:[%s1 + $0x70] sm:$0xf]
  %v52 = vld [vmem:[%s1 + $0x74] sm:$0xf]
  %v53 = vld [vmem:[%s1 + $0x78] sm:$0xf]
  %v54 = vld [vmem:[%s1 + $0x7c] sm:$0xf]
  %v55 = vld [vmem:[%s1 + $0x80] sm:$0xf]
  %v56 = vld [vmem:[%s1 + $0x84] sm:$0xf]
  %v57 = vld [vmem:[%s1 + $0x88] sm:$0xf]
  %v58 = vld [vmem:[%s1 + $0x8c] sm:$0xf]
  %v59 = vld [vmem:[%s1 + $0x90] sm:$0xf]
  %v60 = vld [vmem:[%s1 + $0x94] sm:$0xf]
  %v61 = vld [vmem:[%s1 + $0x98] sm:$0xf]
  %v62 = vld [vmem:[%s1 + $0x9c] sm:$0xf]
  %v63 = vld [vmem:[%s1 + $0xa0] sm:$0xf]
  %v64 = vld [vmem:[%s1 + $0xa4] sm:$0xf]
  %v65 = vld [vmem:[%s1 + $0xa8] sm:$0xf]
  %v66 = vld [vmem:[%s1 + $0xac] sm:$0xf]
  %v67 = vld [vmem:[%s1 + $0xb0] sm:$0xf]
  %v68 = vld [vmem:[%s1 + $0xb4] sm:$0xf]
  %v69 = vld [vmem:[%s1 + $0xb8] sm:$0xf]
  %v70 = vld [vmem:[%s1 + $0xbc] sm:$0xf]
  %v71 = vld [vmem:[%s1 + $0xc0] sm:$0xf]
  %v72 = vld [vmem:[%s1 + $0xc4] sm:$0xf]
  %v73 = vld [vmem:[%s1 + $0xc8] sm:$0xf]
  %v74 = vld [vmem:[%s1 + $0xcc] sm:$0xf]
  %v75 = vld [vmem:[%s1 + $0xd0] sm:$0xf]
  %v76 = vld [vmem:[%s1 + $0xd4] sm:$0xf]
  %v77 = vld [vmem:[%s1 + $0xd8] sm:$0xf]
  %v78 = vld [vmem:[%s1 + $0xdc] sm:$0xf]
  %v79 = vld [vmem:[%s1 + $0xe0] sm:$0xf]
  %v80 = vld [vmem:[%s1 + $0xe4] sm:$0xf]
  %v81 = vld [vmem:[%s1 + $0xe8] sm:$0xf]
  %v82 = vld [vmem:[%s1 + $0xec] sm:$0xf]
  %v83 = vld [vmem:[%s1 + $0xf0] sm:$0xf]
  %v84 = vld [vmem:[%s1 + $0xf4] sm:$0xf]
  %v85 = vld [vmem:[%s1 + $0xf8] sm:$0xf]
  %v86 = vld [vmem:[%s1 + $0xfc] sm:$0xf]
  %v87 = vld [vmem:[%s1 + $0x100] sm:$0xf]
  %v88 = vld [vmem:[%s1 + $0x104] sm:$0xf]
  %v89 = vld [vmem:[%s1 + $0x108] sm:$0xf]
  %v90 = vld [vmem:[%s1 + $0x10c] sm:$0xf]
  %v91 = vld [vmem:[%s1 + $0x110] sm:$0xf]
  %v92 = vld [vmem:[%s1 + $0x114] sm:$0xf]
  %v93 = vld [vmem:[%s1 + $0x118] sm:$0xf]
  %v94 = vld [vmem:[%s1 + $0x11c] sm:$0xf]
  %v95 = vld [vmem:[%s1 + $0x120] sm:$0xf]
  %v96 = vld [vmem:[%s1 + $0x124] sm:$0xf]
  %v97 = vld [vmem:[%s1 + $0x128] sm:$0xf]
  %v98 = vld [vmem:[%s1 + $0x12c] sm:$0xf]
  %v99 = vld [vmem:[%s1 + $0x130] sm:$0xf]
  %v100 = vld [vmem:[%s1 + $0x134] sm:$0xf]
  %v101 = vld [vmem:[%s1 + $0x138] sm:$0xf]
  %v102 = vld [vmem:[%s1 + $0x13c] sm:$0xf]
  %v103 = vld [vmem:[%s2] sm:$0x1]
  %v105 = vlaneseq
  %v106 = vshrl.u32 %v105, 7
  %v107 = vsub.s32 0, %v106
  %v108 = vrot.slane %v103, %v107
  %v116 = vunpack.c.l.b16 %v17
  %v117 = vunpack.c.h.b16 %v17
  %v118 = vunpack.c.l.b16 %v18
  %v119 = vunpack.c.h.b16 %v18
  %v120 = vunpack.c.l.b16 %v19
  %v121 = vunpack.c.l.b16 %v20
  %v122 = vunpack.c.h.b16 %v20
  %v123 = vunpack.c.l.b16 %v21
  %v124 = vunpack.c.h.b16 %v21
  %v125 = vunpack.c.l.b16 %v22
  %v126 = vpack.c.b16 %v121, %v116
  %v127 = vpack.c.b16 %v122, %v117
  %v128 = vpack.c.b16 %v123, %v118
  %v129 = vpack.c.b16 %v124, %v119
  %v130 = vpack.c.b16 %v125, %v120
  %v216 = vunpack.c.l.b16 %v23
  %v217 = vunpack.c.l.b16 %v24
  %v218 = vunpack.c.l.b16 %v25
  %v219 = vunpack.c.l.b16 %v26
  %v220 = vunpack.c.l.b16 %v27
  %v221 = vunpack.c.l.b16 %v28
  %v222 = vunpack.c.l.b16 %v29
  %v223 = vunpack.c.l.b16 %v30
  %v224 = vunpack.c.l.b16 %v31
  %v225 = vunpack.c.l.b16 %v32
  %v226 = vunpack.c.l.b16 %v33
  %v227 = vunpack.c.l.b16 %v34
  %v228 = vunpack.c.l.b16 %v35
  %v229 = vunpack.c.l.b16 %v36
  %v230 = vunpack.c.l.b16 %v37
  %v231 = vunpack.c.l.b16 %v38
  %v232 = vunpack.c.l.b16 %v39
  %v233 = vunpack.c.l.b16 %v40
  %v234 = vunpack.c.l.b16 %v41
  %v235 = vunpack.c.l.b16 %v42
  %v236 = vunpack.c.l.b16 %v43
  %v237 = vunpack.c.l.b16 %v44
  %v238 = vunpack.c.l.b16 %v45
  %v239 = vunpack.c.l.b16 %v46
  %v240 = vunpack.c.l.b16 %v47
  %v241 = vunpack.c.l.b16 %v48
  %v242 = vunpack.c.l.b16 %v49
  %v243 = vunpack.c.l.b16 %v50
  %v244 = vunpack.c.l.b16 %v51
  %v245 = vunpack.c.l.b16 %v52
  %v246 = vunpack.c.l.b16 %v53
  %v247 = vunpack.c.l.b16 %v54
  %v248 = vunpack.c.l.b16 %v55
  %v249 = vunpack.c.l.b16 %v56
  %v250 = vunpack.c.l.b16 %v57
  %v251 = vunpack.c.l.b16 %v58
  %v252 = vunpack.c.l.b16 %v59
  %v253 = vunpack.c.l.b16 %v60
  %v254 = vunpack.c.l.b16 %v61
  %v255 = vunpack.c.l.b16 %v62
  %v256 = vunpack.c.l.b16 %v63
  %v257 = vunpack.c.l.b16 %v64
  %v258 = vunpack.c.l.b16 %v65
  %v259 = vunpack.c.l.b16 %v66
  %v260 = vunpack.c.l.b16 %v67
  %v261 = vunpack.c.l.b16 %v68
  %v262 = vunpack.c.l.b16 %v69
  %v263 = vunpack.c.l.b16 %v70
  %v264 = vunpack.c.l.b16 %v71
  %v265 = vunpack.c.l.b16 %v72
  %v266 = vunpack.c.l.b16 %v73
  %v267 = vunpack.c.l.b16 %v74
  %v268 = vunpack.c.l.b16 %v75
  %v269 = vunpack.c.l.b16 %v76
  %v270 = vunpack.c.l.b16 %v77
  %v271 = vunpack.c.l.b16 %v78
  %v272 = vunpack.c.l.b16 %v79
  %v273 = vunpack.c.l.b16 %v80
  %v274 = vunpack.c.l.b16 %v81
  %v275 = vunpack.c.l.b16 %v82
  %v276 = vunpack.c.l.b16 %v83
  %v277 = vunpack.c.l.b16 %v84
  %v278 = vunpack.c.l.b16 %v85
  %v279 = vunpack.c.l.b16 %v86
  %v280 = vunpack.c.l.b16 %v87
  %v281 = vunpack.c.l.b16 %v88
  %v282 = vunpack.c.l.b16 %v89
  %v283 = vunpack.c.l.b16 %v90
  %v284 = vunpack.c.l.b16 %v91
  %v285 = vunpack.c.l.b16 %v92
  %v286 = vunpack.c.l.b16 %v93
  %v287 = vunpack.c.l.b16 %v94
  %v288 = vunpack.c.l.b16 %v95
  %v289 = vunpack.c.l.b16 %v96
  %v290 = vunpack.c.l.b16 %v97
  %v291 = vunpack.c.l.b16 %v98
  %v292 = vunpack.c.l.b16 %v99
  %v293 = vunpack.c.l.b16 %v100
  %v294 = vunpack.c.l.b16 %v101
  %v295 = vunpack.c.l.b16 %v102
  %v296 = vpack.c.b16 %v217, %v216
  %v297 = vpack.c.b16 %v219, %v218
  %v298 = vpack.c.b16 %v221, %v220
  %v299 = vpack.c.b16 %v223, %v222
  %v300 = vpack.c.b16 %v225, %v224
  %v301 = vpack.c.b16 %v227, %v226
  %v302 = vpack.c.b16 %v229, %v228
  %v303 = vpack.c.b16 %v231, %v230
  %v304 = vpack.c.b16 %v233, %v232
  %v305 = vpack.c.b16 %v235, %v234
  %v306 = vpack.c.b16 %v237, %v236
  %v307 = vpack.c.b16 %v239, %v238
  %v308 = vpack.c.b16 %v241, %v240
  %v309 = vpack.c.b16 %v243, %v242
  %v310 = vpack.c.b16 %v245, %v244
  %v311 = vpack.c.b16 %v247, %v246
  %v312 = vpack.c.b16 %v249, %v248
  %v313 = vpack.c.b16 %v251, %v250
  %v314 = vpack.c.b16 %v253, %v252
  %v315 = vpack.c.b16 %v255, %v254
  %v316 = vpack.c.b16 %v257, %v256
  %v317 = vpack.c.b16 %v259, %v258
  %v318 = vpack.c.b16 %v261, %v260
  %v319 = vpack.c.b16 %v263, %v262
  %v320 = vpack.c.b16 %v265, %v264
  %v321 = vpack.c.b16 %v267, %v266
  %v322 = vpack.c.b16 %v269, %v268
  %v323 = vpack.c.b16 %v271, %v270
  %v324 = vpack.c.b16 %v273, %v272
  %v325 = vpack.c.b16 %v275, %v274
  %v326 = vpack.c.b16 %v277, %v276
  %v327 = vpack.c.b16 %v279, %v278
  %v328 = vpack.c.b16 %v281, %v280
  %v329 = vpack.c.b16 %v283, %v282
  %v330 = vpack.c.b16 %v285, %v284
  %v331 = vpack.c.b16 %v287, %v286
  %v332 = vpack.c.b16 %v289, %v288
  %v333 = vpack.c.b16 %v291, %v290
  %v334 = vpack.c.b16 %v293, %v292
  %v335 = vpack.c.b16 %v295, %v294
  %376 = vmatprep.subr.bf16.mxu0 0
  %377 = vmatpush1.bf16.msra.mxu0 %v296
  %378 = vmatprep.subr.bf16.mxu0 0
  %379 = vmatpush1.bf16.msra.mxu0 %v297
  %380 = vmatprep.subr.bf16.mxu0 0
  %381 = vmatpush1.bf16.msra.mxu0 %v298
  %382 = vmatprep.subr.bf16.mxu0 0
  %383 = vmatpush1.bf16.msra.mxu0 %v299
  %384 = vmatprep.subr.bf16.mxu0 0
  %385 = vmatpush1.bf16.msra.mxu0 %v300
  %386 = vmatprep.subr.bf16.mxu0 0
  %387 = vmatpush1.bf16.msra.mxu0 %v301
  %388 = vmatprep.subr.bf16.mxu0 0
  %389 = vmatpush1.bf16.msra.mxu0 %v302
  %390 = vmatprep.subr.bf16.mxu0 0
  %391 = vmatpush1.bf16.msra.mxu0 %v303
  %392 = vmatprep.subr.bf16.mxu0 0
  %393 = vmatpush1.bf16.msra.mxu0 %v304
  %394 = vmatprep.subr.bf16.mxu0 0
  %395 = vmatpush1.bf16.msra.mxu0 %v305
  %396 = vmatprep.subr.bf16.mxu0 0
  %397 = vmatpush1.bf16.msra.mxu0 %v306
  %398 = vmatprep.subr.bf16.mxu0 0
  %399 = vmatpush1.bf16.msra.mxu0 %v307
  %400 = vmatprep.subr.bf16.mxu0 0
  %401 = vmatpush1.bf16.msra.mxu0 %v308
  %402 = vmatprep.subr.bf16.mxu0 0
  %403 = vmatpush1.bf16.msra.mxu0 %v309
  %404 = vmatprep.subr.bf16.mxu0 0
  %405 = vmatpush1.bf16.msra.mxu0 %v310
  %406 = vmatprep.subr.bf16.mxu0 0
  %407 = vmatpush1.bf16.msra.mxu0 %v311
  %408 = vmatprep.mubr.bf16.mxu0 %v127
  %409 = vmatmul.mubr.bf16.gmra.mrb[0].mxu0 %v126
  %v410 = vpop.f32.mrb[0].mxu0
  %v411 = vadd.f32 %v108, %v410
  %v412 = vpop.f32.mrb[0].mxu0
  %v413 = vpop.f32.mrb[0].mxu0
  %v414 = vadd.f32 %v108, %v413
  %v415 = vpop.f32.mrb[0].mxu0
  %416 = vdwg.mxu0
  %417 = vmatprep.subr.bf16.mxu0 0
  %418 = vmatpush1.bf16.msra.mxu0 %v312
  %419 = vmatprep.subr.bf16.mxu0 0
  %420 = vmatpush1.bf16.msra.mxu0 %v313
  %421 = vmatprep.subr.bf16.mxu0 0
  %422 = vmatpush1.bf16.msra.mxu0 %v314
  %423 = vmatprep.subr.bf16.mxu0 0
  %424 = vmatpush1.bf16.msra.mxu0 %v315
  %425 = vmatprep.subr.bf16.mxu0 0
  %426 = vmatpush1.bf16.msra.mxu0 %v316
  %427 = vmatprep.subr.bf16.mxu0 0
  %428 = vmatpush1.bf16.msra.mxu0 %v317
  %429 = vmatprep.subr.bf16.mxu0 0
  %430 = vmatpush1.bf16.msra.mxu0 %v318
  %431 = vmatprep.subr.bf16.mxu0 0
  %432 = vmatpush1.bf16.msra.mxu0 %v319
  %433 = vmatprep.subr.bf16.mxu0 0
  %434 = vmatpush1.bf16.msra.mxu0 %v320
  %435 = vmatprep.subr.bf16.mxu0 0
  %436 = vmatpush1.bf16.msra.mxu0 %v321
  %437 = vmatprep.subr.bf16.mxu0 0
  %438 = vmatpush1.bf16.msra.mxu0 %v322
  %439 = vmatprep.subr.bf16.mxu0 0
  %440 = vmatpush1.bf16.msra.mxu0 %v323
  %441 = vmatprep.subr.bf16.mxu0 0
  %442 = vmatpush1.bf16.msra.mxu0 %v324
  %443 = vmatprep.subr.bf16.mxu0 0
  %444 = vmatpush1.bf16.msra.mxu0 %v325
  %445 = vmatprep.subr.bf16.mxu0 0
  %446 = vmatpush1.bf16.msra.mxu0 %v326
  %447 = vmatprep.subr.bf16.mxu0 0
  %448 = vmatpush1.bf16.msra.mxu0 %v327
  %449 = vmatprep.mubr.bf16.mxu0 %v129
  %450 = vmatmul.mubr.bf16.gmra.mrb[0].mxu0 %v128
  %v451 = vpop.f32.mrb[0].mxu0
  %v452 = vadd.f32 %v411, %v451
  %v453 = vpop.f32.mrb[0].mxu0
  %v454 = vpop.f32.mrb[0].mxu0
  %v455 = vadd.f32 %v414, %v454
  %v456 = vpop.f32.mrb[0].mxu0
  %457 = vdwg.mxu0
  %458 = vmatprep.subr.bf16.mxu0 0
  %459 = vmatpush1.bf16.msra.mxu0 %v328
  %460 = vmatprep.subr.bf16.mxu0 0
  %461 = vmatpush1.bf16.msra.mxu0 %v329
  %462 = vmatprep.subr.bf16.mxu0 0
  %463 = vmatpush1.bf16.msra.mxu0 %v330
  %464 = vmatprep.subr.bf16.mxu0 0
  %465 = vmatpush1.bf16.msra.mxu0 %v331
  %466 = vmatprep.subr.bf16.mxu0 0
  %467 = vmatpush1.bf16.msra.mxu0 %v332
  %468 = vmatprep.subr.bf16.mxu0 0
  %469 = vmatpush1.bf16.msra.mxu0 %v333
  %470 = vmatprep.subr.bf16.mxu0 0
  %471 = vmatpush1.bf16.msra.mxu0 %v334
  %472 = vmatprep.subr.bf16.mxu0 0
  %473 = vmatpush1.bf16.msra.mxu0 %v335
  %474 = vmatprep.subr.bf16.mxu0 0
  %475 = vmatpush1.bf16.msra.mxu0 0
  %476 = vmatprep.subr.bf16.mxu0 0
  %477 = vmatpush1.bf16.msra.mxu0 0
  %478 = vmatprep.subr.bf16.mxu0 0
  %479 = vmatpush1.bf16.msra.mxu0 0
  %480 = vmatprep.subr.bf16.mxu0 0
  %481 = vmatpush1.bf16.msra.mxu0 0
  %482 = vmatprep.subr.bf16.mxu0 0
  %483 = vmatpush1.bf16.msra.mxu0 0
  %484 = vmatprep.subr.bf16.mxu0 0
  %485 = vmatpush1.bf16.msra.mxu0 0
  %486 = vmatprep.subr.bf16.mxu0 0
  %487 = vmatpush1.bf16.msra.mxu0 0
  %488 = vmatprep.subr.bf16.mxu0 0
  %489 = vmatpush1.bf16.msra.mxu0 0
  %490 = vmatprep.mubr.bf16.mxu0 0
  %491 = vmatmul.mubr.bf16.gmra.mrb[0].mxu0 %v130
  %v492 = vpop.f32.mrb[0].mxu0
  %v493 = vadd.f32 %v452, %v492
  %v494 = vpop.f32.mrb[0].mxu0
  %v495 = vpop.f32.mrb[0].mxu0
  %v496 = vadd.f32 %v455, %v495
  %v497 = vpop.f32.mrb[0].mxu0
  %498 = vdwg.mxu0
  %499 = vst [vmem:[%s3] sm:$0xff] %v493
  %500 = vst [vmem:[%s3 + $0x8] sm:$0xff] %v496
  %s501 = smul.u32 0, 16
  %v502 = vlaneseq
  %v503 = vshrl.u32 %v502, 7
  %v504 = vadd.s32 %v503, 8
  %v505 = vstv %s501
  %v506 = vadd.s32 %v505, %v503
  %v507 = vadd.s32 %v505, %v504
  %vm508 = vcmp.lt.s32.totalorder %v506, 8
  %vm509 = vcmp.lt.s32.totalorder %v507, 8
  %v510 = vsel %vm508, 1, 0
  %v511 = vsel %vm509, 1, 0
  %v512 = vcvt.s32.f32 %v510
  %v513 = vcvt.s32.f32 %v511
  %v514 = vmul.f32 %v493, %v512
  %v515 = vmul.f32 %v496, %v513
  %v516 = vadd.f32 %v514, %v515
  %v517 = vrot.slane %v516, 4
  %v518 = vadd.f32 %v516, %v517
  %v519 = vrot.slane %v518, 2
  %v520 = vadd.f32 %v518, %v519
  %v521 = vrot.slane %v520, 1
  %v522 = vadd.f32 %v520, %v521
  %v523 = vmul.f32 %v514, %v514
  %v524 = vmul.f32 %v515, %v515
  %v525 = vadd.f32 %v523, %v524
  %v526 = vrot.slane %v525, 4
  %v527 = vadd.f32 %v525, %v526
  %v528 = vrot.slane %v527, 2
  %v529 = vadd.f32 %v527, %v528
  %v530 = vrot.slane %v529, 1
  %v531 = vadd.f32 %v529, %v530
  %vm532 = vcmp.eq.s32.totalorder %v503, 0
  %v533 = vsel %vm532, 1, 0
  %vm534 = vcmp.eq.s32.totalorder %v533, 1
  %v535 = vsel %vm534, %v522, 0.0
  %vm536 = vcmp.eq.s32.totalorder %v503, 1
  %v537 = vsel %vm536, 1, 0
  %vm538 = vcmp.eq.s32.totalorder %v537, 1
  %v539 = vsel %vm538, %v531, 0.0
  %v540 = vadd.f32 %v535, %v539
  %541 = vst [vmem:[%s4] sm:$0xff] %v540
  // Predicated region
  $region14: #{generator_forward.21} parent=0 // pred_check
    _
  $region15: #{generator_forward.21} parent=0 // pred_check_branch
    %543 = sbr.rel (0) target = $region17
  $region16: #{generator_forward.21} parent=0 // pred_region
    _
  $region17: #{generator_forward.21} parent=0 // pred_fallthru
    _
  // Predicated region
  $region18: #{generator_forward.21} parent=0 // pred_check
    _
  $region19: #{generator_forward.21} parent=0 // pred_check_branch
    %545 = sbr.rel (0) target = $region21
  $region20: #{generator_forward.21} parent=0 // pred_region
    _
  $region21: #{generator_forward.21} parent=0 // pred_fallthru
    _
  // Predicated region
  $region22: #{generator_forward.21} parent=0 // pred_check
    _
  $region23: #{generator_forward.21} parent=0 // pred_check_branch
    %547 = sbr.rel (0) target = $region25
  $region24: #{generator_forward.21} parent=0 // pred_region
    _
  $region25: #{generator_forward.21} parent=0 // pred_fallthru
    _
  // Predicated region
  $region26: #{generator_forward.21} parent=0 // pred_check
    _
  $region27: #{generator_forward.21} parent=0 // pred_check_branch
    %549 = sbr.rel (0) target = $region29
  $region28: #{generator_forward.21} parent=0 // pred_region
    _
  $region29: #{generator_forward.21} parent=0 // pred_fallthru
    _

// kernel: tile.58
$region0: #{tile.58}
  #allocation0 [shape = 's32[1]{0}', space=sflag, size = 0x4, scoped, tag = 'scoped memory for tile.58']
  %s0 = inlined_call_operand.vmem [shape: f32[8], index: 0, kind: input, shape index: {}]
  %s1 = inlined_call_operand.vmem [shape: f32[4,8], index: 1, kind: output, shape index: {}]
  // Predicated region
  $region2: #{tile.58} parent=0 // pred_check
    _
  $region3: #{tile.58} parent=0 // pred_check_branch
    %3 = sbr.rel (0) target = $region5
  $region4: #{tile.58} parent=0 // pred_region
    _
  $region5: #{tile.58} parent=0 // pred_fallthru
    _
  %v4 = vld [vmem:[%s0] ss:$0 sm:$0xff]
  %5 = vst [vmem:[%s1] sm:$0xf] %v4

// kernel: tile.59
$region0: #{tile.59}
  %s0 = inlined_call_operand.vmem [shape: f32[4,8], index: 0, kind: input, shape index: {}]
  %s1 = inlined_call_operand.vmem [shape: f32[32], index: 1, kind: output, shape index: {}]
  $region1: #{tile.59} parent=0
    #allocation0 [shape = 'u8[4096]{0}', space=vmem, size = 0x1000, scoped, tag = 'scoped mem for output reshape']
    #allocation1 [shape = 'u8[4096]{0}', space=vmem, size = 0x1000, scoped, tag = 'scoped mem for input reshape']
    %s3 = sshllo.u32 0, 4
    %v4 = vld [vmem:[%s0] sm:%s3]
    %5 = vst [vmem:[#allocation1] sm:%s3] %v4
    %v6 = vld [vmem:[#allocation1] sm:$0x1]
    %vm7 = vcmask 64512
    %8 = vst.msk [vmem:[#allocation0] sm:$0x1] %vm7, %v6
    %s9 = scalar_lea.vmem [#allocation1], 3
    %v10 = vld [vmem:[%s9] sm:$0x1]
    %11 = vrot.lane.b32.xlu0 %v10, 24
    %v12 = vpop.permute.xlu0 %11
    %vm13 = vcmask 261312
    %14 = vst.msk [vmem:[#allocation0] sm:$0x1] %vm13, %v12
    %s15 = scalar_lea.vmem [#allocation1], 2
    %v16 = vld [vmem:[%s15] sm:$0x1]
    %17 = vrot.lane.b32.xlu0 %v16, 16
    %v18 = vpop.permute.xlu0 %17
    %vm19 = vcmask 195712
    %20 = vst.msk [vmem:[#allocation0] sm:$0x1] %vm19, %v18
    %s21 = scalar_lea.vmem [#allocation1], 1
    %v22 = vld [vmem:[%s21] sm:$0x1]
    %23 = vrot.lane.b32.xlu0 %v22, 8
    %v24 = vpop.permute.xlu0 %23
    %vm25 = vcmask 130112
    %26 = vst.msk [vmem:[#allocation0] sm:$0x1] %vm25, %v24
    %s28 = sshllo.u32 0, 1
    %v30 = vld [vmem:[#allocation0] sm:%s28]
    %s31 = sshllo.u32 0, 1
    %32 = vst [vmem:[%s1] sm:%s31] %v30

// kernel: generator_forward.24
$region0: #{generator_forward.24}
  #allocation0 [shape = 'u32[]', space=smem, size = 0x4, offset = 0x4, fixed_abs, tag = 'smem constant byte address 0x4 - core index']
  #allocation1 [shape = 'u32[144,128]{1,0:T(1,128)}', space=vmem, size = 0x12000, scoped, tag = 'internal scratch']
  %s0 = inlined_call_operand.vmem [shape: f32[1,32,128], index: 0, kind: input, shape index: {}]
  %s1 = inlined_call_operand.vmem [shape: f32[1,1,128], index: 1, kind: input, shape index: {}]
  %s2 = inlined_call_operand.vmem [shape: f32[1,1,128], index: 2, kind: input, shape index: {}]
  %s3 = inlined_call_operand.vmem [shape: f32[32,128], index: 3, kind: output, shape index: {}]
  %s4 = sld [smem:[#allocation0]]
  $region22: #{generator_forward.24} parent=0
    _
  %s6 = ssub.s32 1, %s4
  %s7 = scalar_select 0, %s6, %s4
  // Predicated region
  $region2: #{generator_forward.24} parent=0 // pred_check
    _
  $region3: #{generator_forward.24} parent=0 // pred_check_branch
    %9 = sbr.rel (0) target = $region5
  $region4: #{generator_forward.24} parent=0 // pred_region
    _
  $region5: #{generator_forward.24} parent=0 // pred_fallthru
    _
  // Predicated region
  $region6: #{generator_forward.24} parent=0 // pred_check
    _
  $region7: #{generator_forward.24} parent=0 // pred_check_branch
    %11 = sbr.rel (0) target = $region9
  $region8: #{generator_forward.24} parent=0 // pred_region
    _
  $region9: #{generator_forward.24} parent=0 // pred_fallthru
    _
  // Predicated region
  $region10: #{generator_forward.24} parent=0 // pred_check
    _
  $region11: #{generator_forward.24} parent=0 // pred_check_branch
    %13 = sbr.rel (0) target = $region13
  $region12: #{generator_forward.24} parent=0 // pred_region
    _
  $region13: #{generator_forward.24} parent=0 // pred_fallthru
    _
  %v14 = vld [vmem:[%s0] sm:$0xff]
  %v15 = vld [vmem:[%s0 + $0x8] sm:$0xff]
  %v16 = vld [vmem:[%s0 + $0x10] sm:$0xff]
  %v17 = vld [vmem:[%s0 + $0x18] sm:$0xff]
  %v18 = vld [vmem:[%s1] sm:$0x1]
  %v20 = vlaneseq
  %v21 = vshrl.u32 %v20, 7
  %v22 = vsub.s32 0, %v21
  %v23 = vrot.slane %v18, %v22
  %v25 = vmul.f32 %v14, %v23
  %v26 = vmul.f32 %v15, %v23
  %v27 = vmul.f32 %v16, %v23
  %v28 = vmul.f32 %v17, %v23
  %v29 = vld [vmem:[%s2] sm:$0x1]
  %v31 = vlaneseq
  %v32 = vshrl.u32 %v31, 7
  %v33 = vsub.s32 0, %v32
  %v34 = vrot.slane %v29, %v33
  %v36 = vadd.f32 %v25, %v34
  %v37 = vadd.f32 %v26, %v34
  %v38 = vadd.f32 %v27, %v34
  %v39 = vadd.f32 %v28, %v34
  %v40 = vmax.f32 %v36, 0.0
  %v41 = vmax.f32 %v37, 0.0
  %v42 = vmax.f32 %v38, 0.0
  %v43 = vmax.f32 %v39, 0.0
  %44 = vst [vmem:[%s3] sm:$0xff] %v40
  %45 = vst [vmem:[%s3 + $0x8] sm:$0xff] %v41
  %46 = vst [vmem:[%s3 + $0x10] sm:$0xff] %v42
  %47 = vst [vmem:[%s3 + $0x18] sm:$0xff] %v43
  // Predicated region
  $region14: #{generator_forward.24} parent=0 // pred_check
    _
  $region15: #{generator_forward.24} parent=0 // pred_check_branch
    %49 = sbr.rel (0) target = $region17
  $region16: #{generator_forward.24} parent=0 // pred_region
    _
  $region17: #{generator_forward.24} parent=0 // pred_fallthru
    _
  // Predicated region
  $region18: #{generator_forward.24} parent=0 // pred_check
    _
  $region19: #{generator_forward.24} parent=0 // pred_check_branch
    %51 = sbr.rel (0) target = $region21
  $region20: #{generator_forward.24} parent=0 // pred_region
    _
  $region21: #{generator_forward.24} parent=0 // pred_fallthru
    _

// kernel: generator_forward.26
$region0: #{generator_forward.26}
  #allocation0 [shape = 'u32[]', space=smem, size = 0x4, offset = 0x4, fixed_abs, tag = 'smem constant byte address 0x4 - core index']
  #allocation1 [shape = 'u32[144,128]{1,0:T(1,128)}', space=vmem, size = 0x12000, scoped, tag = 'internal scratch']
  %s0 = inlined_call_operand.vmem [shape: f32[1,128,128], index: 0, kind: input, shape index: {}]
  %s1 = inlined_call_operand.vmem [shape: f32[1,1,128], index: 1, kind: input, shape index: {}]
  %s2 = inlined_call_operand.vmem [shape: f32[1,1,128], index: 2, kind: input, shape index: {}]
  %s3 = inlined_call_operand.vmem [shape: f32[128,128], index: 3, kind: output, shape index: {}]
  %s4 = sld [smem:[#allocation0]]
  $region22: #{generator_forward.26} parent=0
    _
  %s6 = ssub.s32 1, %s4
  %s7 = scalar_select 0, %s6, %s4
  // Predicated region
  $region2: #{generator_forward.26} parent=0 // pred_check
    _
  $region3: #{generator_forward.26} parent=0 // pred_check_branch
    %9 = sbr.rel (0) target = $region5
  $region4: #{generator_forward.26} parent=0 // pred_region
    _
  $region5: #{generator_forward.26} parent=0 // pred_fallthru
    _
  // Predicated region
  $region6: #{generator_forward.26} parent=0 // pred_check
    _
  $region7: #{generator_forward.26} parent=0 // pred_check_branch
    %11 = sbr.rel (0) target = $region9
  $region8: #{generator_forward.26} parent=0 // pred_region
    _
  $region9: #{generator_forward.26} parent=0 // pred_fallthru
    _
  // Predicated region
  $region10: #{generator_forward.26} parent=0 // pred_check
    _
  $region11: #{generator_forward.26} parent=0 // pred_check_branch
    %13 = sbr.rel (0) target = $region13
  $region12: #{generator_forward.26} parent=0 // pred_region
    _
  $region13: #{generator_forward.26} parent=0 // pred_fallthru
    _
  %v14 = vld [vmem:[%s0] sm:$0xff]
  %v15 = vld [vmem:[%s0 + $0x8] sm:$0xff]
  %v16 = vld [vmem:[%s0 + $0x10] sm:$0xff]
  %v17 = vld [vmem:[%s0 + $0x18] sm:$0xff]
  %v18 = vld [vmem:[%s0 + $0x20] sm:$0xff]
  %v19 = vld [vmem:[%s0 + $0x28] sm:$0xff]
  %v20 = vld [vmem:[%s0 + $0x30] sm:$0xff]
  %v21 = vld [vmem:[%s0 + $0x38] sm:$0xff]
  %v22 = vld [vmem:[%s0 + $0x40] sm:$0xff]
  %v23 = vld [vmem:[%s0 + $0x48] sm:$0xff]
  %v24 = vld [vmem:[%s0 + $0x50] sm:$0xff]
  %v25 = vld [vmem:[%s0 + $0x58] sm:$0xff]
  %v26 = vld [vmem:[%s0 + $0x60] sm:$0xff]
  %v27 = vld [vmem:[%s0 + $0x68] sm:$0xff]
  %v28 = vld [vmem:[%s0 + $0x70] sm:$0xff]
  %v29 = vld [vmem:[%s0 + $0x78] sm:$0xff]
  %v30 = vld [vmem:[%s1] sm:$0x1]
  %v32 = vlaneseq
  %v33 = vshrl.u32 %v32, 7
  %v34 = vsub.s32 0, %v33
  %v35 = vrot.slane %v30, %v34
  %v37 = vmul.f32 %v14, %v35
  %v38 = vmul.f32 %v15, %v35
  %v39 = vmul.f32 %v16, %v35
  %v40 = vmul.f32 %v17, %v35
  %v41 = vmul.f32 %v18, %v35
  %v42 = vmul.f32 %v19, %v35
  %v43 = vmul.f32 %v20, %v35
  %v44 = vmul.f32 %v21, %v35
  %v45 = vmul.f32 %v22, %v35
  %v46 = vmul.f32 %v23, %v35
  %v47 = vmul.f32 %v24, %v35
  %v48 = vmul.f32 %v25, %v35
  %v49 = vmul.f32 %v26, %v35
  %v50 = vmul.f32 %v27, %v35
  %v51 = vmul.f32 %v28, %v35
  %v52 = vmul.f32 %v29, %v35
  %v53 = vld [vmem:[%s2] sm:$0x1]
  %v55 = vlaneseq
  %v56 = vshrl.u32 %v55, 7
  %v57 = vsub.s32 0, %v56
  %v58 = vrot.slane %v53, %v57
  %v60 = vadd.f32 %v37, %v58
  %v61 = vadd.f32 %v38, %v58
  %v62 = vadd.f32 %v39, %v58
  %v63 = vadd.f32 %v40, %v58
  %v64 = vadd.f32 %v41, %v58
  %v65 = vadd.f32 %v42, %v58
  %v66 = vadd.f32 %v43, %v58
  %v67 = vadd.f32 %v44, %v58
  %v68 = vadd.f32 %v45, %v58
  %v69 = vadd.f32 %v46, %v58
  %v70 = vadd.f32 %v47, %v58
  %v71 = vadd.f32 %v48, %v58
  %v72 = vadd.f32 %v49, %v58
  %v73 = vadd.f32 %v50, %v58
  %v74 = vadd.f32 %v51, %v58
  %v75 = vadd.f32 %v52, %v58
  %v76 = vmax.f32 %v60, 0.0
  %v77 = vmax.f32 %v61, 0.0
  %v78 = vmax.f32 %v62, 0.0
  %v79 = vmax.f32 %v63, 0.0
  %v80 = vmax.f32 %v64, 0.0
  %v81 = vmax.f32 %v65, 0.0
  %v82 = vmax.f32 %v66, 0.0
  %v83 = vmax.f32 %v67, 0.0
  %v84 = vmax.f32 %v68, 0.0
  %v85 = vmax.f32 %v69, 0.0
  %v86 = vmax.f32 %v70, 0.0
  %v87 = vmax.f32 %v71, 0.0
  %v88 = vmax.f32 %v72, 0.0
  %v89 = vmax.f32 %v73, 0.0
  %v90 = vmax.f32 %v74, 0.0
  %v91 = vmax.f32 %v75, 0.0
  %92 = vst [vmem:[%s3] sm:$0xff] %v76
  %93 = vst [vmem:[%s3 + $0x8] sm:$0xff] %v77
  %94 = vst [vmem:[%s3 + $0x10] sm:$0xff] %v78
  %95 = vst [vmem:[%s3 + $0x18] sm:$0xff] %v79
  %96 = vst [vmem:[%s3 + $0x20] sm:$0xff] %v80
  %97 = vst [vmem:[%s3 + $0x28] sm:$0xff] %v81
  %98 = vst [vmem:[%s3 + $0x30] sm:$0xff] %v82
  %99 = vst [vmem:[%s3 + $0x38] sm:$0xff] %v83
  %100 = vst [vmem:[%s3 + $0x40] sm:$0xff] %v84
  %101 = vst [vmem:[%s3 + $0x48] sm:$0xff] %v85
  %102 = vst [vmem:[%s3 + $0x50] sm:$0xff] %v86
  %103 = vst [vmem:[%s3 + $0x58] sm:$0xff] %v87
  %104 = vst [vmem:[%s3 + $0x60] sm:$0xff] %v88
  %105 = vst [vmem:[%s3 + $0x68] sm:$0xff] %v89
  %106 = vst [vmem:[%s3 + $0x70] sm:$0xff] %v90
  %107 = vst [vmem:[%s3 + $0x78] sm:$0xff] %v91
  // Predicated region
  $region14: #{generator_forward.26} parent=0 // pred_check
    _
  $region15: #{generator_forward.26} parent=0 // pred_check_branch
    %109 = sbr.rel (0) target = $region17
  $region16: #{generator_forward.26} parent=0 // pred_region
    _
  $region17: #{generator_forward.26} parent=0 // pred_fallthru
    _
  // Predicated region
  $region18: #{generator_forward.26} parent=0 // pred_check
    _
  $region19: #{generator_forward.26} parent=0 // pred_check_branch
    %111 = sbr.rel (0) target = $region21
  $region20: #{generator_forward.26} parent=0 // pred_region
    _
  $region21: #{generator_forward.26} parent=0 // pred_fallthru
    _

// kernel: generator_forward.27
$region0: #{generator_forward.27}
  #allocation0 [shape = 'u32[]', space=smem, size = 0x4, offset = 0x4, fixed_abs, tag = 'smem constant byte address 0x4 - core index']
  #allocation1 [shape = 'u32[144,128]{1,0:T(1,128)}', space=vmem, size = 0x12000, scoped, tag = 'internal scratch']
  %s0 = inlined_call_operand.vmem [shape: bf16[512,128], index: 0, kind: input, shape index: {}]
  %s1 = inlined_call_operand.vmem [shape: bf16[128,128], index: 1, kind: input, shape index: {}]
  %s2 = inlined_call_operand.vmem [shape: f32[1,128], index: 2, kind: input, shape index: {}]
  %s3 = inlined_call_operand.vmem [shape: f32[512,128], index: 3, kind: output, shape index: {0}]
  %s4 = inlined_call_operand.hbm [shape: f32[32,128], index: 4, kind: output, shape index: {1}]
  %5 = xla_tuple %s3, %s4
  %s6 = sld [smem:[#allocation0]]
  $region53: #{generator_forward.27} parent=0
    _
  %s8 = ssub.s32 1, %s6
  %s9 = scalar_select 0, %s8, %s6
  $region1: #{generator_forward.27} parent=0
    #allocation2 [shape = 'u8[8192]{0}', space=vmem, size = 0x2000, scoped, tag = 'output window, operand 1']
    #allocation3 [shape = 's32[2]{0}', space=sflag, size = 0x8, scoped, tag = 'scoped memory for generator_forward.27']
    %10 = vsyncpa [#allocation3], 0
    %s11 = scalar_lea.sflag [#allocation3], 1
    %12 = vsyncpa %s11, 0
    loop: start=0, step=1, limit=6
    $region2: #{generator_forward.27} parent=1 // loop_pre_header
      _
    $region3: #{generator_forward.27} parent=1 // loop_header
      %s14 = sphi 0, %s18
      %p15 = scmp.ge.s32.totalorder %s14, 6
      %s21 = sphi 0, %s33
      %s22 = sphi 0, %s29
      %s23 = sphi 0, %s21
      %s24 = sphi 0, %s22
      %s25 = sphi 0, %s23
      %s26 = sphi 0, %s24
      %s36 = sphi 0, %s38
      %s39 = sphi 0, %s36
      %s40 = sphi 0, %s39
      %s56 = sphi 0, %s40
      %s62 = sphi 0, %s64
      %s65 = sphi 0, %s62
      %s66 = sphi 0, %s65
      %s82 = sphi 0, %s66
      %s88 = sphi 0, %s90
      %s91 = sphi 0, %s88
      %s92 = sphi 0, %s91
      %s108 = sphi 0, %s92
      %s116 = sphi 0, %s118
      %s119 = sphi 0, %s116
      %s120 = sphi 0, %s119
      %s136 = sphi 0, %s120
      %s144 = sphi 0, %s146
      %s147 = sphi 0, %s144
      %s148 = sphi 0, %s147
      %s164 = sphi 0, %s148
    $region4: #{generator_forward.27} parent=1 // loop_header_branch
      %17 = sbr.rel (%p15) target = $region8
    $region5: #{generator_forward.27} parent=1 // loop_body
      %s19 = ssub.s32 %s14, 1
      %s20 = ssub.s32 %s14, 2
      %s27 = sadd.s32 1, %s22
      %p28 = scmp.ge.s32.totalorder %s27, 1
      %s29 = scalar_select %p28, 0, %s27
      %s30 = sadd.s32 1, %s21
      %s31 = scalar_select %p28, %s30, %s21
      %p32 = scmp.ge.s32.totalorder %s31, 4
      %s33 = scalar_select %p32, 0, %s31
      %s34 = ssub.s32 %s21, %s33
      %p35 = scmp.eq.s32.totalorder %s34, 0
      %s37 = sadd.s32 %s36, 1
      %s38 = scalar_select %p35, %s36, %s37
      %p41 = pneg %p35
      %p42 = scmp.eq.s32.totalorder %s14, 3
      %p43 = por %p41, %p42
      %p44 = scmp.ne.s32.totalorder %s36, %s39
      %p45 = scmp.eq.s32.totalorder %s14, 0
      %p46 = por %p44, %p45
      %p47 = scmp.ne.s32.totalorder %s36, %s39
      %p48 = scmp.eq.s32.totalorder %s19, 3
      %p49 = por %p47, %p48
      %p50 = scmp.ne.s32.totalorder %s39, %s40
      %p51 = scmp.eq.s32.totalorder %s19, 0
      %p52 = por %p50, %p51
      %p53 = scmp.ne.s32.totalorder %s39, %s40
      %p54 = scmp.eq.s32.totalorder %s20, 3
      %p55 = por %p53, %p54
      %p57 = scmp.ne.s32.totalorder %s40, %s56
      %p58 = scmp.eq.s32.totalorder %s20, 0
      %p59 = por %p57, %p58
      %s60 = ssub.s32 %s22, %s29
      %p61 = scmp.eq.s32.totalorder %s60, 0
      %s63 = sadd.s32 %s62, 1
      %s64 = scalar_select %p61, %s62, %s63
      %p67 = pneg %p61
      %p68 = scmp.eq.s32.totalorder %s14, 3
      %p69 = por %p67, %p68
      %p70 = scmp.ne.s32.totalorder %s62, %s65
      %p71 = scmp.eq.s32.totalorder %s14, 0
      %p72 = por %p70, %p71
      %p73 = scmp.ne.s32.totalorder %s62, %s65
      %p74 = scmp.eq.s32.totalorder %s19, 3
      %p75 = por %p73, %p74
      %p76 = scmp.ne.s32.totalorder %s65, %s66
      %p77 = scmp.eq.s32.totalorder %s19, 0
      %p78 = por %p76, %p77
      %p79 = scmp.ne.s32.totalorder %s65, %s66
      %p80 = scmp.eq.s32.totalorder %s20, 3
      %p81 = por %p79, %p80
      %p83 = scmp.ne.s32.totalorder %s66, %s82
      %p84 = scmp.eq.s32.totalorder %s20, 0
      %p85 = por %p83, %p84
      %s86 = ssub.s32 %s22, %s29
      %p87 = scmp.eq.s32.totalorder %s86, 0
      %s89 = sadd.s32 %s88, 1
      %s90 = scalar_select %p87, %s88, %s89
      %p93 = pneg %p87
      %p94 = scmp.eq.s32.totalorder %s14, 3
      %p95 = por %p93, %p94
      %p96 = scmp.ne.s32.totalorder %s88, %s91
      %p97 = scmp.eq.s32.totalorder %s14, 0
      %p98 = por %p96, %p97
      %p99 = scmp.ne.s32.totalorder %s88, %s91
      %p100 = scmp.eq.s32.totalorder %s19, 3
      %p101 = por %p99, %p100
      %p102 = scmp.ne.s32.totalorder %s91, %s92
      %p103 = scmp.eq.s32.totalorder %s19, 0
      %p104 = por %p102, %p103
      %p105 = scmp.ne.s32.totalorder %s91, %s92
      %p106 = scmp.eq.s32.totalorder %s20, 3
      %p107 = por %p105, %p106
      %p109 = scmp.ne.s32.totalorder %s92, %s108
      %p110 = scmp.eq.s32.totalorder %s20, 0
      %p111 = por %p109, %p110
      %s112 = ssub.s32 %s21, %s33
      %s113 = ssub.s32 %s22, %s29
      %s114 = sor.u32 %s112, %s113
      %p115 = scmp.eq.s32.totalorder %s114, 0
      %s117 = sadd.s32 %s116, 1
      %s118 = scalar_select %p115, %s116, %s117
      %p121 = pneg %p115
      %p122 = scmp.eq.s32.totalorder %s14, 3
      %p123 = por %p121, %p122
      %p124 = scmp.ne.s32.totalorder %s116, %s119
      %p125 = scmp.eq.s32.totalorder %s14, 0
      %p126 = por %p124, %p125
      %p127 = scmp.ne.s32.totalorder %s116, %s119
      %p128 = scmp.eq.s32.totalorder %s19, 3
      %p129 = por %p127, %p128
      %p130 = scmp.ne.s32.totalorder %s119, %s120
      %p131 = scmp.eq.s32.totalorder %s19, 0
      %p132 = por %p130, %p131
      %p133 = scmp.ne.s32.totalorder %s119, %s120
      %p134 = scmp.eq.s32.totalorder %s20, 3
      %p135 = por %p133, %p134
      %p137 = scmp.ne.s32.totalorder %s120, %s136
      %p138 = scmp.eq.s32.totalorder %s20, 0
      %p139 = por %p137, %p138
      %s140 = ssub.s32 %s21, %s33
      %s141 = ssub.s32 %s22, %s29
      %s142 = sor.u32 %s140, %s141
      %p143 = scmp.eq.s32.totalorder %s142, 0
      %s145 = sadd.s32 %s144, 1
      %s146 = scalar_select %p143, %s144, %s145
      %p149 = pneg %p143
      %p150 = scmp.eq.s32.totalorder %s14, 3
      %p151 = por %p149, %p150
      %p152 = scmp.ne.s32.totalorder %s144, %s147
      %p153 = scmp.eq.s32.totalorder %s14, 0
      %p154 = por %p152, %p153
      %p155 = scmp.ne.s32.totalorder %s144, %s147
      %p156 = scmp.eq.s32.totalorder %s19, 3
      %p157 = por %p155, %p156
      %p158 = scmp.ne.s32.totalorder %s147, %s148
      %p159 = scmp.eq.s32.totalorder %s19, 0
      %p160 = por %p158, %p159
      %p161 = scmp.ne.s32.totalorder %s147, %s148
      %p162 = scmp.eq.s32.totalorder %s20, 3
      %p163 = por %p161, %p162
      %p165 = scmp.ne.s32.totalorder %s148, %s164
      %p166 = scmp.eq.s32.totalorder %s20, 0
      %p167 = por %p165, %p166
      %p168 = scmp.le.s32.totalorder 1, %s14
      %p169 = scmp.lt.s32.totalorder %s14, 5
      %p170 = pnand %p168, %p169
      %p171 = pneg %p170
      // Predicated region
      $region9: #{generator_forward.27} parent=5 // pred_check
        _
      $region10: #{generator_forward.27} parent=5 // pred_check_branch
        %173 = sbr.rel (%p170) target = $region12
      $region11: #{generator_forward.27} parent=5 // pred_region
        %s174 = ssub.s32 %s14, 1
        // Predicated region
        $region13: #{generator_forward.27} parent=11 // pred_check
          %p175 = pneg %p78
        $region14: #{generator_forward.27} parent=11 // pred_check_branch
          %177 = sbr.rel (%p175) target = $region16
        $region15: #{generator_forward.27} parent=11 // pred_region
          %p178 = scmp.lt.s32.totalorder %s24, 0
          %s179 = scalar_select %p178, %s24, 0
          %s180 = smul.addr %s179, 4
          %s181 = scalar_lea.vmem %s1, %s180
        $region16: #{generator_forward.27} parent=11 // pred_fallthru
          _
        // Predicated region
        $region17: #{generator_forward.27} parent=11 // pred_check
          %p182 = pneg %p104
        $region18: #{generator_forward.27} parent=11 // pred_check_branch
          %184 = sbr.rel (%p182) target = $region20
        $region19: #{generator_forward.27} parent=11 // pred_region
          %p185 = scmp.lt.s32.totalorder %s24, 0
          %s186 = scalar_select %p185, %s24, 0
          %s187 = scalar_lea.vmem %s2, %s186
        $region20: #{generator_forward.27} parent=11 // pred_fallthru
          _
      $region12: #{generator_forward.27} parent=5 // pred_fallthru
        _
      %p188 = scmp.lt.s32.totalorder %s14, 4
      // Predicated region
      $region21: #{generator_forward.27} parent=5 // pred_check
        %p189 = pneg %p188
      $region22: #{generator_forward.27} parent=5 // pred_check_branch
        %191 = sbr.rel (%p189) target = $region24
      $region23: #{generator_forward.27} parent=5 // pred_region
        // Predicated region
        $region25: #{generator_forward.27} parent=23 // pred_check
          %p192 = pneg %p46
        $region26: #{generator_forward.27} parent=23 // pred_check_branch
          %194 = sbr.rel (%p192) target = $region28
        $region27: #{generator_forward.27} parent=23 // pred_region
          %s195 = smul.u32 16, %s21
          %p196 = scmp.lt.s32.totalorder %s195, 63
          %s197 = scalar_select %p196, %s195, 63
          %s198 = smul.addr %s197, 4
          %s199 = scalar_lea.vmem %s0, %s198
          %s200 = smul.u32 16, %s21
        $region28: #{generator_forward.27} parent=23 // pred_fallthru
          _
      $region24: #{generator_forward.27} parent=5 // pred_fallthru
        _
      %p201 = scmp.le.s32.totalorder 1, %s14
      %p202 = scmp.lt.s32.totalorder %s14, 5
      %p203 = pnand %p201, %p202
      %p204 = pneg %p203
      // Predicated region
      $region29: #{generator_forward.27} parent=5 // pred_check
        _
      $region30: #{generator_forward.27} parent=5 // pred_check_branch
        %206 = sbr.rel (%p203) target = $region32
      $region31: #{generator_forward.27} parent=5 // pred_region
        %s207 = ssub.s32 %s14, 1
        %s208 = smul.u32 16, %s23
        %p209 = scmp.lt.s32.totalorder %s208, 63
        %s210 = scalar_select %p209, %s208, 63
        %s211 = smul.addr %s210, 4
        %s212 = scalar_lea.vmem %s0, %s211
        %p213 = pneg %p52
        %p214 = pneg %p49
        %p215 = scmp.lt.s32.totalorder %s24, 0
        %s216 = scalar_select %p215, %s24, 0
        %s217 = smul.addr %s216, 4
        %s218 = scalar_lea.vmem %s1, %s217
        %p219 = pneg %p78
        %p220 = pneg %p75
        %p221 = scmp.lt.s32.totalorder %s24, 0
        %s222 = scalar_select %p221, %s24, 0
        %s223 = scalar_lea.vmem %s2, %s222
        %p224 = pneg %p104
        %p225 = pneg %p101
        %p226 = pneg %p132
        %p227 = pneg %p129
        %s228 = smul.u32 16, %s23
        %p229 = scmp.lt.s32.totalorder %s228, 63
        %s230 = scalar_select %p229, %s228, 63
        %p231 = scmp.lt.s32.totalorder %s24, 0
        %s232 = scalar_select %p231, %s24, 0
        %s233 = sadd.s32 %s232, %s230
        %s234 = smul.addr %s233, 8
        %s235 = scalar_lea.vmem %s3, %s234
        %p236 = pneg %p160
        %p237 = pneg %p157
        %s238 = sand.u32 %s147, 1
        %s239 = scalar_lea.sflag [#allocation3], %s238
        %s240 = sand.u32 %s147, 1
        %s241 = smul.addr %s240, 8
        %s242 = scalar_lea.vmem [#allocation2], %s241
        %s243 = smul.u32 16, %s23
        %p244 = scmp.lt.s32.totalorder %s243, 63
        %s245 = scalar_select %p244, %s243, 63
        %s246 = smul.addr %s245, 4
        %s247 = scalar_lea.vmem %s0, %s246
        %s248 = smul.u32 16, %s23
        %p249 = scmp.lt.s32.totalorder %s24, 0
        %s250 = scalar_select %p249, %s24, 0
        %s251 = smul.addr %s250, 4
        %s252 = scalar_lea.vmem %s1, %s251
        %p253 = scmp.lt.s32.totalorder %s24, 0
        %s254 = scalar_select %p253, %s24, 0
        %s255 = scalar_lea.vmem %s2, %s254
        %s256 = smul.u32 16, %s23
        %p257 = scmp.lt.s32.totalorder %s256, 63
        %s258 = scalar_select %p257, %s256, 63
        %p259 = scmp.lt.s32.totalorder %s24, 0
        %s260 = scalar_select %p259, %s24, 0
        %s261 = sadd.s32 %s260, %s258
        %s262 = smul.addr %s261, 8
        %s263 = scalar_lea.vmem %s3, %s262
        %s264 = smul.u32 16, %s23
        %v266 = vld [vmem:[%s247] sm:$0xf]
        %v267 = vld [vmem:[%s247 + $0x4] sm:$0xf]
        %v268 = vld [vmem:[%s247 + $0x8] sm:$0xf]
        %v269 = vld [vmem:[%s247 + $0xc] sm:$0xf]
        %v270 = vld [vmem:[%s247 + $0x10] sm:$0xf]
        %v271 = vld [vmem:[%s247 + $0x14] sm:$0xf]
        %v272 = vld [vmem:[%s247 + $0x18] sm:$0xf]
        %v273 = vld [vmem:[%s247 + $0x1c] sm:$0xf]
        %v274 = vld [vmem:[%s247 + $0x20] sm:$0xf]
        %v275 = vld [vmem:[%s247 + $0x24] sm:$0xf]
        %v276 = vld [vmem:[%s247 + $0x28] sm:$0xf]
        %v277 = vld [vmem:[%s247 + $0x2c] sm:$0xf]
        %v278 = vld [vmem:[%s247 + $0x30] sm:$0xf]
        %v279 = vld [vmem:[%s247 + $0x34] sm:$0xf]
        %v280 = vld [vmem:[%s247 + $0x38] sm:$0xf]
        %v281 = vld [vmem:[%s247 + $0x3c] sm:$0xf]
        %v282 = vld [vmem:[%s252] sm:$0xf]
        %v283 = vld [vmem:[%s252 + $0x4] sm:$0xf]
        %v284 = vld [vmem:[%s252 + $0x8] sm:$0xf]
        %v285 = vld [vmem:[%s252 + $0xc] sm:$0xf]
        %v286 = vld [vmem:[%s252 + $0x10] sm:$0xf]
        %v287 = vld [vmem:[%s252 + $0x14] sm:$0xf]
        %v288 = vld [vmem:[%s252 + $0x18] sm:$0xf]
        %v289 = vld [vmem:[%s252 + $0x1c] sm:$0xf]
        %v290 = vld [vmem:[%s252 + $0x20] sm:$0xf]
        %v291 = vld [vmem:[%s252 + $0x24] sm:$0xf]
        %v292 = vld [vmem:[%s252 + $0x28] sm:$0xf]
        %v293 = vld [vmem:[%s252 + $0x2c] sm:$0xf]
        %v294 = vld [vmem:[%s252 + $0x30] sm:$0xf]
        %v295 = vld [vmem:[%s252 + $0x34] sm:$0xf]
        %v296 = vld [vmem:[%s252 + $0x38] sm:$0xf]
        %v297 = vld [vmem:[%s252 + $0x3c] sm:$0xf]
        %v298 = vld [vmem:[%s255] sm:$0x1]
        %v300 = vlaneseq
        %v301 = vshrl.u32 %v300, 7
        %v302 = vsub.s32 0, %v301
        %v303 = vrot.slane %v298, %v302
        %v321 = vunpack.c.l.b16 %v266
        %v322 = vunpack.c.l.b16 %v267
        %v323 = vunpack.c.l.b16 %v268
        %v324 = vunpack.c.l.b16 %v269
        %v325 = vunpack.c.l.b16 %v270
        %v326 = vunpack.c.l.b16 %v271
        %v327 = vunpack.c.l.b16 %v272
        %v328 = vunpack.c.l.b16 %v273
        %v329 = vunpack.c.l.b16 %v274
        %v330 = vunpack.c.l.b16 %v275
        %v331 = vunpack.c.l.b16 %v276
        %v332 = vunpack.c.l.b16 %v277
        %v333 = vunpack.c.l.b16 %v278
        %v334 = vunpack.c.l.b16 %v279
        %v335 = vunpack.c.l.b16 %v280
        %v336 = vunpack.c.l.b16 %v281
        %v337 = vpack.c.b16 %v322, %v321
        %v338 = vpack.c.b16 %v324, %v323
        %v339 = vpack.c.b16 %v326, %v325
        %v340 = vpack.c.b16 %v328, %v327
        %v341 = vpack.c.b16 %v330, %v329
        %v342 = vpack.c.b16 %v332, %v331
        %v343 = vpack.c.b16 %v334, %v333
        %v344 = vpack.c.b16 %v336, %v335
        %v369 = vunpack.c.l.b16 %v282
        %v370 = vunpack.c.l.b16 %v283
        %v371 = vunpack.c.l.b16 %v284
        %v372 = vunpack.c.l.b16 %v285
        %v373 = vunpack.c.l.b16 %v286
        %v374 = vunpack.c.l.b16 %v287
        %v375 = vunpack.c.l.b16 %v288
        %v376 = vunpack.c.l.b16 %v289
        %v377 = vunpack.c.l.b16 %v290
        %v378 = vunpack.c.l.b16 %v291
        %v379 = vunpack.c.l.b16 %v292
        %v380 = vunpack.c.l.b16 %v293
        %v381 = vunpack.c.l.b16 %v294
        %v382 = vunpack.c.l.b16 %v295
        %v383 = vunpack.c.l.b16 %v296
        %v384 = vunpack.c.l.b16 %v297
        %v385 = vpack.c.b16 %v370, %v369
        %v386 = vpack.c.b16 %v372, %v371
        %v387 = vpack.c.b16 %v374, %v373
        %v388 = vpack.c.b16 %v376, %v375
        %v389 = vpack.c.b16 %v378, %v377
        %v390 = vpack.c.b16 %v380, %v379
        %v391 = vpack.c.b16 %v382, %v381
        %v392 = vpack.c.b16 %v384, %v383
        %401 = vmatprep.subr.bf16.mxu0 0
        %402 = vmatpush1.bf16.msra.mxu0 %v385
        %403 = vmatprep.subr.bf16.mxu0 0
        %404 = vmatpush1.bf16.msra.mxu0 %v386
        %405 = vmatprep.subr.bf16.mxu0 0
        %406 = vmatpush1.bf16.msra.mxu0 %v387
        %407 = vmatprep.subr.bf16.mxu0 0
        %408 = vmatpush1.bf16.msra.mxu0 %v388
        %409 = vmatprep.subr.bf16.mxu0 0
        %410 = vmatpush1.bf16.msra.mxu0 %v389
        %411 = vmatprep.subr.bf16.mxu0 0
        %412 = vmatpush1.bf16.msra.mxu0 %v390
        %413 = vmatprep.subr.bf16.mxu0 0
        %414 = vmatpush1.bf16.msra.mxu0 %v391
        %415 = vmatprep.subr.bf16.mxu0 0
        %416 = vmatpush1.bf16.msra.mxu0 %v392
        %417 = vmatprep.subr.bf16.mxu0 0
        %418 = vmatpush1.bf16.msra.mxu0 0
        %419 = vmatprep.subr.bf16.mxu0 0
        %420 = vmatpush1.bf16.msra.mxu0 0
        %421 = vmatprep.subr.bf16.mxu0 0
        %422 = vmatpush1.bf16.msra.mxu0 0
        %423 = vmatprep.subr.bf16.mxu0 0
        %424 = vmatpush1.bf16.msra.mxu0 0
        %425 = vmatprep.subr.bf16.mxu0 0
        %426 = vmatpush1.bf16.msra.mxu0 0
        %427 = vmatprep.subr.bf16.mxu0 0
        %428 = vmatpush1.bf16.msra.mxu0 0
        %429 = vmatprep.subr.bf16.mxu0 0
        %430 = vmatpush1.bf16.msra.mxu0 0
        %431 = vmatprep.subr.bf16.mxu0 0
        %432 = vmatpush1.bf16.msra.mxu0 0
        %433 = vmatprep.mubr.bf16.mxu0 0
        %434 = vmatmul.mubr.bf16.gmra.mrb[0].mxu0 %v337
        %v435 = vpop.f32.mrb[0].mxu0
        %v436 = vadd.f32 %v303, %v435
        %v437 = vpop.f32.mrb[0].mxu0
        %v438 = vpop.f32.mrb[0].mxu0
        %v439 = vadd.f32 %v303, %v438
        %v440 = vpop.f32.mrb[0].mxu0
        %441 = vmatprep.mubr.bf16.mxu0 0
        %442 = vmatmul.mubr.bf16.gmra.mrb[0].mxu0 %v338
        %v443 = vpop.f32.mrb[0].mxu0
        %v444 = vadd.f32 %v303, %v443
        %v445 = vpop.f32.mrb[0].mxu0
        %v446 = vpop.f32.mrb[0].mxu0
        %v447 = vadd.f32 %v303, %v446
        %v448 = vpop.f32.mrb[0].mxu0
        %449 = vmatprep.mubr.bf16.mxu0 0
        %450 = vmatmul.mubr.bf16.gmra.mrb[0].mxu0 %v339
        %v451 = vpop.f32.mrb[0].mxu0
        %v452 = vadd.f32 %v303, %v451
        %v453 = vpop.f32.mrb[0].mxu0
        %v454 = vpop.f32.mrb[0].mxu0
        %v455 = vadd.f32 %v303, %v454
        %v456 = vpop.f32.mrb[0].mxu0
        %457 = vmatprep.mubr.bf16.mxu0 0
        %458 = vmatmul.mubr.bf16.gmra.mrb[0].mxu0 %v340
        %v459 = vpop.f32.mrb[0].mxu0
        %v460 = vadd.f32 %v303, %v459
        %v461 = vpop.f32.mrb[0].mxu0
        %v462 = vpop.f32.mrb[0].mxu0
        %v463 = vadd.f32 %v303, %v462
        %v464 = vpop.f32.mrb[0].mxu0
        %465 = vmatprep.mubr.bf16.mxu0 0
        %466 = vmatmul.mubr.bf16.gmra.mrb[0].mxu0 %v341
        %v467 = vpop.f32.mrb[0].mxu0
        %v468 = vadd.f32 %v303, %v467
        %v469 = vpop.f32.mrb[0].mxu0
        %v470 = vpop.f32.mrb[0].mxu0
        %v471 = vadd.f32 %v303, %v470
        %v472 = vpop.f32.mrb[0].mxu0
        %473 = vmatprep.mubr.bf16.mxu0 0
        %474 = vmatmul.mubr.bf16.gmra.mrb[0].mxu0 %v342
        %v475 = vpop.f32.mrb[0].mxu0
        %v476 = vadd.f32 %v303, %v475
        %v477 = vpop.f32.mrb[0].mxu0
        %v478 = vpop.f32.mrb[0].mxu0
        %v479 = vadd.f32 %v303, %v478
        %v480 = vpop.f32.mrb[0].mxu0
        %481 = vmatprep.mubr.bf16.mxu0 0
        %482 = vmatmul.mubr.bf16.gmra.mrb[0].mxu0 %v343
        %v483 = vpop.f32.mrb[0].mxu0
        %v484 = vadd.f32 %v303, %v483
        %v485 = vpop.f32.mrb[0].mxu0
        %v486 = vpop.f32.mrb[0].mxu0
        %v487 = vadd.f32 %v303, %v486
        %v488 = vpop.f32.mrb[0].mxu0
        %489 = vmatprep.mubr.bf16.mxu0 0
        %490 = vmatmul.mubr.bf16.gmra.mrb[0].mxu0 %v344
        %v491 = vpop.f32.mrb[0].mxu0
        %v492 = vadd.f32 %v303, %v491
        %v493 = vpop.f32.mrb[0].mxu0
        %v494 = vpop.f32.mrb[0].mxu0
        %v495 = vadd.f32 %v303, %v494
        %v496 = vpop.f32.mrb[0].mxu0
        %497 = vdwg.mxu0
        %v498 = vtanh.pop %v436
        %v499 = vtanh.pop %v439
        %v500 = vtanh.pop %v444
        %v501 = vtanh.pop %v447
        %v502 = vtanh.pop %v452
        %v503 = vtanh.pop %v455
        %v504 = vtanh.pop %v460
        %v505 = vtanh.pop %v463
        %v506 = vtanh.pop %v468
        %v507 = vtanh.pop %v471
        %v508 = vtanh.pop %v476
        %v509 = vtanh.pop %v479
        %v510 = vtanh.pop %v484
        %v511 = vtanh.pop %v487
        %v512 = vtanh.pop %v492
        %v513 = vtanh.pop %v495
        %514 = vst [vmem:[%s263] sm:$0xff] %v498
        %515 = vst [vmem:[%s263 + $0x8] sm:$0xff] %v499
        %516 = vst [vmem:[%s263 + $0x10] sm:$0xff] %v500
        %517 = vst [vmem:[%s263 + $0x18] sm:$0xff] %v501
        %518 = vst [vmem:[%s263 + $0x20] sm:$0xff] %v502
        %519 = vst [vmem:[%s263 + $0x28] sm:$0xff] %v503
        %520 = vst [vmem:[%s263 + $0x30] sm:$0xff] %v504
        %521 = vst [vmem:[%s263 + $0x38] sm:$0xff] %v505
        %522 = vst [vmem:[%s263 + $0x40] sm:$0xff] %v506
        %523 = vst [vmem:[%s263 + $0x48] sm:$0xff] %v507
        %524 = vst [vmem:[%s263 + $0x50] sm:$0xff] %v508
        %525 = vst [vmem:[%s263 + $0x58] sm:$0xff] %v509
        %526 = vst [vmem:[%s263 + $0x60] sm:$0xff] %v510
        %527 = vst [vmem:[%s263 + $0x68] sm:$0xff] %v511
        %528 = vst [vmem:[%s263 + $0x70] sm:$0xff] %v512
        %529 = vst [vmem:[%s263 + $0x78] sm:$0xff] %v513
        %s530 = smul.u32 %s23, 128
        %v531 = vlaneseq
        %v532 = vshrl.u32 %v531, 7
        %v533 = vadd.s32 %v532, 8
        %v534 = vadd.s32 %v532, 16
        %v535 = vadd.s32 %v532, 24
        %v536 = vadd.s32 %v532, 32
        %v537 = vadd.s32 %v532, 40
        %v538 = vadd.s32 %v532, 48
        %v539 = vadd.s32 %v532, 56
        %v540 = vadd.s32 %v532, 64
        %v541 = vadd.s32 %v532, 72
        %v542 = vadd.s32 %v532, 80
        %v543 = vadd.s32 %v532, 88
        %v544 = vadd.s32 %v532, 96
        %v545 = vadd.s32 %v532, 104
        %v546 = vadd.s32 %v532, 112
        %v547 = vadd.s32 %v532, 120
        %v548 = vstv %s530
        %v549 = vadd.s32 %v548, %v532
        %v550 = vadd.s32 %v548, %v533
        %v551 = vadd.s32 %v548, %v534
        %v552 = vadd.s32 %v548, %v535
        %v553 = vadd.s32 %v548, %v536
        %v554 = vadd.s32 %v548, %v537
        %v555 = vadd.s32 %v548, %v538
        %v556 = vadd.s32 %v548, %v539
        %v557 = vadd.s32 %v548, %v540
        %v558 = vadd.s32 %v548, %v541
        %v559 = vadd.s32 %v548, %v542
        %v560 = vadd.s32 %v548, %v543
        %v561 = vadd.s32 %v548, %v544
        %v562 = vadd.s32 %v548, %v545
        %v563 = vadd.s32 %v548, %v546
        %v564 = vadd.s32 %v548, %v547
        %vm565 = vcmp.lt.s32.totalorder %v549, 512
        %vm566 = vcmp.lt.s32.totalorder %v550, 512
        %vm567 = vcmp.lt.s32.totalorder %v551, 512
        %vm568 = vcmp.lt.s32.totalorder %v552, 512
        %vm569 = vcmp.lt.s32.totalorder %v553, 512
        %vm570 = vcmp.lt.s32.totalorder %v554, 512
        %vm571 = vcmp.lt.s32.totalorder %v555, 512
        %vm572 = vcmp.lt.s32.totalorder %v556, 512
        %vm573 = vcmp.lt.s32.totalorder %v557, 512
        %vm574 = vcmp.lt.s32.totalorder %v558, 512
        %vm575 = vcmp.lt.s32.totalorder %v559, 512
        %vm576 = vcmp.lt.s32.totalorder %v560, 512
        %vm577 = vcmp.lt.s32.totalorder %v561, 512
        %vm578 = vcmp.lt.s32.totalorder %v562, 512
        %vm579 = vcmp.lt.s32.totalorder %v563, 512
        %vm580 = vcmp.lt.s32.totalorder %v564, 512
        %v581 = vsel %vm565, 1, 0
        %v582 = vsel %vm566, 1, 0
        %v583 = vsel %vm567, 1, 0
        %v584 = vsel %vm568, 1, 0
        %v585 = vsel %vm569, 1, 0
        %v586 = vsel %vm570, 1, 0
        %v587 = vsel %vm571, 1, 0
        %v588 = vsel %vm572, 1, 0
        %v589 = vsel %vm573, 1, 0
        %v590 = vsel %vm574, 1, 0
        %v591 = vsel %vm575, 1, 0
        %v592 = vsel %vm576, 1, 0
        %v593 = vsel %vm577, 1, 0
        %v594 = vsel %vm578, 1, 0
        %v595 = vsel %vm579, 1, 0
        %v596 = vsel %vm580, 1, 0
        %v597 = vcvt.s32.f32 %v581
        %v598 = vcvt.s32.f32 %v582
        %v599 = vcvt.s32.f32 %v583
        %v600 = vcvt.s32.f32 %v584
        %v601 = vcvt.s32.f32 %v585
        %v602 = vcvt.s32.f32 %v586
        %v603 = vcvt.s32.f32 %v587
        %v604 = vcvt.s32.f32 %v588
        %v605 = vcvt.s32.f32 %v589
        %v606 = vcvt.s32.f32 %v590
        %v607 = vcvt.s32.f32 %v591
        %v608 = vcvt.s32.f32 %v592
        %v609 = vcvt.s32.f32 %v593
        %v610 = vcvt.s32.f32 %v594
        %v611 = vcvt.s32.f32 %v595
        %v612 = vcvt.s32.f32 %v596
        %v613 = vmul.f32 %v498, %v597
        %v614 = vmul.f32 %v499, %v598
        %v615 = vmul.f32 %v500, %v599
        %v616 = vmul.f32 %v501, %v600
        %v617 = vmul.f32 %v502, %v601
        %v618 = vmul.f32 %v503, %v602
        %v619 = vmul.f32 %v504, %v603
        %v620 = vmul.f32 %v505, %v604
        %v621 = vmul.f32 %v506, %v605
        %v622 = vmul.f32 %v507, %v606
        %v623 = vmul.f32 %v508, %v607
        %v624 = vmul.f32 %v509, %v608
        %v625 = vmul.f32 %v510, %v609
        %v626 = vmul.f32 %v511, %v610
        %v627 = vmul.f32 %v512, %v611
        %v628 = vmul.f32 %v513, %v612
        %v629 = vadd.f32 %v613, %v614
        %v630 = vadd.f32 %v629, %v615
        %v631 = vadd.f32 %v630, %v616
        %v632 = vadd.f32 %v631, %v617
        %v633 = vadd.f32 %v632, %v618
        %v634 = vadd.f32 %v633, %v619
        %v635 = vadd.f32 %v634, %v620
        %v636 = vadd.f32 %v635, %v621
        %v637 = vadd.f32 %v636, %v622
        %v638 = vadd.f32 %v637, %v623
        %v639 = vadd.f32 %v638, %v624
        %v640 = vadd.f32 %v639, %v625
        %v641 = vadd.f32 %v640, %v626
        %v642 = vadd.f32 %v641, %v627
        %v643 = vadd.f32 %v642, %v628
        %v644 = vrot.slane %v643, 4
        %v645 = vadd.f32 %v643, %v644
        %v646 = vrot.slane %v645, 2
        %v647 = vadd.f32 %v645, %v646
        %v648 = vrot.slane %v647, 1
        %v649 = vadd.f32 %v647, %v648
        %v650 = vmul.f32 %v613, %v613
        %v651 = vmul.f32 %v614, %v614
        %v652 = vmul.f32 %v615, %v615
        %v653 = vmul.f32 %v616, %v616
        %v654 = vmul.f32 %v617, %v617
        %v655 = vmul.f32 %v618, %v618
        %v656 = vmul.f32 %v619, %v619
        %v657 = vmul.f32 %v620, %v620
        %v658 = vmul.f32 %v621, %v621
        %v659 = vmul.f32 %v622, %v622
        %v660 = vmul.f32 %v623, %v623
        %v661 = vmul.f32 %v624, %v624
        %v662 = vmul.f32 %v625, %v625
        %v663 = vmul.f32 %v626, %v626
        %v664 = vmul.f32 %v627, %v627
        %v665 = vmul.f32 %v628, %v628
        %v666 = vadd.f32 %v650, %v651
        %v667 = vadd.f32 %v666, %v652
        %v668 = vadd.f32 %v667, %v653
        %v669 = vadd.f32 %v668, %v654
        %v670 = vadd.f32 %v669, %v655
        %v671 = vadd.f32 %v670, %v656
        %v672 = vadd.f32 %v671, %v657
        %v673 = vadd.f32 %v672, %v658
        %v674 = vadd.f32 %v673, %v659
        %v675 = vadd.f32 %v674, %v660
        %v676 = vadd.f32 %v675, %v661
        %v677 = vadd.f32 %v676, %v662
        %v678 = vadd.f32 %v677, %v663
        %v679 = vadd.f32 %v678, %v664
        %v680 = vadd.f32 %v679, %v665
        %v681 = vrot.slane %v680, 4
        %v682 = vadd.f32 %v680, %v681
        %v683 = vrot.slane %v682, 2
        %v684 = vadd.f32 %v682, %v683
        %v685 = vrot.slane %v684, 1
        %v686 = vadd.f32 %v684, %v685
        %vm687 = vcmp.eq.s32.totalorder %v532, 0
        %v688 = vsel %vm687, 1, 0
        %vm689 = vcmp.eq.s32.totalorder %v688, 1
        %v690 = vsel %vm689, %v649, 0.0
        %vm691 = vcmp.eq.s32.totalorder %v532, 1
        %v692 = vsel %vm691, 1, 0
        %vm693 = vcmp.eq.s32.totalorder %v692, 1
        %v694 = vsel %vm693, %v686, 0.0
        %v695 = vadd.f32 %v690, %v694
        %696 = vst [vmem:[%s242] sm:$0xff] %v695
        %s697 = smul.u32 16, %s23
        %p698 = scmp.lt.s32.totalorder %s697, 63
        %s699 = scalar_select %p698, %s697, 63
        %p700 = scmp.lt.s32.totalorder %s24, 0
        %s701 = scalar_select %p700, %s24, 0
        %s702 = sadd.s32 %s701, %s699
        %s703 = smul.addr %s702, 8
        %s704 = scalar_lea.vmem %s3, %s703
        %s705 = sand.u32 %s147, 1
        %s706 = scalar_lea.sflag [#allocation3], %s705
        %s707 = sand.u32 %s147, 1
        %s708 = smul.addr %s707, 8
        %s709 = scalar_lea.vmem [#allocation2], %s708
        // Predicated region
        $region33: #{generator_forward.27} parent=31 // pred_check
          %p710 = pneg %p129
        $region34: #{generator_forward.27} parent=31 // pred_check_branch
          %712 = sbr.rel (%p710) target = $region36
        $region35: #{generator_forward.27} parent=31 // pred_region
          %s713 = smul.u32 16, %s23
        $region36: #{generator_forward.27} parent=31 // pred_fallthru
          _
        // Predicated region
        $region37: #{generator_forward.27} parent=31 // pred_check
          %p714 = pneg %p157
        $region38: #{generator_forward.27} parent=31 // pred_check_branch
          %716 = sbr.rel (%p714) target = $region40
        $region39: #{generator_forward.27} parent=31 // pred_region
          %s718 = ssub.s32 128, 128
          %719 = vsyncadd %s706, %s718
          %s720 = sadd.s32 %s24, %s23
          %s721 = smul.addr %s720, 128
          %s722 = scalar_lea.hbm %s4, %s721
          %s724 = sshll.u32 %s709, 4
          %s725 = int_to_ptr.vmem [resolvable:$true] %s724
          %727 = dma.vmem_to_hbm [thread:$0]  %s725, 128, %s722, %s706
        $region40: #{generator_forward.27} parent=31 // pred_fallthru
          _
      $region32: #{generator_forward.27} parent=5 // pred_fallthru
        _
      %p728 = scmp.le.s32.totalorder 2, %s14
      // Predicated region
      $region41: #{generator_forward.27} parent=5 // pred_check
        %p729 = pneg %p728
      $region42: #{generator_forward.27} parent=5 // pred_check_branch
        %731 = sbr.rel (%p729) target = $region44
      $region43: #{generator_forward.27} parent=5 // pred_region
        %s732 = ssub.s32 %s14, 2
        // Predicated region
        $region45: #{generator_forward.27} parent=43 // pred_check
          %p733 = pneg %p135
        $region46: #{generator_forward.27} parent=43 // pred_check_branch
          %735 = sbr.rel (%p733) target = $region48
        $region47: #{generator_forward.27} parent=43 // pred_region
          %s736 = smul.u32 16, %s25
          %p737 = scmp.lt.s32.totalorder %s736, 63
          %s738 = scalar_select %p737, %s736, 63
          %p739 = scmp.lt.s32.totalorder %s26, 0
          %s740 = scalar_select %p739, %s26, 0
          %s741 = sadd.s32 %s740, %s738
          %s742 = smul.addr %s741, 8
          %s743 = scalar_lea.vmem %s3, %s742
        $region48: #{generator_forward.27} parent=43 // pred_fallthru
          _
        // Predicated region
        $region49: #{generator_forward.27} parent=43 // pred_check
          %p744 = pneg %p163
        $region50: #{generator_forward.27} parent=43 // pred_check_branch
          %746 = sbr.rel (%p744) target = $region52
        $region51: #{generator_forward.27} parent=43 // pred_region
          %s747 = sand.u32 %s148, 1
          %s748 = scalar_lea.sflag [#allocation3], %s747
          %s749 = sand.u32 %s148, 1
          %s750 = smul.addr %s749, 8
          %s751 = scalar_lea.vmem [#allocation2], %s750
          %752 = dma.done %s748, 128
        $region52: #{generator_forward.27} parent=43 // pred_fallthru
          _
      $region44: #{generator_forward.27} parent=5 // pred_fallthru
        _
    $region6: #{generator_forward.27} parent=1 // loop_footer
      %s18 = sadd.s32 1, %s14
    $region7: #{generator_forward.27} parent=1 // loop_footer_branch
      %13 = sbr.rel target = $region3
    $region8: #{generator_forward.27} parent=1 // loop_exit
      _
    %753 = vsyncpa [#allocation3], 1
    %s754 = scalar_lea.sflag [#allocation3], 1
    %755 = vsyncpa %s754, 1

</llo_original>
